<compile_context>
chip_gen: v7x
topology: tpu7x:2x2x1
jax: 0.10.0
libtpu: 0.0.40
codegen_flags: <defaults>
</compile_context>

<pallas_src>
import jax
import jax.numpy as jnp
from jax.experimental import pallas as pl
from jax.experimental.pallas import tpu as pltpu


# --------------------------- fused MSAM kernel -----------------------------
def _build_msam_kernel(Bk, T, N, D, K, Dout, total_rows, branch_cfgs):
    """Bk: batches handled per grid step. branch_cfgs: list of (kh, sh, t_out, row_off)."""
    n_branch = len(branch_cfgs)
    rows_in = Bk * T * N

    def kernel(*refs):
        # refs: x, w1, b1, [wc_i, bc_i, m_i]*n_branch, w2, b2, o, x1_scr, val_scr
        x_ref, w1_ref, b1_ref = refs[0], refs[1], refs[2]
        w2_ref = refs[3 + 3 * n_branch]
        b2_ref = refs[4 + 3 * n_branch]
        o_ref = refs[5 + 3 * n_branch]
        x1_scr = refs[6 + 3 * n_branch]
        val_scr = refs[7 + 3 * n_branch]

        # ---- linear1 for all Bk batches in one matmul, kept resident in VMEM
        x = x_ref[...].reshape(rows_in, D)                       # layout-preserving
        x1 = jnp.dot(x, w1_ref[...], preferred_element_type=jnp.float32)
        x1 = x1 + b1_ref[...]                                    # (Bk*T*N, K)
        x1_scr[...] = x1.reshape(Bk * T, N, K)                   # N==8 -> free reshape

        # ---- every multi-scale branch, fully in VMEM
        for bi, (kh, sh, t_out, row_off) in enumerate(branch_cfgs):
            wc_ref = refs[3 + 3 * bi]                            # (kh, K, K)
            bc_ref = refs[4 + 3 * bi]                            # (1, K)
            m_ref = refs[5 + 3 * bi]                             # (mem_num, K)
            m = m_ref[...]
            bc = bc_ref[...]
            rows = t_out * N

            for b in range(Bk):
                base = b * T
                # Conv2d(kernel=(kh,1), stride=(sh,1)) == per-tap accumulation of
                # kh small (K,K) matmuls on strided slices of the x1 scratch
                # (no lane-concatenation, no relayout).
                conv = bc + jnp.dot(
                    x1_scr[pl.ds(base, t_out, stride=sh), :, :].reshape(rows, K),
                    wc_ref[0], preferred_element_type=jnp.float32)
                for r in range(1, kh):
                    conv = conv + jnp.dot(
                        x1_scr[pl.ds(base + r, t_out, stride=sh), :, :].reshape(rows, K),
                        wc_ref[r], preferred_element_type=jnp.float32)

                # MemoryAugmentedConv: softmax(conv @ M^T) @ M  (dropout = identity, eval)
                logits = jax.lax.dot_general(conv, m, (((1,), (1,)), ((), ())),
                                             preferred_element_type=jnp.float32)
                logits = logits - jnp.max(logits, axis=-1, keepdims=True)
                p = jnp.exp(logits)
                inv = pl.reciprocal(jnp.sum(p, axis=-1, keepdims=True), approx=True)
                value = jnp.dot(p * inv, m, preferred_element_type=jnp.float32)  # (rows, K)

                # stage into the concatenated (rows_total, K) scratch
                val_scr[pl.ds(b * total_rows + row_off, rows), :] = value

        # ---- one linear2 matmul + one contiguous store for ALL branches/batches
        out = jnp.dot(val_scr[...], w2_ref[...],
                      preferred_element_type=jnp.float32) + b2_ref[...]
        o_ref[...] = out.reshape(Bk, total_rows, Dout).astype(o_ref.dtype)

    return kernel


def msam_forward(x, params):
    B, T, N, D = x.shape
    K = params["w1"].shape[1]
    Dout = params["w2"].shape[1]
    conv_k = params["conv_k"]
    conv_stride = params["conv_stride"]
    mem_num = params["M"][0].shape[0]

    branch_cfgs = []
    row_off = 0
    for i in range(conv_k):
        kh = i + 1
        sh = conv_stride + i
        t_out = (T - kh) // sh + 1
        branch_cfgs.append((kh, sh, t_out, row_off))
        row_off += t_out * N
    total_rows = row_off
    T_total = total_rows // N

    # Chip-aware batching: fold B into rows on single-TC chips (v5e/v6e);
    # keep grid=(B,) "parallel" on v7x so both TensorCores each take a batch.
    try:
        two_cores = "v7" in jax.devices()[0].device_kind.lower()
    except Exception:
        two_cores = False
    if two_cores and B > 1:
        Bk, grid, sem = 1, (B,), ("parallel",)
    else:
        Bk, grid, sem = B, (1,), ("arbitrary",)

    # wrapper-side (free, contiguous) reshape so the kernel sees row operands
    x3d = x.reshape(B, T * N, D)

    inputs = [x3d, params["w1"], params["b1"]]
    in_specs = [
        pl.BlockSpec((Bk, T * N, D), lambda g: (g, 0, 0)),
        pl.BlockSpec((D, K), lambda g: (0, 0)),
        pl.BlockSpec((1, K), lambda g: (0, 0)),
    ]
    for i, (kh, sh, t_out, _) in enumerate(branch_cfgs):
        inputs += [params["conv_w"][i], params["conv_b"][i], params["M"][i]]
        in_specs += [
            pl.BlockSpec((kh, K, K), lambda g: (0, 0, 0)),
            pl.BlockSpec((1, K), lambda g: (0, 0)),
            pl.BlockSpec((mem_num, K), lambda g: (0, 0)),
        ]
    inputs += [params["w2"], params["b2"]]
    in_specs += [
        pl.BlockSpec((K, Dout), lambda g: (0, 0)),
        pl.BlockSpec((1, Dout), lambda g: (0, 0)),
    ]

    kernel = _build_msam_kernel(Bk, T, N, D, K, Dout, total_rows, branch_cfgs)

    # advisory cost estimate so XLA overlaps this tiny custom call with neighbors
    flops = 2 * B * T * N * D * K + 2 * B * total_rows * K * Dout
    for (kh, sh, t_out, _) in branch_cfgs:
        r = t_out * N
        flops += 2 * B * (r * K * K * kh + 2 * r * K * mem_num)
    bytes_accessed = 4 * (x.size + B * total_rows * Dout
                          + D * K + K + K * Dout + Dout
                          + sum(w.size for w in params["conv_w"])
                          + sum(b.size for b in params["conv_b"])
                          + sum(m.size for m in params["M"]))
    cost = pl.CostEstimate(flops=flops,
                           transcendentals=B * total_rows * mem_num,
                           bytes_accessed=bytes_accessed)

    out3d = pl.pallas_call(
        kernel,
        out_shape=jax.ShapeDtypeStruct((B, total_rows, Dout), x.dtype),
        grid_spec=pltpu.PrefetchScalarGridSpec(
            num_scalar_prefetch=0,
            grid=grid,
            in_specs=in_specs,
            out_specs=pl.BlockSpec((Bk, total_rows, Dout), lambda g: (g, 0, 0)),
            scratch_shapes=[
                pltpu.VMEM((Bk * T, N, K), jnp.float32),          # x1 (linear1 output)
                pltpu.VMEM((Bk * total_rows, K), jnp.float32),    # staged branch values
            ],
        ),
        compiler_params=pltpu.CompilerParams(dimension_semantics=sem),
        cost_estimate=cost,
    )(*inputs)

    return out3d.reshape(B, T_total, N, Dout)


# ------------------------- pure-JAX reference ------------------------------
def msam_reference(x, params):
    x1 = jnp.einsum('btnd,dk->btnk', x, params["w1"]) + params["b1"][0]
    outs = []
    for i in range(params["conv_k"]):
        kh = i + 1
        sh = params["conv_stride"] + i
        B, T, N, C = x1.shape
        t_out = (T - kh) // sh + 1
        conv = jnp.zeros((B, t_out, N, C), jnp.float32) + params["conv_b"][i][0]
        for r in range(kh):
            xr = x1[:, r:r + (t_out - 1) * sh + 1:sh]
            conv = conv + jnp.einsum('btnc,cd->btnd', xr, params["conv_w"][i][r])
        M = params["M"][i]
        score = jax.nn.softmax(jnp.einsum('btnd,md->btnm', conv, M), axis=-1)
        value = jnp.einsum('btnm,md->btnd', score, M)
        outs.append(jnp.einsum('btnd,do->btno', value, params["w2"]) + params["b2"][0])
    return jnp.concatenate(outs, axis=1)


# ------------------------------ params -------------------------------------
def init_params(key, input_dim, dim_k, mem_num, conv_k, conv_stride):
    ks = jax.random.split(key, 4 + 3 * conv_k)
    params = {
        "conv_k": conv_k,
        "conv_stride": conv_stride,
        "w1": 0.1 * jax.random.normal(ks[0], (input_dim, dim_k), jnp.float32),
        "b1": 0.1 * jax.random.normal(ks[1], (1, dim_k), jnp.float32),
        "w2": 0.1 * jax.random.normal(ks[2], (dim_k, input_dim), jnp.float32),
        "b2": 0.1 * jax.random.normal(ks[3], (1, input_dim), jnp.float32),
        "conv_w": [],
        "conv_b": [],
        "M": [],
    }
    xavier_std = (2.0 / (mem_num + dim_k)) ** 0.5
    for i in range(conv_k):
        kh = i + 1
        params["conv_w"].append(
            0.1 * jax.random.normal(ks[4 + 3 * i], (kh, dim_k, dim_k), jnp.float32))
        params["conv_b"].append(
            0.1 * jax.random.normal(ks[5 + 3 * i], (1, dim_k), jnp.float32))
        params["M"].append(
            xavier_std * jax.random.normal(ks[6 + 3 * i], (mem_num, dim_k), jnp.float32))
    return params


if __name__ == "__main__":
    # MSAM(input_dim=32, output_dim unused, mem_num=10, conv_stride=2, conv_k=3, dim_k=24)
    B, T, N, input_dim = 2, 16, 8, 32
    dim_k, mem_num, conv_k, conv_stride = 24, 10, 3, 2

    key = jax.random.PRNGKey(0)
    kx, kp = jax.random.split(key)
    x = jax.random.normal(kx, (B, T, N, input_dim), jnp.float32)
    params = init_params(kp, input_dim, dim_k, mem_num, conv_k, conv_stride)

    out = msam_forward(x, params)
    out = jax.block_until_ready(out)

    ref = msam_reference(x, params)
    assert out.shape == ref.shape, (out.shape, ref.shape)    # (2, 8+5+4, 8, 32)
    # tolerance accounts for the EUP approx reciprocal in the softmax denom
    err = float(jnp.max(jnp.abs(out - ref)))
    assert jnp.allclose(out, ref, rtol=1e-3, atol=1e-3), err

    print("KERNEL_OK")
</pallas_src>

<mosaic_0001>
module attributes {stable_mosaic.version = 11 : i64} {
  func.func @kernel(%arg0: i32, %arg1: memref<2x128x32xf32, #tpu.memory_space<vmem>>, %arg2: memref<32x24xf32, #tpu.memory_space<vmem>>, %arg3: memref<1x24xf32, #tpu.memory_space<vmem>>, %arg4: memref<1x24x24xf32, #tpu.memory_space<vmem>>, %arg5: memref<1x24xf32, #tpu.memory_space<vmem>>, %arg6: memref<10x24xf32, #tpu.memory_space<vmem>>, %arg7: memref<2x24x24xf32, #tpu.memory_space<vmem>>, %arg8: memref<1x24xf32, #tpu.memory_space<vmem>>, %arg9: memref<10x24xf32, #tpu.memory_space<vmem>>, %arg10: memref<3x24x24xf32, #tpu.memory_space<vmem>>, %arg11: memref<1x24xf32, #tpu.memory_space<vmem>>, %arg12: memref<10x24xf32, #tpu.memory_space<vmem>>, %arg13: memref<24x32xf32, #tpu.memory_space<vmem>>, %arg14: memref<1x32xf32, #tpu.memory_space<vmem>>, %arg15: memref<2x136x32xf32, #tpu.memory_space<vmem>>, %arg16: memref<32x8x24xf32, #tpu.memory_space<vmem>>, %arg17: memref<272x24xf32, #tpu.memory_space<vmem>>) attributes {dimension_semantics = [#tpu.dimension_semantics<arbitrary>], iteration_bounds = array<i64: 1>, scalar_prefetch = 0 : i64, scratch_operands = 2 : i64, tpu.core_type = #tpu.core_type<tc>, window_params = [{transform_indices = @transform_0, window_bounds = array<i64: 2, 128, 32>}, {pipeline_mode = #tpu.pipeline_mode<synchronous>, transform_indices = @transform_1, window_bounds = array<i64: 32, 24>}, {pipeline_mode = #tpu.pipeline_mode<synchronous>, transform_indices = @transform_2, window_bounds = array<i64: 1, 24>}, {pipeline_mode = #tpu.pipeline_mode<synchronous>, transform_indices = @transform_3, window_bounds = array<i64: 1, 24, 24>}, {pipeline_mode = #tpu.pipeline_mode<synchronous>, transform_indices = @transform_4, window_bounds = array<i64: 1, 24>}, {pipeline_mode = #tpu.pipeline_mode<synchronous>, transform_indices = @transform_5, window_bounds = array<i64: 10, 24>}, {pipeline_mode = #tpu.pipeline_mode<synchronous>, transform_indices = @transform_6, window_bounds = array<i64: 2, 24, 24>}, {pipeline_mode = #tpu.pipeline_mode<synchronous>, transform_indices = @transform_7, window_bounds = array<i64: 1, 24>}, {pipeline_mode = #tpu.pipeline_mode<synchronous>, transform_indices = @transform_8, window_bounds = array<i64: 10, 24>}, {pipeline_mode = #tpu.pipeline_mode<synchronous>, transform_indices = @transform_9, window_bounds = array<i64: 3, 24, 24>}, {pipeline_mode = #tpu.pipeline_mode<synchronous>, transform_indices = @transform_10, window_bounds = array<i64: 1, 24>}, {pipeline_mode = #tpu.pipeline_mode<synchronous>, transform_indices = @transform_11, window_bounds = array<i64: 10, 24>}, {pipeline_mode = #tpu.pipeline_mode<synchronous>, transform_indices = @transform_12, window_bounds = array<i64: 24, 32>}, {pipeline_mode = #tpu.pipeline_mode<synchronous>, transform_indices = @transform_13, window_bounds = array<i64: 1, 32>}, {transform_indices = @transform_14, window_bounds = array<i64: 2, 136, 32>}]} {
    %c0 = arith.constant 0 : index
    %c0_0 = arith.constant 0 : index
    %c0_1 = arith.constant 0 : index
    %0 = vector.load %arg1[%c0, %c0_0, %c0_1] : memref<2x128x32xf32, #tpu.memory_space<vmem>>, vector<2x128x32xf32>
    %1 = vector.shape_cast %0 : vector<2x128x32xf32> to vector<256x32xf32>
    %c0_2 = arith.constant 0 : index
    %c0_3 = arith.constant 0 : index
    %2 = vector.load %arg2[%c0_2, %c0_3] : memref<32x24xf32, #tpu.memory_space<vmem>>, vector<32x24xf32>
    %cst = arith.constant dense<0.000000e+00> : vector<256x24xf32>
    %3 = tpu.matmul %1, %2, %cst {dimension_numbers = #tpu.dot_dimension_numbers<[1], [0], [0], [1], [0, 0, 1, 1], [], []>} : vector<256x32xf32>, vector<32x24xf32>, vector<256x24xf32> -> vector<256x24xf32>
    %c0_4 = arith.constant 0 : index
    %c0_5 = arith.constant 0 : index
    %4 = vector.load %arg3[%c0_4, %c0_5] : memref<1x24xf32, #tpu.memory_space<vmem>>, vector<1x24xf32>
    %5 = vector.broadcast %4 : vector<1x24xf32> to vector<256x24xf32>
    %6 = arith.addf %3, %5 : vector<256x24xf32>
    %7 = vector.shape_cast %6 : vector<256x24xf32> to vector<32x8x24xf32>
    %c0_6 = arith.constant 0 : index
    %c0_7 = arith.constant 0 : index
    %c0_8 = arith.constant 0 : index
    %8 = vector.load %arg16[%c0_6, %c0_7, %c0_8] : memref<32x8x24xf32, #tpu.memory_space<vmem>>, vector<32x8x24xf32>
    tpu.vector_store %arg16[%c0_6, %c0_7, %c0_8], %7 {strides = array<i32>} : memref<32x8x24xf32, #tpu.memory_space<vmem>>, vector<32x8x24xf32>,
    %c0_9 = arith.constant 0 : index
    %c0_10 = arith.constant 0 : index
    %9 = vector.load %arg6[%c0_9, %c0_10] : memref<10x24xf32, #tpu.memory_space<vmem>>, vector<10x24xf32>
    %c0_11 = arith.constant 0 : index
    %c0_12 = arith.constant 0 : index
    %10 = vector.load %arg5[%c0_11, %c0_12] : memref<1x24xf32, #tpu.memory_space<vmem>>, vector<1x24xf32>
    %c0_13 = arith.constant 0 : index
    %c0_14 = arith.constant 0 : index
    %c0_15 = arith.constant 0 : index
    %11 = tpu.strided_load %arg16[%c0_13, %c0_14, %c0_15] {strides = array<i32: 2, 1, 1>} : memref<32x8x24xf32, #tpu.memory_space<vmem>>, vector<8x8x24xf32>
    %12 = vector.shape_cast %11 : vector<8x8x24xf32> to vector<64x24xf32>
    %c0_16 = arith.constant 0 : index
    %c0_17 = arith.constant 0 : index
    %c0_18 = arith.constant 0 : index
    %13 = vector.load %arg4[%c0_16, %c0_17, %c0_18] : memref<1x24x24xf32, #tpu.memory_space<vmem>>, vector<1x24x24xf32>
    %14 = vector.shape_cast %13 : vector<1x24x24xf32> to vector<24x24xf32>
    %cst_19 = arith.constant dense<0.000000e+00> : vector<64x24xf32>
    %15 = tpu.matmul %12, %14, %cst_19 {dimension_numbers = #tpu.dot_dimension_numbers<[1], [0], [0], [1], [0, 0, 1, 1], [], []>} : vector<64x24xf32>, vector<24x24xf32>, vector<64x24xf32> -> vector<64x24xf32>
    %16 = vector.broadcast %10 : vector<1x24xf32> to vector<64x24xf32>
    %17 = arith.addf %16, %15 : vector<64x24xf32>
    %cst_20 = arith.constant dense<0.000000e+00> : vector<64x10xf32>
    %18 = tpu.matmul %17, %9, %cst_20 {dimension_numbers = #tpu.dot_dimension_numbers<[1], [1], [0], [0], [0, 0, 1, 0], [], []>} : vector<64x24xf32>, vector<10x24xf32>, vector<64x10xf32> -> vector<64x10xf32>
    %cst_21 = arith.constant dense<0xFF800000> : vector<64xf32>
    %19 = vector.multi_reduction <maximumf>, %18, %cst_21 [1] : vector<64x10xf32> to vector<64xf32>
    %20 = vector.shape_cast %19 : vector<64xf32> to vector<64x1xf32>
    %21 = vector.broadcast %20 : vector<64x1xf32> to vector<64x10xf32>
    %22 = arith.subf %18, %21 : vector<64x10xf32>
    %23 = math.exp %22 : vector<64x10xf32>
    %cst_22 = arith.constant dense<0.000000e+00> : vector<64xf32>
    %24 = vector.multi_reduction <add>, %23, %cst_22 [1] : vector<64x10xf32> to vector<64xf32>
    %25 = vector.shape_cast %24 : vector<64xf32> to vector<64x1xf32>
    %26 = tpu.reciprocal %25 {approx = true} : vector<64x1xf32> -> vector<64x1xf32>
    %27 = vector.broadcast %26 : vector<64x1xf32> to vector<64x10xf32>
    %28 = arith.mulf %23, %27 : vector<64x10xf32>
    %cst_23 = arith.constant dense<0.000000e+00> : vector<64x24xf32>
    %29 = tpu.matmul %28, %9, %cst_23 {dimension_numbers = #tpu.dot_dimension_numbers<[1], [0], [0], [1], [0, 0, 1, 1], [], []>} : vector<64x10xf32>, vector<10x24xf32>, vector<64x24xf32> -> vector<64x24xf32>
    %c0_24 = arith.constant 0 : index
    %c0_25 = arith.constant 0 : index
    %30 = vector.load %arg17[%c0_24, %c0_25] : memref<272x24xf32, #tpu.memory_space<vmem>>, vector<64x24xf32>
    tpu.vector_store %arg17[%c0_24, %c0_25], %29 {strides = array<i32>} : memref<272x24xf32, #tpu.memory_space<vmem>>, vector<64x24xf32>,
    %c16 = arith.constant 16 : index
    %c0_26 = arith.constant 0 : index
    %c0_27 = arith.constant 0 : index
    %31 = tpu.strided_load %arg16[%c16, %c0_26, %c0_27] {strides = array<i32: 2, 1, 1>} : memref<32x8x24xf32, #tpu.memory_space<vmem>>, vector<8x8x24xf32>
    %32 = vector.shape_cast %31 : vector<8x8x24xf32> to vector<64x24xf32>
    %c0_28 = arith.constant 0 : index
    %c0_29 = arith.constant 0 : index
    %c0_30 = arith.constant 0 : index
    %33 = vector.load %arg4[%c0_28, %c0_29, %c0_30] : memref<1x24x24xf32, #tpu.memory_space<vmem>>, vector<1x24x24xf32>
    %34 = vector.shape_cast %33 : vector<1x24x24xf32> to vector<24x24xf32>
    %cst_31 = arith.constant dense<0.000000e+00> : vector<64x24xf32>
    %35 = tpu.matmul %32, %34, %cst_31 {dimension_numbers = #tpu.dot_dimension_numbers<[1], [0], [0], [1], [0, 0, 1, 1], [], []>} : vector<64x24xf32>, vector<24x24xf32>, vector<64x24xf32> -> vector<64x24xf32>
    %36 = vector.broadcast %10 : vector<1x24xf32> to vector<64x24xf32>
    %37 = arith.addf %36, %35 : vector<64x24xf32>
    %cst_32 = arith.constant dense<0.000000e+00> : vector<64x10xf32>
    %38 = tpu.matmul %37, %9, %cst_32 {dimension_numbers = #tpu.dot_dimension_numbers<[1], [1], [0], [0], [0, 0, 1, 0], [], []>} : vector<64x24xf32>, vector<10x24xf32>, vector<64x10xf32> -> vector<64x10xf32>
    %cst_33 = arith.constant dense<0xFF800000> : vector<64xf32>
    %39 = vector.multi_reduction <maximumf>, %38, %cst_33 [1] : vector<64x10xf32> to vector<64xf32>
    %40 = vector.shape_cast %39 : vector<64xf32> to vector<64x1xf32>
    %41 = vector.broadcast %40 : vector<64x1xf32> to vector<64x10xf32>
    %42 = arith.subf %38, %41 : vector<64x10xf32>
    %43 = math.exp %42 : vector<64x10xf32>
    %cst_34 = arith.constant dense<0.000000e+00> : vector<64xf32>
    %44 = vector.multi_reduction <add>, %43, %cst_34 [1] : vector<64x10xf32> to vector<64xf32>
    %45 = vector.shape_cast %44 : vector<64xf32> to vector<64x1xf32>
    %46 = tpu.reciprocal %45 {approx = true} : vector<64x1xf32> -> vector<64x1xf32>
    %47 = vector.broadcast %46 : vector<64x1xf32> to vector<64x10xf32>
    %48 = arith.mulf %43, %47 : vector<64x10xf32>
    %cst_35 = arith.constant dense<0.000000e+00> : vector<64x24xf32>
    %49 = tpu.matmul %48, %9, %cst_35 {dimension_numbers = #tpu.dot_dimension_numbers<[1], [0], [0], [1], [0, 0, 1, 1], [], []>} : vector<64x10xf32>, vector<10x24xf32>, vector<64x24xf32> -> vector<64x24xf32>
    %c136 = arith.constant 136 : index
    %c0_36 = arith.constant 0 : index
    %50 = vector.load %arg17[%c136, %c0_36] : memref<272x24xf32, #tpu.memory_space<vmem>>, vector<64x24xf32>
    tpu.vector_store %arg17[%c136, %c0_36], %49 {strides = array<i32>} : memref<272x24xf32, #tpu.memory_space<vmem>>, vector<64x24xf32>,
    %c0_37 = arith.constant 0 : index
    %c0_38 = arith.constant 0 : index
    %51 = vector.load %arg9[%c0_37, %c0_38] : memref<10x24xf32, #tpu.memory_space<vmem>>, vector<10x24xf32>
    %c0_39 = arith.constant 0 : index
    %c0_40 = arith.constant 0 : index
    %52 = vector.load %arg8[%c0_39, %c0_40] : memref<1x24xf32, #tpu.memory_space<vmem>>, vector<1x24xf32>
    %c0_41 = arith.constant 0 : index
    %c0_42 = arith.constant 0 : index
    %c0_43 = arith.constant 0 : index
    %53 = tpu.strided_load %arg16[%c0_41, %c0_42, %c0_43] {strides = array<i32: 3, 1, 1>} : memref<32x8x24xf32, #tpu.memory_space<vmem>>, vector<5x8x24xf32>
    %54 = vector.shape_cast %53 : vector<5x8x24xf32> to vector<40x24xf32>
    %c0_44 = arith.constant 0 : index
    %c0_45 = arith.constant 0 : index
    %c0_46 = arith.constant 0 : index
    %55 = vector.load %arg7[%c0_44, %c0_45, %c0_46] : memref<2x24x24xf32, #tpu.memory_space<vmem>>, vector<1x24x24xf32>
    %56 = vector.shape_cast %55 : vector<1x24x24xf32> to vector<24x24xf32>
    %cst_47 = arith.constant dense<0.000000e+00> : vector<40x24xf32>
    %57 = tpu.matmul %54, %56, %cst_47 {dimension_numbers = #tpu.dot_dimension_numbers<[1], [0], [0], [1], [0, 0, 1, 1], [], []>} : vector<40x24xf32>, vector<24x24xf32>, vector<40x24xf32> -> vector<40x24xf32>
    %58 = vector.broadcast %52 : vector<1x24xf32> to vector<40x24xf32>
    %59 = arith.addf %58, %57 : vector<40x24xf32>
    %c1 = arith.constant 1 : index
    %c0_48 = arith.constant 0 : index
    %c0_49 = arith.constant 0 : index
    %60 = tpu.strided_load %arg16[%c1, %c0_48, %c0_49] {strides = array<i32: 3, 1, 1>} : memref<32x8x24xf32, #tpu.memory_space<vmem>>, vector<5x8x24xf32>
    %61 = vector.shape_cast %60 : vector<5x8x24xf32> to vector<40x24xf32>
    %c1_50 = arith.constant 1 : index
    %c0_51 = arith.constant 0 : index
    %c0_52 = arith.constant 0 : index
    %62 = vector.load %arg7[%c1_50, %c0_51, %c0_52] : memref<2x24x24xf32, #tpu.memory_space<vmem>>, vector<1x24x24xf32>
    %63 = vector.shape_cast %62 : vector<1x24x24xf32> to vector<24x24xf32>
    %cst_53 = arith.constant dense<0.000000e+00> : vector<40x24xf32>
    %64 = tpu.matmul %61, %63, %cst_53 {dimension_numbers = #tpu.dot_dimension_numbers<[1], [0], [0], [1], [0, 0, 1, 1], [], []>} : vector<40x24xf32>, vector<24x24xf32>, vector<40x24xf32> -> vector<40x24xf32>
    %65 = arith.addf %59, %64 : vector<40x24xf32>
    %cst_54 = arith.constant dense<0.000000e+00> : vector<40x10xf32>
    %66 = tpu.matmul %65, %51, %cst_54 {dimension_numbers = #tpu.dot_dimension_numbers<[1], [1], [0], [0], [0, 0, 1, 0], [], []>} : vector<40x24xf32>, vector<10x24xf32>, vector<40x10xf32> -> vector<40x10xf32>
    %cst_55 = arith.constant dense<0xFF800000> : vector<40xf32>
    %67 = vector.multi_reduction <maximumf>, %66, %cst_55 [1] : vector<40x10xf32> to vector<40xf32>
    %68 = vector.shape_cast %67 : vector<40xf32> to vector<40x1xf32>
    %69 = vector.broadcast %68 : vector<40x1xf32> to vector<40x10xf32>
    %70 = arith.subf %66, %69 : vector<40x10xf32>
    %71 = math.exp %70 : vector<40x10xf32>
    %cst_56 = arith.constant dense<0.000000e+00> : vector<40xf32>
    %72 = vector.multi_reduction <add>, %71, %cst_56 [1] : vector<40x10xf32> to vector<40xf32>
    %73 = vector.shape_cast %72 : vector<40xf32> to vector<40x1xf32>
    %74 = tpu.reciprocal %73 {approx = true} : vector<40x1xf32> -> vector<40x1xf32>
    %75 = vector.broadcast %74 : vector<40x1xf32> to vector<40x10xf32>
    %76 = arith.mulf %71, %75 : vector<40x10xf32>
    %cst_57 = arith.constant dense<0.000000e+00> : vector<40x24xf32>
    %77 = tpu.matmul %76, %51, %cst_57 {dimension_numbers = #tpu.dot_dimension_numbers<[1], [0], [0], [1], [0, 0, 1, 1], [], []>} : vector<40x10xf32>, vector<10x24xf32>, vector<40x24xf32> -> vector<40x24xf32>
    %c64 = arith.constant 64 : index
    %c0_58 = arith.constant 0 : index
    %78 = vector.load %arg17[%c64, %c0_58] : memref<272x24xf32, #tpu.memory_space<vmem>>, vector<40x24xf32>
    tpu.vector_store %arg17[%c64, %c0_58], %77 {strides = array<i32>} : memref<272x24xf32, #tpu.memory_space<vmem>>, vector<40x24xf32>,
    %c16_59 = arith.constant 16 : index
    %c0_60 = arith.constant 0 : index
    %c0_61 = arith.constant 0 : index
    %79 = tpu.strided_load %arg16[%c16_59, %c0_60, %c0_61] {strides = array<i32: 3, 1, 1>} : memref<32x8x24xf32, #tpu.memory_space<vmem>>, vector<5x8x24xf32>
    %80 = vector.shape_cast %79 : vector<5x8x24xf32> to vector<40x24xf32>
    %c0_62 = arith.constant 0 : index
    %c0_63 = arith.constant 0 : index
    %c0_64 = arith.constant 0 : index
    %81 = vector.load %arg7[%c0_62, %c0_63, %c0_64] : memref<2x24x24xf32, #tpu.memory_space<vmem>>, vector<1x24x24xf32>
    %82 = vector.shape_cast %81 : vector<1x24x24xf32> to vector<24x24xf32>
    %cst_65 = arith.constant dense<0.000000e+00> : vector<40x24xf32>
    %83 = tpu.matmul %80, %82, %cst_65 {dimension_numbers = #tpu.dot_dimension_numbers<[1], [0], [0], [1], [0, 0, 1, 1], [], []>} : vector<40x24xf32>, vector<24x24xf32>, vector<40x24xf32> -> vector<40x24xf32>
    %84 = vector.broadcast %52 : vector<1x24xf32> to vector<40x24xf32>
    %85 = arith.addf %84, %83 : vector<40x24xf32>
    %c17 = arith.constant 17 : index
    %c0_66 = arith.constant 0 : index
    %c0_67 = arith.constant 0 : index
    %86 = tpu.strided_load %arg16[%c17, %c0_66, %c0_67] {strides = array<i32: 3, 1, 1>} : memref<32x8x24xf32, #tpu.memory_space<vmem>>, vector<5x8x24xf32>
    %87 = vector.shape_cast %86 : vector<5x8x24xf32> to vector<40x24xf32>
    %c1_68 = arith.constant 1 : index
    %c0_69 = arith.constant 0 : index
    %c0_70 = arith.constant 0 : index
    %88 = vector.load %arg7[%c1_68, %c0_69, %c0_70] : memref<2x24x24xf32, #tpu.memory_space<vmem>>, vector<1x24x24xf32>
    %89 = vector.shape_cast %88 : vector<1x24x24xf32> to vector<24x24xf32>
    %cst_71 = arith.constant dense<0.000000e+00> : vector<40x24xf32>
    %90 = tpu.matmul %87, %89, %cst_71 {dimension_numbers = #tpu.dot_dimension_numbers<[1], [0], [0], [1], [0, 0, 1, 1], [], []>} : vector<40x24xf32>, vector<24x24xf32>, vector<40x24xf32> -> vector<40x24xf32>
    %91 = arith.addf %85, %90 : vector<40x24xf32>
    %cst_72 = arith.constant dense<0.000000e+00> : vector<40x10xf32>
    %92 = tpu.matmul %91, %51, %cst_72 {dimension_numbers = #tpu.dot_dimension_numbers<[1], [1], [0], [0], [0, 0, 1, 0], [], []>} : vector<40x24xf32>, vector<10x24xf32>, vector<40x10xf32> -> vector<40x10xf32>
    %cst_73 = arith.constant dense<0xFF800000> : vector<40xf32>
    %93 = vector.multi_reduction <maximumf>, %92, %cst_73 [1] : vector<40x10xf32> to vector<40xf32>
    %94 = vector.shape_cast %93 : vector<40xf32> to vector<40x1xf32>
    %95 = vector.broadcast %94 : vector<40x1xf32> to vector<40x10xf32>
    %96 = arith.subf %92, %95 : vector<40x10xf32>
    %97 = math.exp %96 : vector<40x10xf32>
    %cst_74 = arith.constant dense<0.000000e+00> : vector<40xf32>
    %98 = vector.multi_reduction <add>, %97, %cst_74 [1] : vector<40x10xf32> to vector<40xf32>
    %99 = vector.shape_cast %98 : vector<40xf32> to vector<40x1xf32>
    %100 = tpu.reciprocal %99 {approx = true} : vector<40x1xf32> -> vector<40x1xf32>
    %101 = vector.broadcast %100 : vector<40x1xf32> to vector<40x10xf32>
    %102 = arith.mulf %97, %101 : vector<40x10xf32>
    %cst_75 = arith.constant dense<0.000000e+00> : vector<40x24xf32>
    %103 = tpu.matmul %102, %51, %cst_75 {dimension_numbers = #tpu.dot_dimension_numbers<[1], [0], [0], [1], [0, 0, 1, 1], [], []>} : vector<40x10xf32>, vector<10x24xf32>, vector<40x24xf32> -> vector<40x24xf32>
    %c200 = arith.constant 200 : index
    %c0_76 = arith.constant 0 : index
    %104 = vector.load %arg17[%c200, %c0_76] : memref<272x24xf32, #tpu.memory_space<vmem>>, vector<40x24xf32>
    tpu.vector_store %arg17[%c200, %c0_76], %103 {strides = array<i32>} : memref<272x24xf32, #tpu.memory_space<vmem>>, vector<40x24xf32>,
    %c0_77 = arith.constant 0 : index
    %c0_78 = arith.constant 0 : index
    %105 = vector.load %arg12[%c0_77, %c0_78] : memref<10x24xf32, #tpu.memory_space<vmem>>, vector<10x24xf32>
    %c0_79 = arith.constant 0 : index
    %c0_80 = arith.constant 0 : index
    %106 = vector.load %arg11[%c0_79, %c0_80] : memref<1x24xf32, #tpu.memory_space<vmem>>, vector<1x24xf32>
    %c0_81 = arith.constant 0 : index
    %c0_82 = arith.constant 0 : index
    %c0_83 = arith.constant 0 : index
    %107 = tpu.strided_load %arg16[%c0_81, %c0_82, %c0_83] {strides = array<i32: 4, 1, 1>} : memref<32x8x24xf32, #tpu.memory_space<vmem>>, vector<4x8x24xf32>
    %108 = vector.shape_cast %107 : vector<4x8x24xf32> to vector<32x24xf32>
    %c0_84 = arith.constant 0 : index
    %c0_85 = arith.constant 0 : index
    %c0_86 = arith.constant 0 : index
    %109 = vector.load %arg10[%c0_84, %c0_85, %c0_86] : memref<3x24x24xf32, #tpu.memory_space<vmem>>, vector<1x24x24xf32>
    %110 = vector.shape_cast %109 : vector<1x24x24xf32> to vector<24x24xf32>
    %cst_87 = arith.constant dense<0.000000e+00> : vector<32x24xf32>
    %111 = tpu.matmul %108, %110, %cst_87 {dimension_numbers = #tpu.dot_dimension_numbers<[1], [0], [0], [1], [0, 0, 1, 1], [], []>} : vector<32x24xf32>, vector<24x24xf32>, vector<32x24xf32> -> vector<32x24xf32>
    %112 = vector.broadcast %106 : vector<1x24xf32> to vector<32x24xf32>
    %113 = arith.addf %112, %111 : vector<32x24xf32>
    %c1_88 = arith.constant 1 : index
    %c0_89 = arith.constant 0 : index
    %c0_90 = arith.constant 0 : index
    %114 = tpu.strided_load %arg16[%c1_88, %c0_89, %c0_90] {strides = array<i32: 4, 1, 1>} : memref<32x8x24xf32, #tpu.memory_space<vmem>>, vector<4x8x24xf32>
    %115 = vector.shape_cast %114 : vector<4x8x24xf32> to vector<32x24xf32>
    %c1_91 = arith.constant 1 : index
    %c0_92 = arith.constant 0 : index
    %c0_93 = arith.constant 0 : index
    %116 = vector.load %arg10[%c1_91, %c0_92, %c0_93] : memref<3x24x24xf32, #tpu.memory_space<vmem>>, vector<1x24x24xf32>
    %117 = vector.shape_cast %116 : vector<1x24x24xf32> to vector<24x24xf32>
    %cst_94 = arith.constant dense<0.000000e+00> : vector<32x24xf32>
    %118 = tpu.matmul %115, %117, %cst_94 {dimension_numbers = #tpu.dot_dimension_numbers<[1], [0], [0], [1], [0, 0, 1, 1], [], []>} : vector<32x24xf32>, vector<24x24xf32>, vector<32x24xf32> -> vector<32x24xf32>
    %119 = arith.addf %113, %118 : vector<32x24xf32>
    %c2 = arith.constant 2 : index
    %c0_95 = arith.constant 0 : index
    %c0_96 = arith.constant 0 : index
    %120 = tpu.strided_load %arg16[%c2, %c0_95, %c0_96] {strides = array<i32: 4, 1, 1>} : memref<32x8x24xf32, #tpu.memory_space<vmem>>, vector<4x8x24xf32>
    %121 = vector.shape_cast %120 : vector<4x8x24xf32> to vector<32x24xf32>
    %c2_97 = arith.constant 2 : index
    %c0_98 = arith.constant 0 : index
    %c0_99 = arith.constant 0 : index
    %122 = vector.load %arg10[%c2_97, %c0_98, %c0_99] : memref<3x24x24xf32, #tpu.memory_space<vmem>>, vector<1x24x24xf32>
    %123 = vector.shape_cast %122 : vector<1x24x24xf32> to vector<24x24xf32>
    %cst_100 = arith.constant dense<0.000000e+00> : vector<32x24xf32>
    %124 = tpu.matmul %121, %123, %cst_100 {dimension_numbers = #tpu.dot_dimension_numbers<[1], [0], [0], [1], [0, 0, 1, 1], [], []>} : vector<32x24xf32>, vector<24x24xf32>, vector<32x24xf32> -> vector<32x24xf32>
    %125 = arith.addf %119, %124 : vector<32x24xf32>
    %cst_101 = arith.constant dense<0.000000e+00> : vector<32x10xf32>
    %126 = tpu.matmul %125, %105, %cst_101 {dimension_numbers = #tpu.dot_dimension_numbers<[1], [1], [0], [0], [0, 0, 1, 0], [], []>} : vector<32x24xf32>, vector<10x24xf32>, vector<32x10xf32> -> vector<32x10xf32>
    %cst_102 = arith.constant dense<0xFF800000> : vector<32xf32>
    %127 = vector.multi_reduction <maximumf>, %126, %cst_102 [1] : vector<32x10xf32> to vector<32xf32>
    %128 = vector.shape_cast %127 : vector<32xf32> to vector<32x1xf32>
    %129 = vector.broadcast %128 : vector<32x1xf32> to vector<32x10xf32>
    %130 = arith.subf %126, %129 : vector<32x10xf32>
    %131 = math.exp %130 : vector<32x10xf32>
    %cst_103 = arith.constant dense<0.000000e+00> : vector<32xf32>
    %132 = vector.multi_reduction <add>, %131, %cst_103 [1] : vector<32x10xf32> to vector<32xf32>
    %133 = vector.shape_cast %132 : vector<32xf32> to vector<32x1xf32>
    %134 = tpu.reciprocal %133 {approx = true} : vector<32x1xf32> -> vector<32x1xf32>
    %135 = vector.broadcast %134 : vector<32x1xf32> to vector<32x10xf32>
    %136 = arith.mulf %131, %135 : vector<32x10xf32>
    %cst_104 = arith.constant dense<0.000000e+00> : vector<32x24xf32>
    %137 = tpu.matmul %136, %105, %cst_104 {dimension_numbers = #tpu.dot_dimension_numbers<[1], [0], [0], [1], [0, 0, 1, 1], [], []>} : vector<32x10xf32>, vector<10x24xf32>, vector<32x24xf32> -> vector<32x24xf32>
    %c104 = arith.constant 104 : index
    %c0_105 = arith.constant 0 : index
    %138 = vector.load %arg17[%c104, %c0_105] : memref<272x24xf32, #tpu.memory_space<vmem>>, vector<32x24xf32>
    tpu.vector_store %arg17[%c104, %c0_105], %137 {strides = array<i32>} : memref<272x24xf32, #tpu.memory_space<vmem>>, vector<32x24xf32>,
    %c16_106 = arith.constant 16 : index
    %c0_107 = arith.constant 0 : index
    %c0_108 = arith.constant 0 : index
    %139 = tpu.strided_load %arg16[%c16_106, %c0_107, %c0_108] {strides = array<i32: 4, 1, 1>} : memref<32x8x24xf32, #tpu.memory_space<vmem>>, vector<4x8x24xf32>
    %140 = vector.shape_cast %139 : vector<4x8x24xf32> to vector<32x24xf32>
    %c0_109 = arith.constant 0 : index
    %c0_110 = arith.constant 0 : index
    %c0_111 = arith.constant 0 : index
    %141 = vector.load %arg10[%c0_109, %c0_110, %c0_111] : memref<3x24x24xf32, #tpu.memory_space<vmem>>, vector<1x24x24xf32>
    %142 = vector.shape_cast %141 : vector<1x24x24xf32> to vector<24x24xf32>
    %cst_112 = arith.constant dense<0.000000e+00> : vector<32x24xf32>
    %143 = tpu.matmul %140, %142, %cst_112 {dimension_numbers = #tpu.dot_dimension_numbers<[1], [0], [0], [1], [0, 0, 1, 1], [], []>} : vector<32x24xf32>, vector<24x24xf32>, vector<32x24xf32> -> vector<32x24xf32>
    %144 = vector.broadcast %106 : vector<1x24xf32> to vector<32x24xf32>
    %145 = arith.addf %144, %143 : vector<32x24xf32>
    %c17_113 = arith.constant 17 : index
    %c0_114 = arith.constant 0 : index
    %c0_115 = arith.constant 0 : index
    %146 = tpu.strided_load %arg16[%c17_113, %c0_114, %c0_115] {strides = array<i32: 4, 1, 1>} : memref<32x8x24xf32, #tpu.memory_space<vmem>>, vector<4x8x24xf32>
    %147 = vector.shape_cast %146 : vector<4x8x24xf32> to vector<32x24xf32>
    %c1_116 = arith.constant 1 : index
    %c0_117 = arith.constant 0 : index
    %c0_118 = arith.constant 0 : index
    %148 = vector.load %arg10[%c1_116, %c0_117, %c0_118] : memref<3x24x24xf32, #tpu.memory_space<vmem>>, vector<1x24x24xf32>
    %149 = vector.shape_cast %148 : vector<1x24x24xf32> to vector<24x24xf32>
    %cst_119 = arith.constant dense<0.000000e+00> : vector<32x24xf32>
    %150 = tpu.matmul %147, %149, %cst_119 {dimension_numbers = #tpu.dot_dimension_numbers<[1], [0], [0], [1], [0, 0, 1, 1], [], []>} : vector<32x24xf32>, vector<24x24xf32>, vector<32x24xf32> -> vector<32x24xf32>
    %151 = arith.addf %145, %150 : vector<32x24xf32>
    %c18 = arith.constant 18 : index
    %c0_120 = arith.constant 0 : index
    %c0_121 = arith.constant 0 : index
    %152 = tpu.strided_load %arg16[%c18, %c0_120, %c0_121] {strides = array<i32: 4, 1, 1>} : memref<32x8x24xf32, #tpu.memory_space<vmem>>, vector<4x8x24xf32>
    %153 = vector.shape_cast %152 : vector<4x8x24xf32> to vector<32x24xf32>
    %c2_122 = arith.constant 2 : index
    %c0_123 = arith.constant 0 : index
    %c0_124 = arith.constant 0 : index
    %154 = vector.load %arg10[%c2_122, %c0_123, %c0_124] : memref<3x24x24xf32, #tpu.memory_space<vmem>>, vector<1x24x24xf32>
    %155 = vector.shape_cast %154 : vector<1x24x24xf32> to vector<24x24xf32>
    %cst_125 = arith.constant dense<0.000000e+00> : vector<32x24xf32>
    %156 = tpu.matmul %153, %155, %cst_125 {dimension_numbers = #tpu.dot_dimension_numbers<[1], [0], [0], [1], [0, 0, 1, 1], [], []>} : vector<32x24xf32>, vector<24x24xf32>, vector<32x24xf32> -> vector<32x24xf32>
    %157 = arith.addf %151, %156 : vector<32x24xf32>
    %cst_126 = arith.constant dense<0.000000e+00> : vector<32x10xf32>
    %158 = tpu.matmul %157, %105, %cst_126 {dimension_numbers = #tpu.dot_dimension_numbers<[1], [1], [0], [0], [0, 0, 1, 0], [], []>} : vector<32x24xf32>, vector<10x24xf32>, vector<32x10xf32> -> vector<32x10xf32>
    %cst_127 = arith.constant dense<0xFF800000> : vector<32xf32>
    %159 = vector.multi_reduction <maximumf>, %158, %cst_127 [1] : vector<32x10xf32> to vector<32xf32>
    %160 = vector.shape_cast %159 : vector<32xf32> to vector<32x1xf32>
    %161 = vector.broadcast %160 : vector<32x1xf32> to vector<32x10xf32>
    %162 = arith.subf %158, %161 : vector<32x10xf32>
    %163 = math.exp %162 : vector<32x10xf32>
    %cst_128 = arith.constant dense<0.000000e+00> : vector<32xf32>
    %164 = vector.multi_reduction <add>, %163, %cst_128 [1] : vector<32x10xf32> to vector<32xf32>
    %165 = vector.shape_cast %164 : vector<32xf32> to vector<32x1xf32>
    %166 = tpu.reciprocal %165 {approx = true} : vector<32x1xf32> -> vector<32x1xf32>
    %167 = vector.broadcast %166 : vector<32x1xf32> to vector<32x10xf32>
    %168 = arith.mulf %163, %167 : vector<32x10xf32>
    %cst_129 = arith.constant dense<0.000000e+00> : vector<32x24xf32>
    %169 = tpu.matmul %168, %105, %cst_129 {dimension_numbers = #tpu.dot_dimension_numbers<[1], [0], [0], [1], [0, 0, 1, 1], [], []>} : vector<32x10xf32>, vector<10x24xf32>, vector<32x24xf32> -> vector<32x24xf32>
    %c240 = arith.constant 240 : index
    %c0_130 = arith.constant 0 : index
    %170 = vector.load %arg17[%c240, %c0_130] : memref<272x24xf32, #tpu.memory_space<vmem>>, vector<32x24xf32>
    tpu.vector_store %arg17[%c240, %c0_130], %169 {strides = array<i32>} : memref<272x24xf32, #tpu.memory_space<vmem>>, vector<32x24xf32>,
    %c0_131 = arith.constant 0 : index
    %c0_132 = arith.constant 0 : index
    %171 = vector.load %arg17[%c0_131, %c0_132] : memref<272x24xf32, #tpu.memory_space<vmem>>, vector<272x24xf32>
    %c0_133 = arith.constant 0 : index
    %c0_134 = arith.constant 0 : index
    %172 = vector.load %arg13[%c0_133, %c0_134] : memref<24x32xf32, #tpu.memory_space<vmem>>, vector<24x32xf32>
    %cst_135 = arith.constant dense<0.000000e+00> : vector<272x32xf32>
    %173 = tpu.matmul %171, %172, %cst_135 {dimension_numbers = #tpu.dot_dimension_numbers<[1], [0], [0], [1], [0, 0, 1, 1], [], []>} : vector<272x24xf32>, vector<24x32xf32>, vector<272x32xf32> -> vector<272x32xf32>
    %c0_136 = arith.constant 0 : index
    %c0_137 = arith.constant 0 : index
    %174 = vector.load %arg14[%c0_136, %c0_137] : memref<1x32xf32, #tpu.memory_space<vmem>>, vector<1x32xf32>
    %175 = vector.broadcast %174 : vector<1x32xf32> to vector<272x32xf32>
    %176 = arith.addf %173, %175 : vector<272x32xf32>
    %177 = vector.shape_cast %176 : vector<272x32xf32> to vector<2x136x32xf32>
    %c0_138 = arith.constant 0 : index
    %c0_139 = arith.constant 0 : index
    %c0_140 = arith.constant 0 : index
    %178 = vector.load %arg15[%c0_138, %c0_139, %c0_140] : memref<2x136x32xf32, #tpu.memory_space<vmem>>, vector<2x136x32xf32>
    tpu.vector_store %arg15[%c0_138, %c0_139, %c0_140], %177 {strides = array<i32>} : memref<2x136x32xf32, #tpu.memory_space<vmem>>, vector<2x136x32xf32>,
    return
  }
  func.func @transform_0(%arg0: i32) -> (i32, i32, i32) {
    %c0_i32 = arith.constant 0 : i32
    %c0_i32_0 = arith.constant 0 : i32
    %c0_i32_1 = arith.constant 0 : i32
    return %arg0, %c0_i32, %c0_i32_0 : i32, i32, i32
  }
  func.func @transform_1(%arg0: i32) -> (i32, i32) {
    %c0_i32 = arith.constant 0 : i32
    %c0_i32_0 = arith.constant 0 : i32
    %c0_i32_1 = arith.constant 0 : i32
    return %c0_i32, %c0_i32_0 : i32, i32
  }
  func.func @transform_2(%arg0: i32) -> (i32, i32) {
    %c0_i32 = arith.constant 0 : i32
    %c0_i32_0 = arith.constant 0 : i32
    %c0_i32_1 = arith.constant 0 : i32
    return %c0_i32, %c0_i32_0 : i32, i32
  }
  func.func @transform_3(%arg0: i32) -> (i32, i32, i32) {
    %c0_i32 = arith.constant 0 : i32
    %c0_i32_0 = arith.constant 0 : i32
    %c0_i32_1 = arith.constant 0 : i32
    %c0_i32_2 = arith.constant 0 : i32
    return %c0_i32, %c0_i32_0, %c0_i32_1 : i32, i32, i32
  }
  func.func @transform_4(%arg0: i32) -> (i32, i32) {
    %c0_i32 = arith.constant 0 : i32
    %c0_i32_0 = arith.constant 0 : i32
    %c0_i32_1 = arith.constant 0 : i32
    return %c0_i32, %c0_i32_0 : i32, i32
  }
  func.func @transform_5(%arg0: i32) -> (i32, i32) {
    %c0_i32 = arith.constant 0 : i32
    %c0_i32_0 = arith.constant 0 : i32
    %c0_i32_1 = arith.constant 0 : i32
    return %c0_i32, %c0_i32_0 : i32, i32
  }
  func.func @transform_6(%arg0: i32) -> (i32, i32, i32) {
    %c0_i32 = arith.constant 0 : i32
    %c0_i32_0 = arith.constant 0 : i32
    %c0_i32_1 = arith.constant 0 : i32
    %c0_i32_2 = arith.constant 0 : i32
    return %c0_i32, %c0_i32_0, %c0_i32_1 : i32, i32, i32
  }
  func.func @transform_7(%arg0: i32) -> (i32, i32) {
    %c0_i32 = arith.constant 0 : i32
    %c0_i32_0 = arith.constant 0 : i32
    %c0_i32_1 = arith.constant 0 : i32
    return %c0_i32, %c0_i32_0 : i32, i32
  }
  func.func @transform_8(%arg0: i32) -> (i32, i32) {
    %c0_i32 = arith.constant 0 : i32
    %c0_i32_0 = arith.constant 0 : i32
    %c0_i32_1 = arith.constant 0 : i32
    return %c0_i32, %c0_i32_0 : i32, i32
  }
  func.func @transform_9(%arg0: i32) -> (i32, i32, i32) {
    %c0_i32 = arith.constant 0 : i32
    %c0_i32_0 = arith.constant 0 : i32
    %c0_i32_1 = arith.constant 0 : i32
    %c0_i32_2 = arith.constant 0 : i32
    return %c0_i32, %c0_i32_0, %c0_i32_1 : i32, i32, i32
  }
  func.func @transform_10(%arg0: i32) -> (i32, i32) {
    %c0_i32 = arith.constant 0 : i32
    %c0_i32_0 = arith.constant 0 : i32
    %c0_i32_1 = arith.constant 0 : i32
    return %c0_i32, %c0_i32_0 : i32, i32
  }
  func.func @transform_11(%arg0: i32) -> (i32, i32) {
    %c0_i32 = arith.constant 0 : i32
    %c0_i32_0 = arith.constant 0 : i32
    %c0_i32_1 = arith.constant 0 : i32
    return %c0_i32, %c0_i32_0 : i32, i32
  }
  func.func @transform_12(%arg0: i32) -> (i32, i32) {
    %c0_i32 = arith.constant 0 : i32
    %c0_i32_0 = arith.constant 0 : i32
    %c0_i32_1 = arith.constant 0 : i32
    return %c0_i32, %c0_i32_0 : i32, i32
  }
  func.func @transform_13(%arg0: i32) -> (i32, i32) {
    %c0_i32 = arith.constant 0 : i32
    %c0_i32_0 = arith.constant 0 : i32
    %c0_i32_1 = arith.constant 0 : i32
    return %c0_i32, %c0_i32_0 : i32, i32
  }
  func.func @transform_14(%arg0: i32) -> (i32, i32, i32) {
    %c0_i32 = arith.constant 0 : i32
    %c0_i32_0 = arith.constant 0 : i32
    %c0_i32_1 = arith.constant 0 : i32
    return %arg0, %c0_i32, %c0_i32_0 : i32, i32, i32
  }
}

</mosaic_0001>

<llo_original>
// kernel: tpu_custom_call.1
$region0: #{tpu_custom_call.1}
  #allocation0 [shape = 'u32[]', space=smem, size = 0x4, offset = 0x4, fixed_abs, tag = 'smem constant byte address 0x4 - core index']
  #allocation1 [shape = 'u32[144,128]{1,0:T(1,128)}', space=vmem, size = 0x12000, scoped, tag = 'internal scratch']
  #allocation2 [shape = 'f32[32,8,24]{2,1,0:T(8,128)}', space=vmem, size = 0x20000, scoped, tag = 'scratch operand']
  #allocation3 [shape = 'f32[272,24]{1,0:T(8,128)}', space=vmem, size = 0x22000, scoped, tag = 'scratch operand']
  %s0 = inlined_call_operand.vmem [shape: f32[2,128,32], index: 0, kind: input, shape index: {}]
  %s1 = inlined_call_operand.vmem [shape: f32[32,24], index: 1, kind: input, shape index: {}]
  %s2 = inlined_call_operand.vmem [shape: f32[1,24], index: 2, kind: input, shape index: {}]
  %s3 = inlined_call_operand.vmem [shape: f32[1,24,24], index: 3, kind: input, shape index: {}]
  %s4 = inlined_call_operand.vmem [shape: f32[1,24], index: 4, kind: input, shape index: {}]
  %s5 = inlined_call_operand.vmem [shape: f32[10,24], index: 5, kind: input, shape index: {}]
  %s6 = inlined_call_operand.vmem [shape: f32[2,24,24], index: 6, kind: input, shape index: {}]
  %s7 = inlined_call_operand.vmem [shape: f32[1,24], index: 7, kind: input, shape index: {}]
  %s8 = inlined_call_operand.vmem [shape: f32[10,24], index: 8, kind: input, shape index: {}]
  %s9 = inlined_call_operand.vmem [shape: f32[3,24,24], index: 9, kind: input, shape index: {}]
  %s10 = inlined_call_operand.vmem [shape: f32[1,24], index: 10, kind: input, shape index: {}]
  %s11 = inlined_call_operand.vmem [shape: f32[10,24], index: 11, kind: input, shape index: {}]
  %s12 = inlined_call_operand.vmem [shape: f32[24,32], index: 12, kind: input, shape index: {}]
  %s13 = inlined_call_operand.vmem [shape: f32[1,32], index: 13, kind: input, shape index: {}]
  %s14 = inlined_call_operand.vmem [shape: f32[2,136,32], index: 14, kind: output, shape index: {}]
  %s15 = sld [smem:[#allocation0]]
  $region66: #{tpu_custom_call.1} parent=0
    _
  %s17 = ssub.s32 1, %s15
  %s18 = scalar_select 0, %s17, %s15
  // Predicated region
  $region2: #{tpu_custom_call.1} parent=0 // pred_check
    _
  $region3: #{tpu_custom_call.1} parent=0 // pred_check_branch
    %20 = sbr.rel (0) target = $region5
  $region4: #{tpu_custom_call.1} parent=0 // pred_region
    _
  $region5: #{tpu_custom_call.1} parent=0 // pred_fallthru
    _
  // Predicated region
  $region6: #{tpu_custom_call.1} parent=0 // pred_check
    _
  $region7: #{tpu_custom_call.1} parent=0 // pred_check_branch
    %22 = sbr.rel (0) target = $region9
  $region8: #{tpu_custom_call.1} parent=0 // pred_region
    _
  $region9: #{tpu_custom_call.1} parent=0 // pred_fallthru
    _
  // Predicated region
  $region10: #{tpu_custom_call.1} parent=0 // pred_check
    _
  $region11: #{tpu_custom_call.1} parent=0 // pred_check_branch
    %24 = sbr.rel (0) target = $region13
  $region12: #{tpu_custom_call.1} parent=0 // pred_region
    _
  $region13: #{tpu_custom_call.1} parent=0 // pred_fallthru
    _
  // Predicated region
  $region14: #{tpu_custom_call.1} parent=0 // pred_check
    _
  $region15: #{tpu_custom_call.1} parent=0 // pred_check_branch
    %26 = sbr.rel (0) target = $region17
  $region16: #{tpu_custom_call.1} parent=0 // pred_region
    _
  $region17: #{tpu_custom_call.1} parent=0 // pred_fallthru
    _
  // Predicated region
  $region18: #{tpu_custom_call.1} parent=0 // pred_check
    _
  $region19: #{tpu_custom_call.1} parent=0 // pred_check_branch
    %28 = sbr.rel (0) target = $region21
  $region20: #{tpu_custom_call.1} parent=0 // pred_region
    _
  $region21: #{tpu_custom_call.1} parent=0 // pred_fallthru
    _
  // Predicated region
  $region22: #{tpu_custom_call.1} parent=0 // pred_check
    _
  $region23: #{tpu_custom_call.1} parent=0 // pred_check_branch
    %30 = sbr.rel (0) target = $region25
  $region24: #{tpu_custom_call.1} parent=0 // pred_region
    _
  $region25: #{tpu_custom_call.1} parent=0 // pred_fallthru
    _
  // Predicated region
  $region26: #{tpu_custom_call.1} parent=0 // pred_check
    _
  $region27: #{tpu_custom_call.1} parent=0 // pred_check_branch
    %32 = sbr.rel (0) target = $region29
  $region28: #{tpu_custom_call.1} parent=0 // pred_region
    _
  $region29: #{tpu_custom_call.1} parent=0 // pred_fallthru
    _
  // Predicated region
  $region30: #{tpu_custom_call.1} parent=0 // pred_check
    _
  $region31: #{tpu_custom_call.1} parent=0 // pred_check_branch
    %34 = sbr.rel (0) target = $region33
  $region32: #{tpu_custom_call.1} parent=0 // pred_region
    _
  $region33: #{tpu_custom_call.1} parent=0 // pred_fallthru
    _
  // Predicated region
  $region34: #{tpu_custom_call.1} parent=0 // pred_check
    _
  $region35: #{tpu_custom_call.1} parent=0 // pred_check_branch
    %36 = sbr.rel (0) target = $region37
  $region36: #{tpu_custom_call.1} parent=0 // pred_region
    _
  $region37: #{tpu_custom_call.1} parent=0 // pred_fallthru
    _
  // Predicated region
  $region38: #{tpu_custom_call.1} parent=0 // pred_check
    _
  $region39: #{tpu_custom_call.1} parent=0 // pred_check_branch
    %38 = sbr.rel (0) target = $region41
  $region40: #{tpu_custom_call.1} parent=0 // pred_region
    _
  $region41: #{tpu_custom_call.1} parent=0 // pred_fallthru
    _
  // Predicated region
  $region42: #{tpu_custom_call.1} parent=0 // pred_check
    _
  $region43: #{tpu_custom_call.1} parent=0 // pred_check_branch
    %40 = sbr.rel (0) target = $region45
  $region44: #{tpu_custom_call.1} parent=0 // pred_region
    _
  $region45: #{tpu_custom_call.1} parent=0 // pred_fallthru
    _
  // Predicated region
  $region46: #{tpu_custom_call.1} parent=0 // pred_check
    _
  $region47: #{tpu_custom_call.1} parent=0 // pred_check_branch
    %42 = sbr.rel (0) target = $region49
  $region48: #{tpu_custom_call.1} parent=0 // pred_region
    _
  $region49: #{tpu_custom_call.1} parent=0 // pred_fallthru
    _
  // Predicated region
  $region50: #{tpu_custom_call.1} parent=0 // pred_check
    _
  $region51: #{tpu_custom_call.1} parent=0 // pred_check_branch
    %44 = sbr.rel (0) target = $region53
  $region52: #{tpu_custom_call.1} parent=0 // pred_region
    _
  $region53: #{tpu_custom_call.1} parent=0 // pred_fallthru
    _
  // Predicated region
  $region54: #{tpu_custom_call.1} parent=0 // pred_check
    _
  $region55: #{tpu_custom_call.1} parent=0 // pred_check_branch
    %46 = sbr.rel (0) target = $region57
  $region56: #{tpu_custom_call.1} parent=0 // pred_region
    _
  $region57: #{tpu_custom_call.1} parent=0 // pred_fallthru
    _
  %v47 = vld [vmem:[%s0] sm:$0xff]
  %v48 = vld [vmem:[%s0 + $0x8] sm:$0xff]
  %v49 = vld [vmem:[%s0 + $0x10] sm:$0xff]
  %v50 = vld [vmem:[%s0 + $0x18] sm:$0xff]
  %v51 = vld [vmem:[%s0 + $0x20] sm:$0xff]
  %v52 = vld [vmem:[%s0 + $0x28] sm:$0xff]
  %v53 = vld [vmem:[%s0 + $0x30] sm:$0xff]
  %v54 = vld [vmem:[%s0 + $0x38] sm:$0xff]
  %v55 = vld [vmem:[%s0 + $0x40] sm:$0xff]
  %v56 = vld [vmem:[%s0 + $0x48] sm:$0xff]
  %v57 = vld [vmem:[%s0 + $0x50] sm:$0xff]
  %v58 = vld [vmem:[%s0 + $0x58] sm:$0xff]
  %v59 = vld [vmem:[%s0 + $0x60] sm:$0xff]
  %v60 = vld [vmem:[%s0 + $0x68] sm:$0xff]
  %v61 = vld [vmem:[%s0 + $0x70] sm:$0xff]
  %v62 = vld [vmem:[%s0 + $0x78] sm:$0xff]
  %v63 = vld [vmem:[%s0 + $0x80] sm:$0xff]
  %v64 = vld [vmem:[%s0 + $0x88] sm:$0xff]
  %v65 = vld [vmem:[%s0 + $0x90] sm:$0xff]
  %v66 = vld [vmem:[%s0 + $0x98] sm:$0xff]
  %v67 = vld [vmem:[%s0 + $0xa0] sm:$0xff]
  %v68 = vld [vmem:[%s0 + $0xa8] sm:$0xff]
  %v69 = vld [vmem:[%s0 + $0xb0] sm:$0xff]
  %v70 = vld [vmem:[%s0 + $0xb8] sm:$0xff]
  %v71 = vld [vmem:[%s0 + $0xc0] sm:$0xff]
  %v72 = vld [vmem:[%s0 + $0xc8] sm:$0xff]
  %v73 = vld [vmem:[%s0 + $0xd0] sm:$0xff]
  %v74 = vld [vmem:[%s0 + $0xd8] sm:$0xff]
  %v75 = vld [vmem:[%s0 + $0xe0] sm:$0xff]
  %v76 = vld [vmem:[%s0 + $0xe8] sm:$0xff]
  %v77 = vld [vmem:[%s0 + $0xf0] sm:$0xff]
  %v78 = vld [vmem:[%s0 + $0xf8] sm:$0xff]
  %v79 = vld [vmem:[%s1] sm:$0xff]
  %v80 = vld [vmem:[%s1 + $0x8] sm:$0xff]
  %v81 = vld [vmem:[%s1 + $0x10] sm:$0xff]
  %v82 = vld [vmem:[%s1 + $0x18] sm:$0xff]
  %v83 = vld [vmem:[%s2] sm:$0x1]
  %v85 = vlaneseq
  %v86 = vshrl.u32 %v85, 7
  %v87 = vsub.s32 0, %v86
  %v88 = vrot.slane %v83, %v87
  %vm90 = vcmask 261120
  %v92 = vsel %vm90, %v47, 0
  %v95 = vsel %vm90, %v48, 0
  %v98 = vsel %vm90, %v49, 0
  %v101 = vsel %vm90, %v50, 0
  %v104 = vsel %vm90, %v51, 0
  %v107 = vsel %vm90, %v52, 0
  %v110 = vsel %vm90, %v53, 0
  %v113 = vsel %vm90, %v54, 0
  %v116 = vsel %vm90, %v55, 0
  %v119 = vsel %vm90, %v56, 0
  %v122 = vsel %vm90, %v57, 0
  %v125 = vsel %vm90, %v58, 0
  %v128 = vsel %vm90, %v59, 0
  %v131 = vsel %vm90, %v60, 0
  %v134 = vsel %vm90, %v61, 0
  %v137 = vsel %vm90, %v62, 0
  %v140 = vsel %vm90, %v63, 0
  %v143 = vsel %vm90, %v64, 0
  %v146 = vsel %vm90, %v65, 0
  %v149 = vsel %vm90, %v66, 0
  %v152 = vsel %vm90, %v67, 0
  %v155 = vsel %vm90, %v68, 0
  %v158 = vsel %vm90, %v69, 0
  %v161 = vsel %vm90, %v70, 0
  %v164 = vsel %vm90, %v71, 0
  %v167 = vsel %vm90, %v72, 0
  %v170 = vsel %vm90, %v73, 0
  %v173 = vsel %vm90, %v74, 0
  %v176 = vsel %vm90, %v75, 0
  %v179 = vsel %vm90, %v76, 0
  %v182 = vsel %vm90, %v77, 0
  %v185 = vsel %vm90, %v78, 0
  %187 = vmatprep.subr.mxu0 0.0
  %188 = vmatpush1.msra.mxu0 %v79
  %189 = vmatprep.subr.mxu0 0.0
  %190 = vmatpush1.msra.mxu0 %v80
  %191 = vmatprep.subr.mxu0 0.0
  %192 = vmatpush1.msra.mxu0 %v81
  %193 = vmatprep.subr.mxu0 0.0
  %194 = vmatpush1.msra.mxu0 %v82
  %195 = vmatprep.subr.mxu0 0.0
  %196 = vmatpush1.msra.mxu0 0.0
  %197 = vmatprep.subr.mxu0 0.0
  %198 = vmatpush1.msra.mxu0 0.0
  %199 = vmatprep.subr.mxu0 0.0
  %200 = vmatpush1.msra.mxu0 0.0
  %201 = vmatprep.subr.mxu0 0.0
  %202 = vmatpush1.msra.mxu0 0.0
  %203 = vmatprep.subr.mxu0 0.0
  %204 = vmatpush1.msra.mxu0 0.0
  %205 = vmatprep.subr.mxu0 0.0
  %206 = vmatpush1.msra.mxu0 0.0
  %207 = vmatprep.subr.mxu0 0.0
  %208 = vmatpush1.msra.mxu0 0.0
  %209 = vmatprep.subr.mxu0 0.0
  %210 = vmatpush1.msra.mxu0 0.0
  %211 = vmatprep.subr.mxu0 0.0
  %212 = vmatpush1.msra.mxu0 0.0
  %213 = vmatprep.subr.mxu0 0.0
  %214 = vmatpush1.msra.mxu0 0.0
  %215 = vmatprep.subr.mxu0 0.0
  %216 = vmatpush1.msra.mxu0 0.0
  %217 = vmatprep.subr.mxu0 0.0
  %218 = vmatpush1.msra.mxu0 0.0
  %219 = vmatprep.subr.mxu0 0.0
  %220 = vmatpush1.msra.mxu0 0.0
  %221 = vmatprep.subr.mxu0 0.0
  %222 = vmatpush1.msra.mxu0 0.0
  %223 = vmatprep.subr.mxu0 0.0
  %224 = vmatpush1.msra.mxu0 0.0
  %225 = vmatprep.subr.mxu0 0.0
  %226 = vmatpush1.msra.mxu0 0.0
  %227 = vmatprep.subr.mxu0 0.0
  %228 = vmatpush1.msra.mxu0 0.0
  %229 = vmatprep.subr.mxu0 0.0
  %230 = vmatpush1.msra.mxu0 0.0
  %231 = vmatprep.subr.mxu0 0.0
  %232 = vmatpush1.msra.mxu0 0.0
  %233 = vmatprep.subr.mxu0 0.0
  %234 = vmatpush1.msra.mxu0 0.0
  %235 = vmatprep.subr.mxu0 0.0
  %236 = vmatpush1.msra.mxu0 0.0
  %237 = vmatprep.subr.mxu0 0.0
  %238 = vmatpush1.msra.mxu0 0.0
  %239 = vmatprep.subr.mxu0 0.0
  %240 = vmatpush1.msra.mxu0 0.0
  %241 = vmatprep.subr.mxu0 0.0
  %242 = vmatpush1.msra.mxu0 0.0
  %243 = vmatprep.subr.mxu0 0.0
  %244 = vmatpush1.msra.mxu0 0.0
  %245 = vmatprep.subr.mxu0 0.0
  %246 = vmatpush1.msra.mxu0 0.0
  %247 = vmatprep.subr.mxu0 0.0
  %248 = vmatpush1.msra.mxu0 0.0
  %249 = vmatprep.subr.mxu0 0.0
  %250 = vmatpush1.msra.mxu0 0.0
  %251 = vmatprep.mubr.f32.mxu0 0.0
  %252 = vmatmul.mubr.f32.gmra.mrb[0].mxu0 %v92
  %v253 = vpop.f32.mrb[0].mxu0
  %v254 = vadd.f32 %v88, %v253
  %v255 = vpop.f32.mrb[0].mxu0
  %256 = vmatprep.mubr.f32.mxu0 0.0
  %257 = vmatmul.mubr.f32.gmra.mrb[0].mxu0 %v95
  %v258 = vpop.f32.mrb[0].mxu0
  %v259 = vadd.f32 %v88, %v258
  %v260 = vpop.f32.mrb[0].mxu0
  %261 = vmatprep.mubr.f32.mxu0 0.0
  %262 = vmatmul.mubr.f32.gmra.mrb[0].mxu0 %v98
  %v263 = vpop.f32.mrb[0].mxu0
  %v264 = vadd.f32 %v88, %v263
  %v265 = vpop.f32.mrb[0].mxu0
  %266 = vmatprep.mubr.f32.mxu0 0.0
  %267 = vmatmul.mubr.f32.gmra.mrb[0].mxu0 %v101
  %v268 = vpop.f32.mrb[0].mxu0
  %v269 = vadd.f32 %v88, %v268
  %v270 = vpop.f32.mrb[0].mxu0
  %271 = vmatprep.mubr.f32.mxu0 0.0
  %272 = vmatmul.mubr.f32.gmra.mrb[0].mxu0 %v104
  %v273 = vpop.f32.mrb[0].mxu0
  %v274 = vadd.f32 %v88, %v273
  %v275 = vpop.f32.mrb[0].mxu0
  %276 = vmatprep.mubr.f32.mxu0 0.0
  %277 = vmatmul.mubr.f32.gmra.mrb[0].mxu0 %v107
  %v278 = vpop.f32.mrb[0].mxu0
  %v279 = vadd.f32 %v88, %v278
  %v280 = vpop.f32.mrb[0].mxu0
  %281 = vmatprep.mubr.f32.mxu0 0.0
  %282 = vmatmul.mubr.f32.gmra.mrb[0].mxu0 %v110
  %v283 = vpop.f32.mrb[0].mxu0
  %v284 = vadd.f32 %v88, %v283
  %v285 = vpop.f32.mrb[0].mxu0
  %286 = vmatprep.mubr.f32.mxu0 0.0
  %287 = vmatmul.mubr.f32.gmra.mrb[0].mxu0 %v113
  %v288 = vpop.f32.mrb[0].mxu0
  %v289 = vadd.f32 %v88, %v288
  %v290 = vpop.f32.mrb[0].mxu0
  %291 = vmatprep.mubr.f32.mxu0 0.0
  %292 = vmatmul.mubr.f32.gmra.mrb[0].mxu0 %v116
  %v293 = vpop.f32.mrb[0].mxu0
  %v294 = vadd.f32 %v88, %v293
  %v295 = vpop.f32.mrb[0].mxu0
  %296 = vmatprep.mubr.f32.mxu0 0.0
  %297 = vmatmul.mubr.f32.gmra.mrb[0].mxu0 %v119
  %v298 = vpop.f32.mrb[0].mxu0
  %v299 = vadd.f32 %v88, %v298
  %v300 = vpop.f32.mrb[0].mxu0
  %301 = vmatprep.mubr.f32.mxu0 0.0
  %302 = vmatmul.mubr.f32.gmra.mrb[0].mxu0 %v122
  %v303 = vpop.f32.mrb[0].mxu0
  %v304 = vadd.f32 %v88, %v303
  %v305 = vpop.f32.mrb[0].mxu0
  %306 = vmatprep.mubr.f32.mxu0 0.0
  %307 = vmatmul.mubr.f32.gmra.mrb[0].mxu0 %v125
  %v308 = vpop.f32.mrb[0].mxu0
  %v309 = vadd.f32 %v88, %v308
  %v310 = vpop.f32.mrb[0].mxu0
  %311 = vmatprep.mubr.f32.mxu0 0.0
  %312 = vmatmul.mubr.f32.gmra.mrb[0].mxu0 %v128
  %v313 = vpop.f32.mrb[0].mxu0
  %v314 = vadd.f32 %v88, %v313
  %v315 = vpop.f32.mrb[0].mxu0
  %316 = vmatprep.mubr.f32.mxu0 0.0
  %317 = vmatmul.mubr.f32.gmra.mrb[0].mxu0 %v131
  %v318 = vpop.f32.mrb[0].mxu0
  %v319 = vadd.f32 %v88, %v318
  %v320 = vpop.f32.mrb[0].mxu0
  %321 = vmatprep.mubr.f32.mxu0 0.0
  %322 = vmatmul.mubr.f32.gmra.mrb[0].mxu0 %v134
  %v323 = vpop.f32.mrb[0].mxu0
  %v324 = vadd.f32 %v88, %v323
  %v325 = vpop.f32.mrb[0].mxu0
  %326 = vmatprep.mubr.f32.mxu0 0.0
  %327 = vmatmul.mubr.f32.gmra.mrb[0].mxu0 %v137
  %v328 = vpop.f32.mrb[0].mxu0
  %v329 = vadd.f32 %v88, %v328
  %v330 = vpop.f32.mrb[0].mxu0
  %331 = vmatprep.mubr.f32.mxu0 0.0
  %332 = vmatmul.mubr.f32.gmra.mrb[0].mxu0 %v140
  %v333 = vpop.f32.mrb[0].mxu0
  %v334 = vadd.f32 %v88, %v333
  %v335 = vpop.f32.mrb[0].mxu0
  %336 = vmatprep.mubr.f32.mxu0 0.0
  %337 = vmatmul.mubr.f32.gmra.mrb[0].mxu0 %v143
  %v338 = vpop.f32.mrb[0].mxu0
  %v339 = vadd.f32 %v88, %v338
  %v340 = vpop.f32.mrb[0].mxu0
  %341 = vmatprep.mubr.f32.mxu0 0.0
  %342 = vmatmul.mubr.f32.gmra.mrb[0].mxu0 %v146
  %v343 = vpop.f32.mrb[0].mxu0
  %v344 = vadd.f32 %v88, %v343
  %v345 = vpop.f32.mrb[0].mxu0
  %346 = vmatprep.mubr.f32.mxu0 0.0
  %347 = vmatmul.mubr.f32.gmra.mrb[0].mxu0 %v149
  %v348 = vpop.f32.mrb[0].mxu0
  %v349 = vadd.f32 %v88, %v348
  %v350 = vpop.f32.mrb[0].mxu0
  %351 = vmatprep.mubr.f32.mxu0 0.0
  %352 = vmatmul.mubr.f32.gmra.mrb[0].mxu0 %v152
  %v353 = vpop.f32.mrb[0].mxu0
  %v354 = vadd.f32 %v88, %v353
  %v355 = vpop.f32.mrb[0].mxu0
  %356 = vmatprep.mubr.f32.mxu0 0.0
  %357 = vmatmul.mubr.f32.gmra.mrb[0].mxu0 %v155
  %v358 = vpop.f32.mrb[0].mxu0
  %v359 = vadd.f32 %v88, %v358
  %v360 = vpop.f32.mrb[0].mxu0
  %361 = vmatprep.mubr.f32.mxu0 0.0
  %362 = vmatmul.mubr.f32.gmra.mrb[0].mxu0 %v158
  %v363 = vpop.f32.mrb[0].mxu0
  %v364 = vadd.f32 %v88, %v363
  %v365 = vpop.f32.mrb[0].mxu0
  %366 = vmatprep.mubr.f32.mxu0 0.0
  %367 = vmatmul.mubr.f32.gmra.mrb[0].mxu0 %v161
  %v368 = vpop.f32.mrb[0].mxu0
  %v369 = vadd.f32 %v88, %v368
  %v370 = vpop.f32.mrb[0].mxu0
  %371 = vmatprep.mubr.f32.mxu0 0.0
  %372 = vmatmul.mubr.f32.gmra.mrb[0].mxu0 %v164
  %v373 = vpop.f32.mrb[0].mxu0
  %v374 = vadd.f32 %v88, %v373
  %v375 = vpop.f32.mrb[0].mxu0
  %376 = vmatprep.mubr.f32.mxu0 0.0
  %377 = vmatmul.mubr.f32.gmra.mrb[0].mxu0 %v167
  %v378 = vpop.f32.mrb[0].mxu0
  %v379 = vadd.f32 %v88, %v378
  %v380 = vpop.f32.mrb[0].mxu0
  %381 = vmatprep.mubr.f32.mxu0 0.0
  %382 = vmatmul.mubr.f32.gmra.mrb[0].mxu0 %v170
  %v383 = vpop.f32.mrb[0].mxu0
  %v384 = vadd.f32 %v88, %v383
  %v385 = vpop.f32.mrb[0].mxu0
  %386 = vmatprep.mubr.f32.mxu0 0.0
  %387 = vmatmul.mubr.f32.gmra.mrb[0].mxu0 %v173
  %v388 = vpop.f32.mrb[0].mxu0
  %v389 = vadd.f32 %v88, %v388
  %v390 = vpop.f32.mrb[0].mxu0
  %391 = vmatprep.mubr.f32.mxu0 0.0
  %392 = vmatmul.mubr.f32.gmra.mrb[0].mxu0 %v176
  %v393 = vpop.f32.mrb[0].mxu0
  %v394 = vadd.f32 %v88, %v393
  %v395 = vpop.f32.mrb[0].mxu0
  %396 = vmatprep.mubr.f32.mxu0 0.0
  %397 = vmatmul.mubr.f32.gmra.mrb[0].mxu0 %v179
  %v398 = vpop.f32.mrb[0].mxu0
  %v399 = vadd.f32 %v88, %v398
  %v400 = vpop.f32.mrb[0].mxu0
  %401 = vmatprep.mubr.f32.mxu0 0.0
  %402 = vmatmul.mubr.f32.gmra.mrb[0].mxu0 %v182
  %v403 = vpop.f32.mrb[0].mxu0
  %v404 = vadd.f32 %v88, %v403
  %v405 = vpop.f32.mrb[0].mxu0
  %406 = vmatprep.mubr.f32.mxu0 0.0
  %407 = vmatmul.mubr.f32.gmra.mrb[0].mxu0 %v185
  %v408 = vpop.f32.mrb[0].mxu0
  %v409 = vadd.f32 %v88, %v408
  %v410 = vpop.f32.mrb[0].mxu0
  %411 = vdwg.mxu0
  %vm412 = vcmask 195584
  %413 = vst.msk [vmem:[#allocation2] sm:$0xff] %vm412, %v254
  %414 = vst.msk [vmem:[#allocation2 + $0x8] sm:$0xff] %vm412, %v259
  %415 = vst.msk [vmem:[#allocation2 + $0x10] sm:$0xff] %vm412, %v264
  %416 = vst.msk [vmem:[#allocation2 + $0x18] sm:$0xff] %vm412, %v269
  %417 = vst.msk [vmem:[#allocation2 + $0x20] sm:$0xff] %vm412, %v274
  %418 = vst.msk [vmem:[#allocation2 + $0x28] sm:$0xff] %vm412, %v279
  %419 = vst.msk [vmem:[#allocation2 + $0x30] sm:$0xff] %vm412, %v284
  %420 = vst.msk [vmem:[#allocation2 + $0x38] sm:$0xff] %vm412, %v289
  %421 = vst.msk [vmem:[#allocation2 + $0x40] sm:$0xff] %vm412, %v294
  %422 = vst.msk [vmem:[#allocation2 + $0x48] sm:$0xff] %vm412, %v299
  %423 = vst.msk [vmem:[#allocation2 + $0x50] sm:$0xff] %vm412, %v304
  %424 = vst.msk [vmem:[#allocation2 + $0x58] sm:$0xff] %vm412, %v309
  %425 = vst.msk [vmem:[#allocation2 + $0x60] sm:$0xff] %vm412, %v314
  %426 = vst.msk [vmem:[#allocation2 + $0x68] sm:$0xff] %vm412, %v319
  %427 = vst.msk [vmem:[#allocation2 + $0x70] sm:$0xff] %vm412, %v324
  %428 = vst.msk [vmem:[#allocation2 + $0x78] sm:$0xff] %vm412, %v329
  %429 = vst.msk [vmem:[#allocation2 + $0x80] sm:$0xff] %vm412, %v334
  %430 = vst.msk [vmem:[#allocation2 + $0x88] sm:$0xff] %vm412, %v339
  %431 = vst.msk [vmem:[#allocation2 + $0x90] sm:$0xff] %vm412, %v344
  %432 = vst.msk [vmem:[#allocation2 + $0x98] sm:$0xff] %vm412, %v349
  %433 = vst.msk [vmem:[#allocation2 + $0xa0] sm:$0xff] %vm412, %v354
  %434 = vst.msk [vmem:[#allocation2 + $0xa8] sm:$0xff] %vm412, %v359
  %435 = vst.msk [vmem:[#allocation2 + $0xb0] sm:$0xff] %vm412, %v364
  %436 = vst.msk [vmem:[#allocation2 + $0xb8] sm:$0xff] %vm412, %v369
  %437 = vst.msk [vmem:[#allocation2 + $0xc0] sm:$0xff] %vm412, %v374
  %438 = vst.msk [vmem:[#allocation2 + $0xc8] sm:$0xff] %vm412, %v379
  %439 = vst.msk [vmem:[#allocation2 + $0xd0] sm:$0xff] %vm412, %v384
  %440 = vst.msk [vmem:[#allocation2 + $0xd8] sm:$0xff] %vm412, %v389
  %441 = vst.msk [vmem:[#allocation2 + $0xe0] sm:$0xff] %vm412, %v394
  %442 = vst.msk [vmem:[#allocation2 + $0xe8] sm:$0xff] %vm412, %v399
  %443 = vst.msk [vmem:[#allocation2 + $0xf0] sm:$0xff] %vm412, %v404
  %444 = vst.msk [vmem:[#allocation2 + $0xf8] sm:$0xff] %vm412, %v409
  %v445 = vld [vmem:[%s5] sm:$0xff]
  %v446 = vld [vmem:[%s5 + $0x8] sm:$0x3]
  %v447 = vld [vmem:[%s4] sm:$0x1]
  %v448 = vld [vmem:[#allocation2] sm:$0xff]
  %v449 = vld [vmem:[#allocation2 + $0x10] sm:$0xff]
  %v450 = vld [vmem:[#allocation2 + $0x20] sm:$0xff]
  %v451 = vld [vmem:[#allocation2 + $0x30] sm:$0xff]
  %v452 = vld [vmem:[#allocation2 + $0x40] sm:$0xff]
  %v453 = vld [vmem:[#allocation2 + $0x50] sm:$0xff]
  %v454 = vld [vmem:[#allocation2 + $0x60] sm:$0xff]
  %v455 = vld [vmem:[#allocation2 + $0x70] sm:$0xff]
  %v456 = vld [vmem:[%s3] sm:$0xff]
  %v457 = vld [vmem:[%s3 + $0x8] sm:$0xff]
  %v458 = vld [vmem:[%s3 + $0x10] sm:$0xff]
  %v460 = vsel %vm412, %v448, 0
  %v463 = vsel %vm412, %v449, 0
  %v466 = vsel %vm412, %v450, 0
  %v469 = vsel %vm412, %v451, 0
  %v472 = vsel %vm412, %v452, 0
  %v475 = vsel %vm412, %v453, 0
  %v478 = vsel %vm412, %v454, 0
  %v481 = vsel %vm412, %v455, 0
  %483 = vmatprep.subr.mxu0 0.0
  %484 = vmatpush1.msra.mxu0 %v456
  %485 = vmatprep.subr.mxu0 0.0
  %486 = vmatpush1.msra.mxu0 %v457
  %487 = vmatprep.subr.mxu0 0.0
  %488 = vmatpush1.msra.mxu0 %v458
  %489 = vmatprep.subr.mxu0 0.0
  %490 = vmatpush1.msra.mxu0 0.0
  %491 = vmatprep.subr.mxu0 0.0
  %492 = vmatpush1.msra.mxu0 0.0
  %493 = vmatprep.subr.mxu0 0.0
  %494 = vmatpush1.msra.mxu0 0.0
  %495 = vmatprep.subr.mxu0 0.0
  %496 = vmatpush1.msra.mxu0 0.0
  %497 = vmatprep.subr.mxu0 0.0
  %498 = vmatpush1.msra.mxu0 0.0
  %499 = vmatprep.subr.mxu0 0.0
  %500 = vmatpush1.msra.mxu0 0.0
  %501 = vmatprep.subr.mxu0 0.0
  %502 = vmatpush1.msra.mxu0 0.0
  %503 = vmatprep.subr.mxu0 0.0
  %504 = vmatpush1.msra.mxu0 0.0
  %505 = vmatprep.subr.mxu0 0.0
  %506 = vmatpush1.msra.mxu0 0.0
  %507 = vmatprep.subr.mxu0 0.0
  %508 = vmatpush1.msra.mxu0 0.0
  %509 = vmatprep.subr.mxu0 0.0
  %510 = vmatpush1.msra.mxu0 0.0
  %511 = vmatprep.subr.mxu0 0.0
  %512 = vmatpush1.msra.mxu0 0.0
  %513 = vmatprep.subr.mxu0 0.0
  %514 = vmatpush1.msra.mxu0 0.0
  %515 = vmatprep.subr.mxu0 0.0
  %516 = vmatpush1.msra.mxu0 0.0
  %517 = vmatprep.subr.mxu0 0.0
  %518 = vmatpush1.msra.mxu0 0.0
  %519 = vmatprep.subr.mxu0 0.0
  %520 = vmatpush1.msra.mxu0 0.0
  %521 = vmatprep.subr.mxu0 0.0
  %522 = vmatpush1.msra.mxu0 0.0
  %523 = vmatprep.subr.mxu0 0.0
  %524 = vmatpush1.msra.mxu0 0.0
  %525 = vmatprep.subr.mxu0 0.0
  %526 = vmatpush1.msra.mxu0 0.0
  %527 = vmatprep.subr.mxu0 0.0
  %528 = vmatpush1.msra.mxu0 0.0
  %529 = vmatprep.subr.mxu0 0.0
  %530 = vmatpush1.msra.mxu0 0.0
  %531 = vmatprep.subr.mxu0 0.0
  %532 = vmatpush1.msra.mxu0 0.0
  %533 = vmatprep.subr.mxu0 0.0
  %534 = vmatpush1.msra.mxu0 0.0
  %535 = vmatprep.subr.mxu0 0.0
  %536 = vmatpush1.msra.mxu0 0.0
  %537 = vmatprep.subr.mxu0 0.0
  %538 = vmatpush1.msra.mxu0 0.0
  %539 = vmatprep.subr.mxu0 0.0
  %540 = vmatpush1.msra.mxu0 0.0
  %541 = vmatprep.subr.mxu0 0.0
  %542 = vmatpush1.msra.mxu0 0.0
  %543 = vmatprep.subr.mxu0 0.0
  %544 = vmatpush1.msra.mxu0 0.0
  %545 = vmatprep.subr.mxu0 0.0
  %546 = vmatpush1.msra.mxu0 0.0
  %547 = vmatprep.mubr.f32.mxu0 0.0
  %548 = vmatmul.mubr.f32.gmra.mrb[0].mxu0 %v460
  %v549 = vpop.f32.mrb[0].mxu0
  %v550 = vadd.f32 0.0, %v549
  %v551 = vpop.f32.mrb[0].mxu0
  %552 = vmatprep.mubr.f32.mxu0 0.0
  %553 = vmatmul.mubr.f32.gmra.mrb[0].mxu0 %v463
  %v554 = vpop.f32.mrb[0].mxu0
  %v555 = vadd.f32 0.0, %v554
  %v556 = vpop.f32.mrb[0].mxu0
  %557 = vmatprep.mubr.f32.mxu0 0.0
  %558 = vmatmul.mubr.f32.gmra.mrb[0].mxu0 %v466
  %v559 = vpop.f32.mrb[0].mxu0
  %v560 = vadd.f32 0.0, %v559
  %v561 = vpop.f32.mrb[0].mxu0
  %562 = vmatprep.mubr.f32.mxu0 0.0
  %563 = vmatmul.mubr.f32.gmra.mrb[0].mxu0 %v469
  %v564 = vpop.f32.mrb[0].mxu0
  %v565 = vadd.f32 0.0, %v564
  %v566 = vpop.f32.mrb[0].mxu0
  %567 = vmatprep.mubr.f32.mxu0 0.0
  %568 = vmatmul.mubr.f32.gmra.mrb[0].mxu0 %v472
  %v569 = vpop.f32.mrb[0].mxu0
  %v570 = vadd.f32 0.0, %v569
  %v571 = vpop.f32.mrb[0].mxu0
  %572 = vmatprep.mubr.f32.mxu0 0.0
  %573 = vmatmul.mubr.f32.gmra.mrb[0].mxu0 %v475
  %v574 = vpop.f32.mrb[0].mxu0
  %v575 = vadd.f32 0.0, %v574
  %v576 = vpop.f32.mrb[0].mxu0
  %577 = vmatprep.mubr.f32.mxu0 0.0
  %578 = vmatmul.mubr.f32.gmra.mrb[0].mxu0 %v478
  %v579 = vpop.f32.mrb[0].mxu0
  %v580 = vadd.f32 0.0, %v579
  %v581 = vpop.f32.mrb[0].mxu0
  %582 = vmatprep.mubr.f32.mxu0 0.0
  %583 = vmatmul.mubr.f32.gmra.mrb[0].mxu0 %v481
  %v584 = vpop.f32.mrb[0].mxu0
  %v585 = vadd.f32 0.0, %v584
  %v586 = vpop.f32.mrb[0].mxu0
  %587 = vdwg.mxu0
  %v589 = vlaneseq
  %v590 = vshrl.u32 %v589, 7
  %v591 = vsub.s32 0, %v590
  %v592 = vrot.slane %v447, %v591
  %v594 = vadd.f32 %v592, %v550
  %v595 = vadd.f32 %v592, %v555
  %v596 = vadd.f32 %v592, %v560
  %v597 = vadd.f32 %v592, %v565
  %v598 = vadd.f32 %v592, %v570
  %v599 = vadd.f32 %v592, %v575
  %v600 = vadd.f32 %v592, %v580
  %v601 = vadd.f32 %v592, %v585
  %v603 = vsel %vm412, %v594, 0
  %v606 = vsel %vm412, %v595, 0
  %v609 = vsel %vm412, %v596, 0
  %v612 = vsel %vm412, %v597, 0
  %v615 = vsel %vm412, %v598, 0
  %v618 = vsel %vm412, %v599, 0
  %v621 = vsel %vm412, %v600, 0
  %v624 = vsel %vm412, %v601, 0
  %v627 = vsel %vm412, %v445, 0
  %v630 = vsel %vm412, %v446, 0
  %632 = vmatprep.subr.mxu0 0.0
  %633 = vmatpush1.xpose.msra.mxu0 %v627
  %634 = vmatprep.subr.mxu0 0.0
  %635 = vmatpush1.xpose.msra.mxu0 %v630
  %636 = vmatprep.subr.mxu0 0.0
  %637 = vmatpush1.xpose.msra.mxu0 0.0
  %638 = vmatprep.subr.mxu0 0.0
  %639 = vmatpush1.xpose.msra.mxu0 0.0
  %640 = vmatprep.subr.mxu0 0.0
  %641 = vmatpush1.xpose.msra.mxu0 0.0
  %642 = vmatprep.subr.mxu0 0.0
  %643 = vmatpush1.xpose.msra.mxu0 0.0
  %644 = vmatprep.subr.mxu0 0.0
  %645 = vmatpush1.xpose.msra.mxu0 0.0
  %646 = vmatprep.subr.mxu0 0.0
  %647 = vmatpush1.xpose.msra.mxu0 0.0
  %648 = vmatprep.subr.mxu0 0.0
  %649 = vmatpush1.xpose.msra.mxu0 0.0
  %650 = vmatprep.subr.mxu0 0.0
  %651 = vmatpush1.xpose.msra.mxu0 0.0
  %652 = vmatprep.subr.mxu0 0.0
  %653 = vmatpush1.xpose.msra.mxu0 0.0
  %654 = vmatprep.subr.mxu0 0.0
  %655 = vmatpush1.xpose.msra.mxu0 0.0
  %656 = vmatprep.subr.mxu0 0.0
  %657 = vmatpush1.xpose.msra.mxu0 0.0
  %658 = vmatprep.subr.mxu0 0.0
  %659 = vmatpush1.xpose.msra.mxu0 0.0
  %660 = vmatprep.subr.mxu0 0.0
  %661 = vmatpush1.xpose.msra.mxu0 0.0
  %662 = vmatprep.subr.mxu0 0.0
  %663 = vmatpush1.xpose.msra.mxu0 0.0
  %664 = vmatprep.subr.mxu0 0.0
  %665 = vmatpush1.xpose.msra.mxu0 0.0
  %666 = vmatprep.subr.mxu0 0.0
  %667 = vmatpush1.xpose.msra.mxu0 0.0
  %668 = vmatprep.subr.mxu0 0.0
  %669 = vmatpush1.xpose.msra.mxu0 0.0
  %670 = vmatprep.subr.mxu0 0.0
  %671 = vmatpush1.xpose.msra.mxu0 0.0
  %672 = vmatprep.subr.mxu0 0.0
  %673 = vmatpush1.xpose.msra.mxu0 0.0
  %674 = vmatprep.subr.mxu0 0.0
  %675 = vmatpush1.xpose.msra.mxu0 0.0
  %676 = vmatprep.subr.mxu0 0.0
  %677 = vmatpush1.xpose.msra.mxu0 0.0
  %678 = vmatprep.subr.mxu0 0.0
  %679 = vmatpush1.xpose.msra.mxu0 0.0
  %680 = vmatprep.subr.mxu0 0.0
  %681 = vmatpush1.xpose.msra.mxu0 0.0
  %682 = vmatprep.subr.mxu0 0.0
  %683 = vmatpush1.xpose.msra.mxu0 0.0
  %684 = vmatprep.subr.mxu0 0.0
  %685 = vmatpush1.xpose.msra.mxu0 0.0
  %686 = vmatprep.subr.mxu0 0.0
  %687 = vmatpush1.xpose.msra.mxu0 0.0
  %688 = vmatprep.subr.mxu0 0.0
  %689 = vmatpush1.xpose.msra.mxu0 0.0
  %690 = vmatprep.subr.mxu0 0.0
  %691 = vmatpush1.xpose.msra.mxu0 0.0
  %692 = vmatprep.subr.mxu0 0.0
  %693 = vmatpush1.xpose.msra.mxu0 0.0
  %694 = vmatprep.subr.mxu0 0.0
  %695 = vmatpush1.xpose.msra.mxu0 0.0
  %696 = vmatprep.mubr.f32.mxu0 0.0
  %697 = vmatmul.mubr.f32.gmra.mrb[0].mxu0 %v603
  %v698 = vpop.f32.mrb[0].mxu0
  %v699 = vadd.f32 0.0, %v698
  %v700 = vpop.f32.mrb[0].mxu0
  %701 = vmatprep.mubr.f32.mxu0 0.0
  %702 = vmatmul.mubr.f32.gmra.mrb[0].mxu0 %v606
  %v703 = vpop.f32.mrb[0].mxu0
  %v704 = vadd.f32 0.0, %v703
  %v705 = vpop.f32.mrb[0].mxu0
  %706 = vmatprep.mubr.f32.mxu0 0.0
  %707 = vmatmul.mubr.f32.gmra.mrb[0].mxu0 %v609
  %v708 = vpop.f32.mrb[0].mxu0
  %v709 = vadd.f32 0.0, %v708
  %v710 = vpop.f32.mrb[0].mxu0
  %711 = vmatprep.mubr.f32.mxu0 0.0
  %712 = vmatmul.mubr.f32.gmra.mrb[0].mxu0 %v612
  %v713 = vpop.f32.mrb[0].mxu0
  %v714 = vadd.f32 0.0, %v713
  %v715 = vpop.f32.mrb[0].mxu0
  %716 = vmatprep.mubr.f32.mxu0 0.0
  %717 = vmatmul.mubr.f32.gmra.mrb[0].mxu0 %v615
  %v718 = vpop.f32.mrb[0].mxu0
  %v719 = vadd.f32 0.0, %v718
  %v720 = vpop.f32.mrb[0].mxu0
  %721 = vmatprep.mubr.f32.mxu0 0.0
  %722 = vmatmul.mubr.f32.gmra.mrb[0].mxu0 %v618
  %v723 = vpop.f32.mrb[0].mxu0
  %v724 = vadd.f32 0.0, %v723
  %v725 = vpop.f32.mrb[0].mxu0
  %726 = vmatprep.mubr.f32.mxu0 0.0
  %727 = vmatmul.mubr.f32.gmra.mrb[0].mxu0 %v621
  %v728 = vpop.f32.mrb[0].mxu0
  %v729 = vadd.f32 0.0, %v728
  %v730 = vpop.f32.mrb[0].mxu0
  %731 = vmatprep.mubr.f32.mxu0 0.0
  %732 = vmatmul.mubr.f32.gmra.mrb[0].mxu0 %v624
  %v733 = vpop.f32.mrb[0].mxu0
  %v734 = vadd.f32 0.0, %v733
  %v735 = vpop.f32.mrb[0].mxu0
  %736 = vdwg.mxu0
  %vm737 = vcmask 80896
  %v738 = vsel %vm737, %v699, -inf
  %739 = vmax.xlane.f32.xlu0 %v738
  %v740 = vpop.xlane.xlu0 %739
  %v741 = vsel %vm737, %v704, -inf
  %742 = vmax.xlane.f32.xlu0 %v741
  %v743 = vpop.xlane.xlu0 %742
  %v744 = vsel %vm737, %v709, -inf
  %745 = vmax.xlane.f32.xlu0 %v744
  %v746 = vpop.xlane.xlu0 %745
  %v747 = vsel %vm737, %v714, -inf
  %748 = vmax.xlane.f32.xlu0 %v747
  %v749 = vpop.xlane.xlu0 %748
  %v750 = vsel %vm737, %v719, -inf
  %751 = vmax.xlane.f32.xlu0 %v750
  %v752 = vpop.xlane.xlu0 %751
  %v753 = vsel %vm737, %v724, -inf
  %754 = vmax.xlane.f32.xlu0 %v753
  %v755 = vpop.xlane.xlu0 %754
  %v756 = vsel %vm737, %v729, -inf
  %757 = vmax.xlane.f32.xlu0 %v756
  %v758 = vpop.xlane.xlu0 %757
  %v759 = vsel %vm737, %v734, -inf
  %760 = vmax.xlane.f32.xlu0 %v759
  %v761 = vpop.xlane.xlu0 %760
  %v762 = vsub.f32 %v699, %v740
  %v763 = vsub.f32 %v704, %v743
  %v764 = vsub.f32 %v709, %v746
  %v765 = vsub.f32 %v714, %v749
  %v766 = vsub.f32 %v719, %v752
  %v767 = vsub.f32 %v724, %v755
  %v768 = vsub.f32 %v729, %v758
  %v769 = vsub.f32 %v734, %v761
  %v770 = vmul.f32 %v762, 1.442695
  %v771 = vpow.pop %v770
  %v772 = vmul.f32 %v763, 1.442695
  %v773 = vpow.pop %v772
  %v774 = vmul.f32 %v764, 1.442695
  %v775 = vpow.pop %v774
  %v776 = vmul.f32 %v765, 1.442695
  %v777 = vpow.pop %v776
  %v778 = vmul.f32 %v766, 1.442695
  %v779 = vpow.pop %v778
  %v780 = vmul.f32 %v767, 1.442695
  %v781 = vpow.pop %v780
  %v782 = vmul.f32 %v768, 1.442695
  %v783 = vpow.pop %v782
  %v784 = vmul.f32 %v769, 1.442695
  %v785 = vpow.pop %v784
  %v786 = vsel %vm737, %v771, 0.0
  %787 = vadd.xlane.f32.xlu0 %v786
  %v788 = vpop.xlane.xlu0 %787
  %v789 = vsel %vm737, %v773, 0.0
  %790 = vadd.xlane.f32.xlu0 %v789
  %v791 = vpop.xlane.xlu0 %790
  %v792 = vsel %vm737, %v775, 0.0
  %793 = vadd.xlane.f32.xlu0 %v792
  %v794 = vpop.xlane.xlu0 %793
  %v795 = vsel %vm737, %v777, 0.0
  %796 = vadd.xlane.f32.xlu0 %v795
  %v797 = vpop.xlane.xlu0 %796
  %v798 = vsel %vm737, %v779, 0.0
  %799 = vadd.xlane.f32.xlu0 %v798
  %v800 = vpop.xlane.xlu0 %799
  %v801 = vsel %vm737, %v781, 0.0
  %802 = vadd.xlane.f32.xlu0 %v801
  %v803 = vpop.xlane.xlu0 %802
  %v804 = vsel %vm737, %v783, 0.0
  %805 = vadd.xlane.f32.xlu0 %v804
  %v806 = vpop.xlane.xlu0 %805
  %v807 = vsel %vm737, %v785, 0.0
  %808 = vadd.xlane.f32.xlu0 %v807
  %v809 = vpop.xlane.xlu0 %808
  %v810 = vrcp.pop %v788
  %v811 = vrcp.pop %v791
  %v812 = vrcp.pop %v794
  %v813 = vrcp.pop %v797
  %v814 = vrcp.pop %v800
  %v815 = vrcp.pop %v803
  %v816 = vrcp.pop %v806
  %v817 = vrcp.pop %v809
  %v818 = vmul.f32 %v771, %v810
  %v819 = vmul.f32 %v773, %v811
  %v820 = vmul.f32 %v775, %v812
  %v821 = vmul.f32 %v777, %v813
  %v822 = vmul.f32 %v779, %v814
  %v823 = vmul.f32 %v781, %v815
  %v824 = vmul.f32 %v783, %v816
  %v825 = vmul.f32 %v785, %v817
  %v827 = vsel %vm737, %v818, 0
  %v830 = vsel %vm737, %v819, 0
  %v833 = vsel %vm737, %v820, 0
  %v836 = vsel %vm737, %v821, 0
  %v839 = vsel %vm737, %v822, 0
  %v842 = vsel %vm737, %v823, 0
  %v845 = vsel %vm737, %v824, 0
  %v848 = vsel %vm737, %v825, 0
  %vm850 = vcmask 1041408
  %v851 = vsel %vm850, %v446, 0
  %853 = vmatprep.subr.mxu0 0.0
  %854 = vmatpush1.msra.mxu0 %v445
  %855 = vmatprep.subr.mxu0 0.0
  %856 = vmatpush1.msra.mxu0 %v851
  %857 = vmatprep.subr.mxu0 0.0
  %858 = vmatpush1.msra.mxu0 0.0
  %859 = vmatprep.subr.mxu0 0.0
  %860 = vmatpush1.msra.mxu0 0.0
  %861 = vmatprep.subr.mxu0 0.0
  %862 = vmatpush1.msra.mxu0 0.0
  %863 = vmatprep.subr.mxu0 0.0
  %864 = vmatpush1.msra.mxu0 0.0
  %865 = vmatprep.subr.mxu0 0.0
  %866 = vmatpush1.msra.mxu0 0.0
  %867 = vmatprep.subr.mxu0 0.0
  %868 = vmatpush1.msra.mxu0 0.0
  %869 = vmatprep.subr.mxu0 0.0
  %870 = vmatpush1.msra.mxu0 0.0
  %871 = vmatprep.subr.mxu0 0.0
  %872 = vmatpush1.msra.mxu0 0.0
  %873 = vmatprep.subr.mxu0 0.0
  %874 = vmatpush1.msra.mxu0 0.0
  %875 = vmatprep.subr.mxu0 0.0
  %876 = vmatpush1.msra.mxu0 0.0
  %877 = vmatprep.subr.mxu0 0.0
  %878 = vmatpush1.msra.mxu0 0.0
  %879 = vmatprep.subr.mxu0 0.0
  %880 = vmatpush1.msra.mxu0 0.0
  %881 = vmatprep.subr.mxu0 0.0
  %882 = vmatpush1.msra.mxu0 0.0
  %883 = vmatprep.subr.mxu0 0.0
  %884 = vmatpush1.msra.mxu0 0.0
  %885 = vmatprep.subr.mxu0 0.0
  %886 = vmatpush1.msra.mxu0 0.0
  %887 = vmatprep.subr.mxu0 0.0
  %888 = vmatpush1.msra.mxu0 0.0
  %889 = vmatprep.subr.mxu0 0.0
  %890 = vmatpush1.msra.mxu0 0.0
  %891 = vmatprep.subr.mxu0 0.0
  %892 = vmatpush1.msra.mxu0 0.0
  %893 = vmatprep.subr.mxu0 0.0
  %894 = vmatpush1.msra.mxu0 0.0
  %895 = vmatprep.subr.mxu0 0.0
  %896 = vmatpush1.msra.mxu0 0.0
  %897 = vmatprep.subr.mxu0 0.0
  %898 = vmatpush1.msra.mxu0 0.0
  %899 = vmatprep.subr.mxu0 0.0
  %900 = vmatpush1.msra.mxu0 0.0
  %901 = vmatprep.subr.mxu0 0.0
  %902 = vmatpush1.msra.mxu0 0.0
  %903 = vmatprep.subr.mxu0 0.0
  %904 = vmatpush1.msra.mxu0 0.0
  %905 = vmatprep.subr.mxu0 0.0
  %906 = vmatpush1.msra.mxu0 0.0
  %907 = vmatprep.subr.mxu0 0.0
  %908 = vmatpush1.msra.mxu0 0.0
  %909 = vmatprep.subr.mxu0 0.0
  %910 = vmatpush1.msra.mxu0 0.0
  %911 = vmatprep.subr.mxu0 0.0
  %912 = vmatpush1.msra.mxu0 0.0
  %913 = vmatprep.subr.mxu0 0.0
  %914 = vmatpush1.msra.mxu0 0.0
  %915 = vmatprep.subr.mxu0 0.0
  %916 = vmatpush1.msra.mxu0 0.0
  %917 = vmatprep.mubr.f32.mxu0 0.0
  %918 = vmatmul.mubr.f32.gmra.mrb[0].mxu0 %v827
  %v919 = vpop.f32.mrb[0].mxu0
  %v920 = vadd.f32 0.0, %v919
  %v921 = vpop.f32.mrb[0].mxu0
  %922 = vmatprep.mubr.f32.mxu0 0.0
  %923 = vmatmul.mubr.f32.gmra.mrb[0].mxu0 %v830
  %v924 = vpop.f32.mrb[0].mxu0
  %v925 = vadd.f32 0.0, %v924
  %v926 = vpop.f32.mrb[0].mxu0
  %927 = vmatprep.mubr.f32.mxu0 0.0
  %928 = vmatmul.mubr.f32.gmra.mrb[0].mxu0 %v833
  %v929 = vpop.f32.mrb[0].mxu0
  %v930 = vadd.f32 0.0, %v929
  %v931 = vpop.f32.mrb[0].mxu0
  %932 = vmatprep.mubr.f32.mxu0 0.0
  %933 = vmatmul.mubr.f32.gmra.mrb[0].mxu0 %v836
  %v934 = vpop.f32.mrb[0].mxu0
  %v935 = vadd.f32 0.0, %v934
  %v936 = vpop.f32.mrb[0].mxu0
  %937 = vmatprep.mubr.f32.mxu0 0.0
  %938 = vmatmul.mubr.f32.gmra.mrb[0].mxu0 %v839
  %v939 = vpop.f32.mrb[0].mxu0
  %v940 = vadd.f32 0.0, %v939
  %v941 = vpop.f32.mrb[0].mxu0
  %942 = vmatprep.mubr.f32.mxu0 0.0
  %943 = vmatmul.mubr.f32.gmra.mrb[0].mxu0 %v842
  %v944 = vpop.f32.mrb[0].mxu0
  %v945 = vadd.f32 0.0, %v944
  %v946 = vpop.f32.mrb[0].mxu0
  %947 = vmatprep.mubr.f32.mxu0 0.0
  %948 = vmatmul.mubr.f32.gmra.mrb[0].mxu0 %v845
  %v949 = vpop.f32.mrb[0].mxu0
  %v950 = vadd.f32 0.0, %v949
  %v951 = vpop.f32.mrb[0].mxu0
  %952 = vmatprep.mubr.f32.mxu0 0.0
  %953 = vmatmul.mubr.f32.gmra.mrb[0].mxu0 %v848
  %v954 = vpop.f32.mrb[0].mxu0
  %v955 = vadd.f32 0.0, %v954
  %v956 = vpop.f32.mrb[0].mxu0
  %957 = vdwg.mxu0
  %958 = vst.msk [vmem:[#allocation3] sm:$0xff] %vm412, %v920
  %959 = vst.msk [vmem:[#allocation3 + $0x8] sm:$0xff] %vm412, %v925
  %960 = vst.msk [vmem:[#allocation3 + $0x10] sm:$0xff] %vm412, %v930
  %961 = vst.msk [vmem:[#allocation3 + $0x18] sm:$0xff] %vm412, %v935
  %962 = vst.msk [vmem:[#allocation3 + $0x20] sm:$0xff] %vm412, %v940
  %963 = vst.msk [vmem:[#allocation3 + $0x28] sm:$0xff] %vm412, %v945
  %964 = vst.msk [vmem:[#allocation3 + $0x30] sm:$0xff] %vm412, %v950
  %965 = vst.msk [vmem:[#allocation3 + $0x38] sm:$0xff] %vm412, %v955
  %s966 = scalar_lea.vmem [#allocation2], 128
  %v967 = vld [vmem:[%s966] sm:$0xff]
  %v968 = vld [vmem:[%s966 + $0x10] sm:$0xff]
  %v969 = vld [vmem:[%s966 + $0x20] sm:$0xff]
  %v970 = vld [vmem:[%s966 + $0x30] sm:$0xff]
  %v971 = vld [vmem:[%s966 + $0x40] sm:$0xff]
  %v972 = vld [vmem:[%s966 + $0x50] sm:$0xff]
  %v973 = vld [vmem:[%s966 + $0x60] sm:$0xff]
  %v974 = vld [vmem:[%s966 + $0x70] sm:$0xff]
  %v975 = vld [vmem:[%s3] sm:$0xff]
  %v976 = vld [vmem:[%s3 + $0x8] sm:$0xff]
  %v977 = vld [vmem:[%s3 + $0x10] sm:$0xff]
  %v979 = vsel %vm412, %v967, 0
  %v982 = vsel %vm412, %v968, 0
  %v985 = vsel %vm412, %v969, 0
  %v988 = vsel %vm412, %v970, 0
  %v991 = vsel %vm412, %v971, 0
  %v994 = vsel %vm412, %v972, 0
  %v997 = vsel %vm412, %v973, 0
  %v1000 = vsel %vm412, %v974, 0
  %1002 = vmatprep.subr.mxu0 0.0
  %1003 = vmatpush1.msra.mxu0 %v975
  %1004 = vmatprep.subr.mxu0 0.0
  %1005 = vmatpush1.msra.mxu0 %v976
  %1006 = vmatprep.subr.mxu0 0.0
  %1007 = vmatpush1.msra.mxu0 %v977
  %1008 = vmatprep.subr.mxu0 0.0
  %1009 = vmatpush1.msra.mxu0 0.0
  %1010 = vmatprep.subr.mxu0 0.0
  %1011 = vmatpush1.msra.mxu0 0.0
  %1012 = vmatprep.subr.mxu0 0.0
  %1013 = vmatpush1.msra.mxu0 0.0
  %1014 = vmatprep.subr.mxu0 0.0
  %1015 = vmatpush1.msra.mxu0 0.0
  %1016 = vmatprep.subr.mxu0 0.0
  %1017 = vmatpush1.msra.mxu0 0.0
  %1018 = vmatprep.subr.mxu0 0.0
  %1019 = vmatpush1.msra.mxu0 0.0
  %1020 = vmatprep.subr.mxu0 0.0
  %1021 = vmatpush1.msra.mxu0 0.0
  %1022 = vmatprep.subr.mxu0 0.0
  %1023 = vmatpush1.msra.mxu0 0.0
  %1024 = vmatprep.subr.mxu0 0.0
  %1025 = vmatpush1.msra.mxu0 0.0
  %1026 = vmatprep.subr.mxu0 0.0
  %1027 = vmatpush1.msra.mxu0 0.0
  %1028 = vmatprep.subr.mxu0 0.0
  %1029 = vmatpush1.msra.mxu0 0.0
  %1030 = vmatprep.subr.mxu0 0.0
  %1031 = vmatpush1.msra.mxu0 0.0
  %1032 = vmatprep.subr.mxu0 0.0
  %1033 = vmatpush1.msra.mxu0 0.0
  %1034 = vmatprep.subr.mxu0 0.0
  %1035 = vmatpush1.msra.mxu0 0.0
  %1036 = vmatprep.subr.mxu0 0.0
  %1037 = vmatpush1.msra.mxu0 0.0
  %1038 = vmatprep.subr.mxu0 0.0
  %1039 = vmatpush1.msra.mxu0 0.0
  %1040 = vmatprep.subr.mxu0 0.0
  %1041 = vmatpush1.msra.mxu0 0.0
  %1042 = vmatprep.subr.mxu0 0.0
  %1043 = vmatpush1.msra.mxu0 0.0
  %1044 = vmatprep.subr.mxu0 0.0
  %1045 = vmatpush1.msra.mxu0 0.0
  %1046 = vmatprep.subr.mxu0 0.0
  %1047 = vmatpush1.msra.mxu0 0.0
  %1048 = vmatprep.subr.mxu0 0.0
  %1049 = vmatpush1.msra.mxu0 0.0
  %1050 = vmatprep.subr.mxu0 0.0
  %1051 = vmatpush1.msra.mxu0 0.0
  %1052 = vmatprep.subr.mxu0 0.0
  %1053 = vmatpush1.msra.mxu0 0.0
  %1054 = vmatprep.subr.mxu0 0.0
  %1055 = vmatpush1.msra.mxu0 0.0
  %1056 = vmatprep.subr.mxu0 0.0
  %1057 = vmatpush1.msra.mxu0 0.0
  %1058 = vmatprep.subr.mxu0 0.0
  %1059 = vmatpush1.msra.mxu0 0.0
  %1060 = vmatprep.subr.mxu0 0.0
  %1061 = vmatpush1.msra.mxu0 0.0
  %1062 = vmatprep.subr.mxu0 0.0
  %1063 = vmatpush1.msra.mxu0 0.0
  %1064 = vmatprep.subr.mxu0 0.0
  %1065 = vmatpush1.msra.mxu0 0.0
  %1066 = vmatprep.mubr.f32.mxu0 0.0
  %1067 = vmatmul.mubr.f32.gmra.mrb[0].mxu0 %v979
  %v1068 = vpop.f32.mrb[0].mxu0
  %v1069 = vadd.f32 0.0, %v1068
  %v1070 = vpop.f32.mrb[0].mxu0
  %1071 = vmatprep.mubr.f32.mxu0 0.0
  %1072 = vmatmul.mubr.f32.gmra.mrb[0].mxu0 %v982
  %v1073 = vpop.f32.mrb[0].mxu0
  %v1074 = vadd.f32 0.0, %v1073
  %v1075 = vpop.f32.mrb[0].mxu0
  %1076 = vmatprep.mubr.f32.mxu0 0.0
  %1077 = vmatmul.mubr.f32.gmra.mrb[0].mxu0 %v985
  %v1078 = vpop.f32.mrb[0].mxu0
  %v1079 = vadd.f32 0.0, %v1078
  %v1080 = vpop.f32.mrb[0].mxu0
  %1081 = vmatprep.mubr.f32.mxu0 0.0
  %1082 = vmatmul.mubr.f32.gmra.mrb[0].mxu0 %v988
  %v1083 = vpop.f32.mrb[0].mxu0
  %v1084 = vadd.f32 0.0, %v1083
  %v1085 = vpop.f32.mrb[0].mxu0
  %1086 = vmatprep.mubr.f32.mxu0 0.0
  %1087 = vmatmul.mubr.f32.gmra.mrb[0].mxu0 %v991
  %v1088 = vpop.f32.mrb[0].mxu0
  %v1089 = vadd.f32 0.0, %v1088
  %v1090 = vpop.f32.mrb[0].mxu0
  %1091 = vmatprep.mubr.f32.mxu0 0.0
  %1092 = vmatmul.mubr.f32.gmra.mrb[0].mxu0 %v994
  %v1093 = vpop.f32.mrb[0].mxu0
  %v1094 = vadd.f32 0.0, %v1093
  %v1095 = vpop.f32.mrb[0].mxu0
  %1096 = vmatprep.mubr.f32.mxu0 0.0
  %1097 = vmatmul.mubr.f32.gmra.mrb[0].mxu0 %v997
  %v1098 = vpop.f32.mrb[0].mxu0
  %v1099 = vadd.f32 0.0, %v1098
  %v1100 = vpop.f32.mrb[0].mxu0
  %1101 = vmatprep.mubr.f32.mxu0 0.0
  %1102 = vmatmul.mubr.f32.gmra.mrb[0].mxu0 %v1000
  %v1103 = vpop.f32.mrb[0].mxu0
  %v1104 = vadd.f32 0.0, %v1103
  %v1105 = vpop.f32.mrb[0].mxu0
  %1106 = vdwg.mxu0
  %v1107 = vadd.f32 %v592, %v1069
  %v1108 = vadd.f32 %v592, %v1074
  %v1109 = vadd.f32 %v592, %v1079
  %v1110 = vadd.f32 %v592, %v1084
  %v1111 = vadd.f32 %v592, %v1089
  %v1112 = vadd.f32 %v592, %v1094
  %v1113 = vadd.f32 %v592, %v1099
  %v1114 = vadd.f32 %v592, %v1104
  %v1116 = vsel %vm412, %v1107, 0
  %v1119 = vsel %vm412, %v1108, 0
  %v1122 = vsel %vm412, %v1109, 0
  %v1125 = vsel %vm412, %v1110, 0
  %v1128 = vsel %vm412, %v1111, 0
  %v1131 = vsel %vm412, %v1112, 0
  %v1134 = vsel %vm412, %v1113, 0
  %v1137 = vsel %vm412, %v1114, 0
  %1139 = vmatprep.subr.mxu0 0.0
  %1140 = vmatpush1.xpose.msra.mxu0 %v627
  %1141 = vmatprep.subr.mxu0 0.0
  %1142 = vmatpush1.xpose.msra.mxu0 %v630
  %1143 = vmatprep.subr.mxu0 0.0
  %1144 = vmatpush1.xpose.msra.mxu0 0.0
  %1145 = vmatprep.subr.mxu0 0.0
  %1146 = vmatpush1.xpose.msra.mxu0 0.0
  %1147 = vmatprep.subr.mxu0 0.0
  %1148 = vmatpush1.xpose.msra.mxu0 0.0
  %1149 = vmatprep.subr.mxu0 0.0
  %1150 = vmatpush1.xpose.msra.mxu0 0.0
  %1151 = vmatprep.subr.mxu0 0.0
  %1152 = vmatpush1.xpose.msra.mxu0 0.0
  %1153 = vmatprep.subr.mxu0 0.0
  %1154 = vmatpush1.xpose.msra.mxu0 0.0
  %1155 = vmatprep.subr.mxu0 0.0
  %1156 = vmatpush1.xpose.msra.mxu0 0.0
  %1157 = vmatprep.subr.mxu0 0.0
  %1158 = vmatpush1.xpose.msra.mxu0 0.0
  %1159 = vmatprep.subr.mxu0 0.0
  %1160 = vmatpush1.xpose.msra.mxu0 0.0
  %1161 = vmatprep.subr.mxu0 0.0
  %1162 = vmatpush1.xpose.msra.mxu0 0.0
  %1163 = vmatprep.subr.mxu0 0.0
  %1164 = vmatpush1.xpose.msra.mxu0 0.0
  %1165 = vmatprep.subr.mxu0 0.0
  %1166 = vmatpush1.xpose.msra.mxu0 0.0
  %1167 = vmatprep.subr.mxu0 0.0
  %1168 = vmatpush1.xpose.msra.mxu0 0.0
  %1169 = vmatprep.subr.mxu0 0.0
  %1170 = vmatpush1.xpose.msra.mxu0 0.0
  %1171 = vmatprep.subr.mxu0 0.0
  %1172 = vmatpush1.xpose.msra.mxu0 0.0
  %1173 = vmatprep.subr.mxu0 0.0
  %1174 = vmatpush1.xpose.msra.mxu0 0.0
  %1175 = vmatprep.subr.mxu0 0.0
  %1176 = vmatpush1.xpose.msra.mxu0 0.0
  %1177 = vmatprep.subr.mxu0 0.0
  %1178 = vmatpush1.xpose.msra.mxu0 0.0
  %1179 = vmatprep.subr.mxu0 0.0
  %1180 = vmatpush1.xpose.msra.mxu0 0.0
  %1181 = vmatprep.subr.mxu0 0.0
  %1182 = vmatpush1.xpose.msra.mxu0 0.0
  %1183 = vmatprep.subr.mxu0 0.0
  %1184 = vmatpush1.xpose.msra.mxu0 0.0
  %1185 = vmatprep.subr.mxu0 0.0
  %1186 = vmatpush1.xpose.msra.mxu0 0.0
  %1187 = vmatprep.subr.mxu0 0.0
  %1188 = vmatpush1.xpose.msra.mxu0 0.0
  %1189 = vmatprep.subr.mxu0 0.0
  %1190 = vmatpush1.xpose.msra.mxu0 0.0
  %1191 = vmatprep.subr.mxu0 0.0
  %1192 = vmatpush1.xpose.msra.mxu0 0.0
  %1193 = vmatprep.subr.mxu0 0.0
  %1194 = vmatpush1.xpose.msra.mxu0 0.0
  %1195 = vmatprep.subr.mxu0 0.0
  %1196 = vmatpush1.xpose.msra.mxu0 0.0
  %1197 = vmatprep.subr.mxu0 0.0
  %1198 = vmatpush1.xpose.msra.mxu0 0.0
  %1199 = vmatprep.subr.mxu0 0.0
  %1200 = vmatpush1.xpose.msra.mxu0 0.0
  %1201 = vmatprep.subr.mxu0 0.0
  %1202 = vmatpush1.xpose.msra.mxu0 0.0
  %1203 = vmatprep.mubr.f32.mxu0 0.0
  %1204 = vmatmul.mubr.f32.gmra.mrb[0].mxu0 %v1116
  %v1205 = vpop.f32.mrb[0].mxu0
  %v1206 = vadd.f32 0.0, %v1205
  %v1207 = vpop.f32.mrb[0].mxu0
  %1208 = vmatprep.mubr.f32.mxu0 0.0
  %1209 = vmatmul.mubr.f32.gmra.mrb[0].mxu0 %v1119
  %v1210 = vpop.f32.mrb[0].mxu0
  %v1211 = vadd.f32 0.0, %v1210
  %v1212 = vpop.f32.mrb[0].mxu0
  %1213 = vmatprep.mubr.f32.mxu0 0.0
  %1214 = vmatmul.mubr.f32.gmra.mrb[0].mxu0 %v1122
  %v1215 = vpop.f32.mrb[0].mxu0
  %v1216 = vadd.f32 0.0, %v1215
  %v1217 = vpop.f32.mrb[0].mxu0
  %1218 = vmatprep.mubr.f32.mxu0 0.0
  %1219 = vmatmul.mubr.f32.gmra.mrb[0].mxu0 %v1125
  %v1220 = vpop.f32.mrb[0].mxu0
  %v1221 = vadd.f32 0.0, %v1220
  %v1222 = vpop.f32.mrb[0].mxu0
  %1223 = vmatprep.mubr.f32.mxu0 0.0
  %1224 = vmatmul.mubr.f32.gmra.mrb[0].mxu0 %v1128
  %v1225 = vpop.f32.mrb[0].mxu0
  %v1226 = vadd.f32 0.0, %v1225
  %v1227 = vpop.f32.mrb[0].mxu0
  %1228 = vmatprep.mubr.f32.mxu0 0.0
  %1229 = vmatmul.mubr.f32.gmra.mrb[0].mxu0 %v1131
  %v1230 = vpop.f32.mrb[0].mxu0
  %v1231 = vadd.f32 0.0, %v1230
  %v1232 = vpop.f32.mrb[0].mxu0
  %1233 = vmatprep.mubr.f32.mxu0 0.0
  %1234 = vmatmul.mubr.f32.gmra.mrb[0].mxu0 %v1134
  %v1235 = vpop.f32.mrb[0].mxu0
  %v1236 = vadd.f32 0.0, %v1235
  %v1237 = vpop.f32.mrb[0].mxu0
  %1238 = vmatprep.mubr.f32.mxu0 0.0
  %1239 = vmatmul.mubr.f32.gmra.mrb[0].mxu0 %v1137
  %v1240 = vpop.f32.mrb[0].mxu0
  %v1241 = vadd.f32 0.0, %v1240
  %v1242 = vpop.f32.mrb[0].mxu0
  %1243 = vdwg.mxu0
  %v1244 = vsel %vm737, %v1206, -inf
  %1245 = vmax.xlane.f32.xlu0 %v1244
  %v1246 = vpop.xlane.xlu0 %1245
  %v1247 = vsel %vm737, %v1211, -inf
  %1248 = vmax.xlane.f32.xlu0 %v1247
  %v1249 = vpop.xlane.xlu0 %1248
  %v1250 = vsel %vm737, %v1216, -inf
  %1251 = vmax.xlane.f32.xlu0 %v1250
  %v1252 = vpop.xlane.xlu0 %1251
  %v1253 = vsel %vm737, %v1221, -inf
  %1254 = vmax.xlane.f32.xlu0 %v1253
  %v1255 = vpop.xlane.xlu0 %1254
  %v1256 = vsel %vm737, %v1226, -inf
  %1257 = vmax.xlane.f32.xlu0 %v1256
  %v1258 = vpop.xlane.xlu0 %1257
  %v1259 = vsel %vm737, %v1231, -inf
  %1260 = vmax.xlane.f32.xlu0 %v1259
  %v1261 = vpop.xlane.xlu0 %1260
  %v1262 = vsel %vm737, %v1236, -inf
  %1263 = vmax.xlane.f32.xlu0 %v1262
  %v1264 = vpop.xlane.xlu0 %1263
  %v1265 = vsel %vm737, %v1241, -inf
  %1266 = vmax.xlane.f32.xlu0 %v1265
  %v1267 = vpop.xlane.xlu0 %1266
  %v1268 = vsub.f32 %v1206, %v1246
  %v1269 = vsub.f32 %v1211, %v1249
  %v1270 = vsub.f32 %v1216, %v1252
  %v1271 = vsub.f32 %v1221, %v1255
  %v1272 = vsub.f32 %v1226, %v1258
  %v1273 = vsub.f32 %v1231, %v1261
  %v1274 = vsub.f32 %v1236, %v1264
  %v1275 = vsub.f32 %v1241, %v1267
  %v1276 = vmul.f32 %v1268, 1.442695
  %v1277 = vpow.pop %v1276
  %v1278 = vmul.f32 %v1269, 1.442695
  %v1279 = vpow.pop %v1278
  %v1280 = vmul.f32 %v1270, 1.442695
  %v1281 = vpow.pop %v1280
  %v1282 = vmul.f32 %v1271, 1.442695
  %v1283 = vpow.pop %v1282
  %v1284 = vmul.f32 %v1272, 1.442695
  %v1285 = vpow.pop %v1284
  %v1286 = vmul.f32 %v1273, 1.442695
  %v1287 = vpow.pop %v1286
  %v1288 = vmul.f32 %v1274, 1.442695
  %v1289 = vpow.pop %v1288
  %v1290 = vmul.f32 %v1275, 1.442695
  %v1291 = vpow.pop %v1290
  %v1292 = vsel %vm737, %v1277, 0.0
  %1293 = vadd.xlane.f32.xlu0 %v1292
  %v1294 = vpop.xlane.xlu0 %1293
  %v1295 = vsel %vm737, %v1279, 0.0
  %1296 = vadd.xlane.f32.xlu0 %v1295
  %v1297 = vpop.xlane.xlu0 %1296
  %v1298 = vsel %vm737, %v1281, 0.0
  %1299 = vadd.xlane.f32.xlu0 %v1298
  %v1300 = vpop.xlane.xlu0 %1299
  %v1301 = vsel %vm737, %v1283, 0.0
  %1302 = vadd.xlane.f32.xlu0 %v1301
  %v1303 = vpop.xlane.xlu0 %1302
  %v1304 = vsel %vm737, %v1285, 0.0
  %1305 = vadd.xlane.f32.xlu0 %v1304
  %v1306 = vpop.xlane.xlu0 %1305
  %v1307 = vsel %vm737, %v1287, 0.0
  %1308 = vadd.xlane.f32.xlu0 %v1307
  %v1309 = vpop.xlane.xlu0 %1308
  %v1310 = vsel %vm737, %v1289, 0.0
  %1311 = vadd.xlane.f32.xlu0 %v1310
  %v1312 = vpop.xlane.xlu0 %1311
  %v1313 = vsel %vm737, %v1291, 0.0
  %1314 = vadd.xlane.f32.xlu0 %v1313
  %v1315 = vpop.xlane.xlu0 %1314
  %v1316 = vrcp.pop %v1294
  %v1317 = vrcp.pop %v1297
  %v1318 = vrcp.pop %v1300
  %v1319 = vrcp.pop %v1303
  %v1320 = vrcp.pop %v1306
  %v1321 = vrcp.pop %v1309
  %v1322 = vrcp.pop %v1312
  %v1323 = vrcp.pop %v1315
  %v1324 = vmul.f32 %v1277, %v1316
  %v1325 = vmul.f32 %v1279, %v1317
  %v1326 = vmul.f32 %v1281, %v1318
  %v1327 = vmul.f32 %v1283, %v1319
  %v1328 = vmul.f32 %v1285, %v1320
  %v1329 = vmul.f32 %v1287, %v1321
  %v1330 = vmul.f32 %v1289, %v1322
  %v1331 = vmul.f32 %v1291, %v1323
  %v1333 = vsel %vm737, %v1324, 0
  %v1336 = vsel %vm737, %v1325, 0
  %v1339 = vsel %vm737, %v1326, 0
  %v1342 = vsel %vm737, %v1327, 0
  %v1345 = vsel %vm737, %v1328, 0
  %v1348 = vsel %vm737, %v1329, 0
  %v1351 = vsel %vm737, %v1330, 0
  %v1354 = vsel %vm737, %v1331, 0
  %1356 = vmatprep.subr.mxu0 0.0
  %1357 = vmatpush1.msra.mxu0 %v445
  %1358 = vmatprep.subr.mxu0 0.0
  %1359 = vmatpush1.msra.mxu0 %v851
  %1360 = vmatprep.subr.mxu0 0.0
  %1361 = vmatpush1.msra.mxu0 0.0
  %1362 = vmatprep.subr.mxu0 0.0
  %1363 = vmatpush1.msra.mxu0 0.0
  %1364 = vmatprep.subr.mxu0 0.0
  %1365 = vmatpush1.msra.mxu0 0.0
  %1366 = vmatprep.subr.mxu0 0.0
  %1367 = vmatpush1.msra.mxu0 0.0
  %1368 = vmatprep.subr.mxu0 0.0
  %1369 = vmatpush1.msra.mxu0 0.0
  %1370 = vmatprep.subr.mxu0 0.0
  %1371 = vmatpush1.msra.mxu0 0.0
  %1372 = vmatprep.subr.mxu0 0.0
  %1373 = vmatpush1.msra.mxu0 0.0
  %1374 = vmatprep.subr.mxu0 0.0
  %1375 = vmatpush1.msra.mxu0 0.0
  %1376 = vmatprep.subr.mxu0 0.0
  %1377 = vmatpush1.msra.mxu0 0.0
  %1378 = vmatprep.subr.mxu0 0.0
  %1379 = vmatpush1.msra.mxu0 0.0
  %1380 = vmatprep.subr.mxu0 0.0
  %1381 = vmatpush1.msra.mxu0 0.0
  %1382 = vmatprep.subr.mxu0 0.0
  %1383 = vmatpush1.msra.mxu0 0.0
  %1384 = vmatprep.subr.mxu0 0.0
  %1385 = vmatpush1.msra.mxu0 0.0
  %1386 = vmatprep.subr.mxu0 0.0
  %1387 = vmatpush1.msra.mxu0 0.0
  %1388 = vmatprep.subr.mxu0 0.0
  %1389 = vmatpush1.msra.mxu0 0.0
  %1390 = vmatprep.subr.mxu0 0.0
  %1391 = vmatpush1.msra.mxu0 0.0
  %1392 = vmatprep.subr.mxu0 0.0
  %1393 = vmatpush1.msra.mxu0 0.0
  %1394 = vmatprep.subr.mxu0 0.0
  %1395 = vmatpush1.msra.mxu0 0.0
  %1396 = vmatprep.subr.mxu0 0.0
  %1397 = vmatpush1.msra.mxu0 0.0
  %1398 = vmatprep.subr.mxu0 0.0
  %1399 = vmatpush1.msra.mxu0 0.0
  %1400 = vmatprep.subr.mxu0 0.0
  %1401 = vmatpush1.msra.mxu0 0.0
  %1402 = vmatprep.subr.mxu0 0.0
  %1403 = vmatpush1.msra.mxu0 0.0
  %1404 = vmatprep.subr.mxu0 0.0
  %1405 = vmatpush1.msra.mxu0 0.0
  %1406 = vmatprep.subr.mxu0 0.0
  %1407 = vmatpush1.msra.mxu0 0.0
  %1408 = vmatprep.subr.mxu0 0.0
  %1409 = vmatpush1.msra.mxu0 0.0
  %1410 = vmatprep.subr.mxu0 0.0
  %1411 = vmatpush1.msra.mxu0 0.0
  %1412 = vmatprep.subr.mxu0 0.0
  %1413 = vmatpush1.msra.mxu0 0.0
  %1414 = vmatprep.subr.mxu0 0.0
  %1415 = vmatpush1.msra.mxu0 0.0
  %1416 = vmatprep.subr.mxu0 0.0
  %1417 = vmatpush1.msra.mxu0 0.0
  %1418 = vmatprep.subr.mxu0 0.0
  %1419 = vmatpush1.msra.mxu0 0.0
  %1420 = vmatprep.mubr.f32.mxu0 0.0
  %1421 = vmatmul.mubr.f32.gmra.mrb[0].mxu0 %v1333
  %v1422 = vpop.f32.mrb[0].mxu0
  %v1423 = vadd.f32 0.0, %v1422
  %v1424 = vpop.f32.mrb[0].mxu0
  %1425 = vmatprep.mubr.f32.mxu0 0.0
  %1426 = vmatmul.mubr.f32.gmra.mrb[0].mxu0 %v1336
  %v1427 = vpop.f32.mrb[0].mxu0
  %v1428 = vadd.f32 0.0, %v1427
  %v1429 = vpop.f32.mrb[0].mxu0
  %1430 = vmatprep.mubr.f32.mxu0 0.0
  %1431 = vmatmul.mubr.f32.gmra.mrb[0].mxu0 %v1339
  %v1432 = vpop.f32.mrb[0].mxu0
  %v1433 = vadd.f32 0.0, %v1432
  %v1434 = vpop.f32.mrb[0].mxu0
  %1435 = vmatprep.mubr.f32.mxu0 0.0
  %1436 = vmatmul.mubr.f32.gmra.mrb[0].mxu0 %v1342
  %v1437 = vpop.f32.mrb[0].mxu0
  %v1438 = vadd.f32 0.0, %v1437
  %v1439 = vpop.f32.mrb[0].mxu0
  %1440 = vmatprep.mubr.f32.mxu0 0.0
  %1441 = vmatmul.mubr.f32.gmra.mrb[0].mxu0 %v1345
  %v1442 = vpop.f32.mrb[0].mxu0
  %v1443 = vadd.f32 0.0, %v1442
  %v1444 = vpop.f32.mrb[0].mxu0
  %1445 = vmatprep.mubr.f32.mxu0 0.0
  %1446 = vmatmul.mubr.f32.gmra.mrb[0].mxu0 %v1348
  %v1447 = vpop.f32.mrb[0].mxu0
  %v1448 = vadd.f32 0.0, %v1447
  %v1449 = vpop.f32.mrb[0].mxu0
  %1450 = vmatprep.mubr.f32.mxu0 0.0
  %1451 = vmatmul.mubr.f32.gmra.mrb[0].mxu0 %v1351
  %v1452 = vpop.f32.mrb[0].mxu0
  %v1453 = vadd.f32 0.0, %v1452
  %v1454 = vpop.f32.mrb[0].mxu0
  %1455 = vmatprep.mubr.f32.mxu0 0.0
  %1456 = vmatmul.mubr.f32.gmra.mrb[0].mxu0 %v1354
  %v1457 = vpop.f32.mrb[0].mxu0
  %v1458 = vadd.f32 0.0, %v1457
  %v1459 = vpop.f32.mrb[0].mxu0
  %1460 = vdwg.mxu0
  %1461 = vst.msk [vmem:[#allocation3 + $0x88] sm:$0xff] %vm412, %v1423
  %1462 = vst.msk [vmem:[#allocation3 + $0x90] sm:$0xff] %vm412, %v1428
  %1463 = vst.msk [vmem:[#allocation3 + $0x98] sm:$0xff] %vm412, %v1433
  %1464 = vst.msk [vmem:[#allocation3 + $0xa0] sm:$0xff] %vm412, %v1438
  %1465 = vst.msk [vmem:[#allocation3 + $0xa8] sm:$0xff] %vm412, %v1443
  %1466 = vst.msk [vmem:[#allocation3 + $0xb0] sm:$0xff] %vm412, %v1448
  %1467 = vst.msk [vmem:[#allocation3 + $0xb8] sm:$0xff] %vm412, %v1453
  %1468 = vst.msk [vmem:[#allocation3 + $0xc0] sm:$0xff] %vm412, %v1458
  %v1469 = vld [vmem:[%s8] sm:$0xff]
  %v1470 = vld [vmem:[%s8 + $0x8] sm:$0x3]
  %v1471 = vld [vmem:[%s7] sm:$0x1]
  %v1472 = vld [vmem:[#allocation2] sm:$0xff]
  %v1473 = vld [vmem:[#allocation2 + $0x18] sm:$0xff]
  %v1474 = vld [vmem:[#allocation2 + $0x30] sm:$0xff]
  %v1475 = vld [vmem:[#allocation2 + $0x48] sm:$0xff]
  %v1476 = vld [vmem:[#allocation2 + $0x60] sm:$0xff]
  %v1477 = vld [vmem:[%s6] sm:$0xff]
  %v1478 = vld [vmem:[%s6 + $0x8] sm:$0xff]
  %v1479 = vld [vmem:[%s6 + $0x10] sm:$0xff]
  %v1481 = vsel %vm412, %v1472, 0
  %v1484 = vsel %vm412, %v1473, 0
  %v1487 = vsel %vm412, %v1474, 0
  %v1490 = vsel %vm412, %v1475, 0
  %v1493 = vsel %vm412, %v1476, 0
  %1495 = vmatprep.subr.mxu0 0.0
  %1496 = vmatpush1.msra.mxu0 %v1477
  %1497 = vmatprep.subr.mxu0 0.0
  %1498 = vmatpush1.msra.mxu0 %v1478
  %1499 = vmatprep.subr.mxu0 0.0
  %1500 = vmatpush1.msra.mxu0 %v1479
  %1501 = vmatprep.subr.mxu0 0.0
  %1502 = vmatpush1.msra.mxu0 0.0
  %1503 = vmatprep.subr.mxu0 0.0
  %1504 = vmatpush1.msra.mxu0 0.0
  %1505 = vmatprep.subr.mxu0 0.0
  %1506 = vmatpush1.msra.mxu0 0.0
  %1507 = vmatprep.subr.mxu0 0.0
  %1508 = vmatpush1.msra.mxu0 0.0
  %1509 = vmatprep.subr.mxu0 0.0
  %1510 = vmatpush1.msra.mxu0 0.0
  %1511 = vmatprep.subr.mxu0 0.0
  %1512 = vmatpush1.msra.mxu0 0.0
  %1513 = vmatprep.subr.mxu0 0.0
  %1514 = vmatpush1.msra.mxu0 0.0
  %1515 = vmatprep.subr.mxu0 0.0
  %1516 = vmatpush1.msra.mxu0 0.0
  %1517 = vmatprep.subr.mxu0 0.0
  %1518 = vmatpush1.msra.mxu0 0.0
  %1519 = vmatprep.subr.mxu0 0.0
  %1520 = vmatpush1.msra.mxu0 0.0
  %1521 = vmatprep.subr.mxu0 0.0
  %1522 = vmatpush1.msra.mxu0 0.0
  %1523 = vmatprep.subr.mxu0 0.0
  %1524 = vmatpush1.msra.mxu0 0.0
  %1525 = vmatprep.subr.mxu0 0.0
  %1526 = vmatpush1.msra.mxu0 0.0
  %1527 = vmatprep.subr.mxu0 0.0
  %1528 = vmatpush1.msra.mxu0 0.0
  %1529 = vmatprep.subr.mxu0 0.0
  %1530 = vmatpush1.msra.mxu0 0.0
  %1531 = vmatprep.subr.mxu0 0.0
  %1532 = vmatpush1.msra.mxu0 0.0
  %1533 = vmatprep.subr.mxu0 0.0
  %1534 = vmatpush1.msra.mxu0 0.0
  %1535 = vmatprep.subr.mxu0 0.0
  %1536 = vmatpush1.msra.mxu0 0.0
  %1537 = vmatprep.subr.mxu0 0.0
  %1538 = vmatpush1.msra.mxu0 0.0
  %1539 = vmatprep.subr.mxu0 0.0
  %1540 = vmatpush1.msra.mxu0 0.0
  %1541 = vmatprep.subr.mxu0 0.0
  %1542 = vmatpush1.msra.mxu0 0.0
  %1543 = vmatprep.subr.mxu0 0.0
  %1544 = vmatpush1.msra.mxu0 0.0
  %1545 = vmatprep.subr.mxu0 0.0
  %1546 = vmatpush1.msra.mxu0 0.0
  %1547 = vmatprep.subr.mxu0 0.0
  %1548 = vmatpush1.msra.mxu0 0.0
  %1549 = vmatprep.subr.mxu0 0.0
  %1550 = vmatpush1.msra.mxu0 0.0
  %1551 = vmatprep.subr.mxu0 0.0
  %1552 = vmatpush1.msra.mxu0 0.0
  %1553 = vmatprep.subr.mxu0 0.0
  %1554 = vmatpush1.msra.mxu0 0.0
  %1555 = vmatprep.subr.mxu0 0.0
  %1556 = vmatpush1.msra.mxu0 0.0
  %1557 = vmatprep.subr.mxu0 0.0
  %1558 = vmatpush1.msra.mxu0 0.0
  %1559 = vmatprep.mubr.f32.mxu0 0.0
  %1560 = vmatmul.mubr.f32.gmra.mrb[0].mxu0 %v1481
  %v1561 = vpop.f32.mrb[0].mxu0
  %v1562 = vadd.f32 0.0, %v1561
  %v1563 = vpop.f32.mrb[0].mxu0
  %1564 = vmatprep.mubr.f32.mxu0 0.0
  %1565 = vmatmul.mubr.f32.gmra.mrb[0].mxu0 %v1484
  %v1566 = vpop.f32.mrb[0].mxu0
  %v1567 = vadd.f32 0.0, %v1566
  %v1568 = vpop.f32.mrb[0].mxu0
  %1569 = vmatprep.mubr.f32.mxu0 0.0
  %1570 = vmatmul.mubr.f32.gmra.mrb[0].mxu0 %v1487
  %v1571 = vpop.f32.mrb[0].mxu0
  %v1572 = vadd.f32 0.0, %v1571
  %v1573 = vpop.f32.mrb[0].mxu0
  %1574 = vmatprep.mubr.f32.mxu0 0.0
  %1575 = vmatmul.mubr.f32.gmra.mrb[0].mxu0 %v1490
  %v1576 = vpop.f32.mrb[0].mxu0
  %v1577 = vadd.f32 0.0, %v1576
  %v1578 = vpop.f32.mrb[0].mxu0
  %1579 = vmatprep.mubr.f32.mxu0 0.0
  %1580 = vmatmul.mubr.f32.gmra.mrb[0].mxu0 %v1493
  %v1581 = vpop.f32.mrb[0].mxu0
  %v1582 = vadd.f32 0.0, %v1581
  %v1583 = vpop.f32.mrb[0].mxu0
  %1584 = vdwg.mxu0
  %v1586 = vlaneseq
  %v1587 = vshrl.u32 %v1586, 7
  %v1588 = vsub.s32 0, %v1587
  %v1589 = vrot.slane %v1471, %v1588
  %v1591 = vadd.f32 %v1589, %v1562
  %v1592 = vadd.f32 %v1589, %v1567
  %v1593 = vadd.f32 %v1589, %v1572
  %v1594 = vadd.f32 %v1589, %v1577
  %v1595 = vadd.f32 %v1589, %v1582
  %s1596 = scalar_lea.vmem [#allocation2], 8
  %v1597 = vld [vmem:[%s1596] sm:$0xff]
  %v1598 = vld [vmem:[%s1596 + $0x18] sm:$0xff]
  %v1599 = vld [vmem:[%s1596 + $0x30] sm:$0xff]
  %v1600 = vld [vmem:[%s1596 + $0x48] sm:$0xff]
  %v1601 = vld [vmem:[%s1596 + $0x60] sm:$0xff]
  %s1602 = scalar_lea.vmem %s6, 24
  %v1603 = vld [vmem:[%s1602] sm:$0xff]
  %v1604 = vld [vmem:[%s1602 + $0x8] sm:$0xff]
  %v1605 = vld [vmem:[%s1602 + $0x10] sm:$0xff]
  %v1607 = vsel %vm412, %v1597, 0
  %v1610 = vsel %vm412, %v1598, 0
  %v1613 = vsel %vm412, %v1599, 0
  %v1616 = vsel %vm412, %v1600, 0
  %v1619 = vsel %vm412, %v1601, 0
  %1621 = vmatprep.subr.mxu0 0.0
  %1622 = vmatpush1.msra.mxu0 %v1603
  %1623 = vmatprep.subr.mxu0 0.0
  %1624 = vmatpush1.msra.mxu0 %v1604
  %1625 = vmatprep.subr.mxu0 0.0
  %1626 = vmatpush1.msra.mxu0 %v1605
  %1627 = vmatprep.subr.mxu0 0.0
  %1628 = vmatpush1.msra.mxu0 0.0
  %1629 = vmatprep.subr.mxu0 0.0
  %1630 = vmatpush1.msra.mxu0 0.0
  %1631 = vmatprep.subr.mxu0 0.0
  %1632 = vmatpush1.msra.mxu0 0.0
  %1633 = vmatprep.subr.mxu0 0.0
  %1634 = vmatpush1.msra.mxu0 0.0
  %1635 = vmatprep.subr.mxu0 0.0
  %1636 = vmatpush1.msra.mxu0 0.0
  %1637 = vmatprep.subr.mxu0 0.0
  %1638 = vmatpush1.msra.mxu0 0.0
  %1639 = vmatprep.subr.mxu0 0.0
  %1640 = vmatpush1.msra.mxu0 0.0
  %1641 = vmatprep.subr.mxu0 0.0
  %1642 = vmatpush1.msra.mxu0 0.0
  %1643 = vmatprep.subr.mxu0 0.0
  %1644 = vmatpush1.msra.mxu0 0.0
  %1645 = vmatprep.subr.mxu0 0.0
  %1646 = vmatpush1.msra.mxu0 0.0
  %1647 = vmatprep.subr.mxu0 0.0
  %1648 = vmatpush1.msra.mxu0 0.0
  %1649 = vmatprep.subr.mxu0 0.0
  %1650 = vmatpush1.msra.mxu0 0.0
  %1651 = vmatprep.subr.mxu0 0.0
  %1652 = vmatpush1.msra.mxu0 0.0
  %1653 = vmatprep.subr.mxu0 0.0
  %1654 = vmatpush1.msra.mxu0 0.0
  %1655 = vmatprep.subr.mxu0 0.0
  %1656 = vmatpush1.msra.mxu0 0.0
  %1657 = vmatprep.subr.mxu0 0.0
  %1658 = vmatpush1.msra.mxu0 0.0
  %1659 = vmatprep.subr.mxu0 0.0
  %1660 = vmatpush1.msra.mxu0 0.0
  %1661 = vmatprep.subr.mxu0 0.0
  %1662 = vmatpush1.msra.mxu0 0.0
  %1663 = vmatprep.subr.mxu0 0.0
  %1664 = vmatpush1.msra.mxu0 0.0
  %1665 = vmatprep.subr.mxu0 0.0
  %1666 = vmatpush1.msra.mxu0 0.0
  %1667 = vmatprep.subr.mxu0 0.0
  %1668 = vmatpush1.msra.mxu0 0.0
  %1669 = vmatprep.subr.mxu0 0.0
  %1670 = vmatpush1.msra.mxu0 0.0
  %1671 = vmatprep.subr.mxu0 0.0
  %1672 = vmatpush1.msra.mxu0 0.0
  %1673 = vmatprep.subr.mxu0 0.0
  %1674 = vmatpush1.msra.mxu0 0.0
  %1675 = vmatprep.subr.mxu0 0.0
  %1676 = vmatpush1.msra.mxu0 0.0
  %1677 = vmatprep.subr.mxu0 0.0
  %1678 = vmatpush1.msra.mxu0 0.0
  %1679 = vmatprep.subr.mxu0 0.0
  %1680 = vmatpush1.msra.mxu0 0.0
  %1681 = vmatprep.subr.mxu0 0.0
  %1682 = vmatpush1.msra.mxu0 0.0
  %1683 = vmatprep.subr.mxu0 0.0
  %1684 = vmatpush1.msra.mxu0 0.0
  %1685 = vmatprep.mubr.f32.mxu0 0.0
  %1686 = vmatmul.mubr.f32.gmra.mrb[0].mxu0 %v1607
  %v1687 = vpop.f32.mrb[0].mxu0
  %v1688 = vadd.f32 0.0, %v1687
  %v1689 = vpop.f32.mrb[0].mxu0
  %1690 = vmatprep.mubr.f32.mxu0 0.0
  %1691 = vmatmul.mubr.f32.gmra.mrb[0].mxu0 %v1610
  %v1692 = vpop.f32.mrb[0].mxu0
  %v1693 = vadd.f32 0.0, %v1692
  %v1694 = vpop.f32.mrb[0].mxu0
  %1695 = vmatprep.mubr.f32.mxu0 0.0
  %1696 = vmatmul.mubr.f32.gmra.mrb[0].mxu0 %v1613
  %v1697 = vpop.f32.mrb[0].mxu0
  %v1698 = vadd.f32 0.0, %v1697
  %v1699 = vpop.f32.mrb[0].mxu0
  %1700 = vmatprep.mubr.f32.mxu0 0.0
  %1701 = vmatmul.mubr.f32.gmra.mrb[0].mxu0 %v1616
  %v1702 = vpop.f32.mrb[0].mxu0
  %v1703 = vadd.f32 0.0, %v1702
  %v1704 = vpop.f32.mrb[0].mxu0
  %1705 = vmatprep.mubr.f32.mxu0 0.0
  %1706 = vmatmul.mubr.f32.gmra.mrb[0].mxu0 %v1619
  %v1707 = vpop.f32.mrb[0].mxu0
  %v1708 = vadd.f32 0.0, %v1707
  %v1709 = vpop.f32.mrb[0].mxu0
  %1710 = vdwg.mxu0
  %v1711 = vadd.f32 %v1591, %v1688
  %v1712 = vadd.f32 %v1592, %v1693
  %v1713 = vadd.f32 %v1593, %v1698
  %v1714 = vadd.f32 %v1594, %v1703
  %v1715 = vadd.f32 %v1595, %v1708
  %v1717 = vsel %vm412, %v1711, 0
  %v1720 = vsel %vm412, %v1712, 0
  %v1723 = vsel %vm412, %v1713, 0
  %v1726 = vsel %vm412, %v1714, 0
  %v1729 = vsel %vm412, %v1715, 0
  %v1732 = vsel %vm412, %v1469, 0
  %v1735 = vsel %vm412, %v1470, 0
  %1737 = vmatprep.subr.mxu0 0.0
  %1738 = vmatpush1.xpose.msra.mxu0 %v1732
  %1739 = vmatprep.subr.mxu0 0.0
  %1740 = vmatpush1.xpose.msra.mxu0 %v1735
  %1741 = vmatprep.subr.mxu0 0.0
  %1742 = vmatpush1.xpose.msra.mxu0 0.0
  %1743 = vmatprep.subr.mxu0 0.0
  %1744 = vmatpush1.xpose.msra.mxu0 0.0
  %1745 = vmatprep.subr.mxu0 0.0
  %1746 = vmatpush1.xpose.msra.mxu0 0.0
  %1747 = vmatprep.subr.mxu0 0.0
  %1748 = vmatpush1.xpose.msra.mxu0 0.0
  %1749 = vmatprep.subr.mxu0 0.0
  %1750 = vmatpush1.xpose.msra.mxu0 0.0
  %1751 = vmatprep.subr.mxu0 0.0
  %1752 = vmatpush1.xpose.msra.mxu0 0.0
  %1753 = vmatprep.subr.mxu0 0.0
  %1754 = vmatpush1.xpose.msra.mxu0 0.0
  %1755 = vmatprep.subr.mxu0 0.0
  %1756 = vmatpush1.xpose.msra.mxu0 0.0
  %1757 = vmatprep.subr.mxu0 0.0
  %1758 = vmatpush1.xpose.msra.mxu0 0.0
  %1759 = vmatprep.subr.mxu0 0.0
  %1760 = vmatpush1.xpose.msra.mxu0 0.0
  %1761 = vmatprep.subr.mxu0 0.0
  %1762 = vmatpush1.xpose.msra.mxu0 0.0
  %1763 = vmatprep.subr.mxu0 0.0
  %1764 = vmatpush1.xpose.msra.mxu0 0.0
  %1765 = vmatprep.subr.mxu0 0.0
  %1766 = vmatpush1.xpose.msra.mxu0 0.0
  %1767 = vmatprep.subr.mxu0 0.0
  %1768 = vmatpush1.xpose.msra.mxu0 0.0
  %1769 = vmatprep.subr.mxu0 0.0
  %1770 = vmatpush1.xpose.msra.mxu0 0.0
  %1771 = vmatprep.subr.mxu0 0.0
  %1772 = vmatpush1.xpose.msra.mxu0 0.0
  %1773 = vmatprep.subr.mxu0 0.0
  %1774 = vmatpush1.xpose.msra.mxu0 0.0
  %1775 = vmatprep.subr.mxu0 0.0
  %1776 = vmatpush1.xpose.msra.mxu0 0.0
  %1777 = vmatprep.subr.mxu0 0.0
  %1778 = vmatpush1.xpose.msra.mxu0 0.0
  %1779 = vmatprep.subr.mxu0 0.0
  %1780 = vmatpush1.xpose.msra.mxu0 0.0
  %1781 = vmatprep.subr.mxu0 0.0
  %1782 = vmatpush1.xpose.msra.mxu0 0.0
  %1783 = vmatprep.subr.mxu0 0.0
  %1784 = vmatpush1.xpose.msra.mxu0 0.0
  %1785 = vmatprep.subr.mxu0 0.0
  %1786 = vmatpush1.xpose.msra.mxu0 0.0
  %1787 = vmatprep.subr.mxu0 0.0
  %1788 = vmatpush1.xpose.msra.mxu0 0.0
  %1789 = vmatprep.subr.mxu0 0.0
  %1790 = vmatpush1.xpose.msra.mxu0 0.0
  %1791 = vmatprep.subr.mxu0 0.0
  %1792 = vmatpush1.xpose.msra.mxu0 0.0
  %1793 = vmatprep.subr.mxu0 0.0
  %1794 = vmatpush1.xpose.msra.mxu0 0.0
  %1795 = vmatprep.subr.mxu0 0.0
  %1796 = vmatpush1.xpose.msra.mxu0 0.0
  %1797 = vmatprep.subr.mxu0 0.0
  %1798 = vmatpush1.xpose.msra.mxu0 0.0
  %1799 = vmatprep.subr.mxu0 0.0
  %1800 = vmatpush1.xpose.msra.mxu0 0.0
  %1801 = vmatprep.mubr.f32.mxu0 0.0
  %1802 = vmatmul.mubr.f32.gmra.mrb[0].mxu0 %v1717
  %v1803 = vpop.f32.mrb[0].mxu0
  %v1804 = vadd.f32 0.0, %v1803
  %v1805 = vpop.f32.mrb[0].mxu0
  %1806 = vmatprep.mubr.f32.mxu0 0.0
  %1807 = vmatmul.mubr.f32.gmra.mrb[0].mxu0 %v1720
  %v1808 = vpop.f32.mrb[0].mxu0
  %v1809 = vadd.f32 0.0, %v1808
  %v1810 = vpop.f32.mrb[0].mxu0
  %1811 = vmatprep.mubr.f32.mxu0 0.0
  %1812 = vmatmul.mubr.f32.gmra.mrb[0].mxu0 %v1723
  %v1813 = vpop.f32.mrb[0].mxu0
  %v1814 = vadd.f32 0.0, %v1813
  %v1815 = vpop.f32.mrb[0].mxu0
  %1816 = vmatprep.mubr.f32.mxu0 0.0
  %1817 = vmatmul.mubr.f32.gmra.mrb[0].mxu0 %v1726
  %v1818 = vpop.f32.mrb[0].mxu0
  %v1819 = vadd.f32 0.0, %v1818
  %v1820 = vpop.f32.mrb[0].mxu0
  %1821 = vmatprep.mubr.f32.mxu0 0.0
  %1822 = vmatmul.mubr.f32.gmra.mrb[0].mxu0 %v1729
  %v1823 = vpop.f32.mrb[0].mxu0
  %v1824 = vadd.f32 0.0, %v1823
  %v1825 = vpop.f32.mrb[0].mxu0
  %1826 = vdwg.mxu0
  %v1827 = vsel %vm737, %v1804, -inf
  %1828 = vmax.xlane.f32.xlu0 %v1827
  %v1829 = vpop.xlane.xlu0 %1828
  %v1830 = vsel %vm737, %v1809, -inf
  %1831 = vmax.xlane.f32.xlu0 %v1830
  %v1832 = vpop.xlane.xlu0 %1831
  %v1833 = vsel %vm737, %v1814, -inf
  %1834 = vmax.xlane.f32.xlu0 %v1833
  %v1835 = vpop.xlane.xlu0 %1834
  %v1836 = vsel %vm737, %v1819, -inf
  %1837 = vmax.xlane.f32.xlu0 %v1836
  %v1838 = vpop.xlane.xlu0 %1837
  %v1839 = vsel %vm737, %v1824, -inf
  %1840 = vmax.xlane.f32.xlu0 %v1839
  %v1841 = vpop.xlane.xlu0 %1840
  %v1842 = vsub.f32 %v1804, %v1829
  %v1843 = vsub.f32 %v1809, %v1832
  %v1844 = vsub.f32 %v1814, %v1835
  %v1845 = vsub.f32 %v1819, %v1838
  %v1846 = vsub.f32 %v1824, %v1841
  %v1847 = vmul.f32 %v1842, 1.442695
  %v1848 = vpow.pop %v1847
  %v1849 = vmul.f32 %v1843, 1.442695
  %v1850 = vpow.pop %v1849
  %v1851 = vmul.f32 %v1844, 1.442695
  %v1852 = vpow.pop %v1851
  %v1853 = vmul.f32 %v1845, 1.442695
  %v1854 = vpow.pop %v1853
  %v1855 = vmul.f32 %v1846, 1.442695
  %v1856 = vpow.pop %v1855
  %v1857 = vsel %vm737, %v1848, 0.0
  %1858 = vadd.xlane.f32.xlu0 %v1857
  %v1859 = vpop.xlane.xlu0 %1858
  %v1860 = vsel %vm737, %v1850, 0.0
  %1861 = vadd.xlane.f32.xlu0 %v1860
  %v1862 = vpop.xlane.xlu0 %1861
  %v1863 = vsel %vm737, %v1852, 0.0
  %1864 = vadd.xlane.f32.xlu0 %v1863
  %v1865 = vpop.xlane.xlu0 %1864
  %v1866 = vsel %vm737, %v1854, 0.0
  %1867 = vadd.xlane.f32.xlu0 %v1866
  %v1868 = vpop.xlane.xlu0 %1867
  %v1869 = vsel %vm737, %v1856, 0.0
  %1870 = vadd.xlane.f32.xlu0 %v1869
  %v1871 = vpop.xlane.xlu0 %1870
  %v1872 = vrcp.pop %v1859
  %v1873 = vrcp.pop %v1862
  %v1874 = vrcp.pop %v1865
  %v1875 = vrcp.pop %v1868
  %v1876 = vrcp.pop %v1871
  %v1877 = vmul.f32 %v1848, %v1872
  %v1878 = vmul.f32 %v1850, %v1873
  %v1879 = vmul.f32 %v1852, %v1874
  %v1880 = vmul.f32 %v1854, %v1875
  %v1881 = vmul.f32 %v1856, %v1876
  %v1883 = vsel %vm737, %v1877, 0
  %v1886 = vsel %vm737, %v1878, 0
  %v1889 = vsel %vm737, %v1879, 0
  %v1892 = vsel %vm737, %v1880, 0
  %v1895 = vsel %vm737, %v1881, 0
  %v1897 = vsel %vm850, %v1470, 0
  %1899 = vmatprep.subr.mxu0 0.0
  %1900 = vmatpush1.msra.mxu0 %v1469
  %1901 = vmatprep.subr.mxu0 0.0
  %1902 = vmatpush1.msra.mxu0 %v1897
  %1903 = vmatprep.subr.mxu0 0.0
  %1904 = vmatpush1.msra.mxu0 0.0
  %1905 = vmatprep.subr.mxu0 0.0
  %1906 = vmatpush1.msra.mxu0 0.0
  %1907 = vmatprep.subr.mxu0 0.0
  %1908 = vmatpush1.msra.mxu0 0.0
  %1909 = vmatprep.subr.mxu0 0.0
  %1910 = vmatpush1.msra.mxu0 0.0
  %1911 = vmatprep.subr.mxu0 0.0
  %1912 = vmatpush1.msra.mxu0 0.0
  %1913 = vmatprep.subr.mxu0 0.0
  %1914 = vmatpush1.msra.mxu0 0.0
  %1915 = vmatprep.subr.mxu0 0.0
  %1916 = vmatpush1.msra.mxu0 0.0
  %1917 = vmatprep.subr.mxu0 0.0
  %1918 = vmatpush1.msra.mxu0 0.0
  %1919 = vmatprep.subr.mxu0 0.0
  %1920 = vmatpush1.msra.mxu0 0.0
  %1921 = vmatprep.subr.mxu0 0.0
  %1922 = vmatpush1.msra.mxu0 0.0
  %1923 = vmatprep.subr.mxu0 0.0
  %1924 = vmatpush1.msra.mxu0 0.0
  %1925 = vmatprep.subr.mxu0 0.0
  %1926 = vmatpush1.msra.mxu0 0.0
  %1927 = vmatprep.subr.mxu0 0.0
  %1928 = vmatpush1.msra.mxu0 0.0
  %1929 = vmatprep.subr.mxu0 0.0
  %1930 = vmatpush1.msra.mxu0 0.0
  %1931 = vmatprep.subr.mxu0 0.0
  %1932 = vmatpush1.msra.mxu0 0.0
  %1933 = vmatprep.subr.mxu0 0.0
  %1934 = vmatpush1.msra.mxu0 0.0
  %1935 = vmatprep.subr.mxu0 0.0
  %1936 = vmatpush1.msra.mxu0 0.0
  %1937 = vmatprep.subr.mxu0 0.0
  %1938 = vmatpush1.msra.mxu0 0.0
  %1939 = vmatprep.subr.mxu0 0.0
  %1940 = vmatpush1.msra.mxu0 0.0
  %1941 = vmatprep.subr.mxu0 0.0
  %1942 = vmatpush1.msra.mxu0 0.0
  %1943 = vmatprep.subr.mxu0 0.0
  %1944 = vmatpush1.msra.mxu0 0.0
  %1945 = vmatprep.subr.mxu0 0.0
  %1946 = vmatpush1.msra.mxu0 0.0
  %1947 = vmatprep.subr.mxu0 0.0
  %1948 = vmatpush1.msra.mxu0 0.0
  %1949 = vmatprep.subr.mxu0 0.0
  %1950 = vmatpush1.msra.mxu0 0.0
  %1951 = vmatprep.subr.mxu0 0.0
  %1952 = vmatpush1.msra.mxu0 0.0
  %1953 = vmatprep.subr.mxu0 0.0
  %1954 = vmatpush1.msra.mxu0 0.0
  %1955 = vmatprep.subr.mxu0 0.0
  %1956 = vmatpush1.msra.mxu0 0.0
  %1957 = vmatprep.subr.mxu0 0.0
  %1958 = vmatpush1.msra.mxu0 0.0
  %1959 = vmatprep.subr.mxu0 0.0
  %1960 = vmatpush1.msra.mxu0 0.0
  %1961 = vmatprep.subr.mxu0 0.0
  %1962 = vmatpush1.msra.mxu0 0.0
  %1963 = vmatprep.mubr.f32.mxu0 0.0
  %1964 = vmatmul.mubr.f32.gmra.mrb[0].mxu0 %v1883
  %v1965 = vpop.f32.mrb[0].mxu0
  %v1966 = vadd.f32 0.0, %v1965
  %v1967 = vpop.f32.mrb[0].mxu0
  %1968 = vmatprep.mubr.f32.mxu0 0.0
  %1969 = vmatmul.mubr.f32.gmra.mrb[0].mxu0 %v1886
  %v1970 = vpop.f32.mrb[0].mxu0
  %v1971 = vadd.f32 0.0, %v1970
  %v1972 = vpop.f32.mrb[0].mxu0
  %1973 = vmatprep.mubr.f32.mxu0 0.0
  %1974 = vmatmul.mubr.f32.gmra.mrb[0].mxu0 %v1889
  %v1975 = vpop.f32.mrb[0].mxu0
  %v1976 = vadd.f32 0.0, %v1975
  %v1977 = vpop.f32.mrb[0].mxu0
  %1978 = vmatprep.mubr.f32.mxu0 0.0
  %1979 = vmatmul.mubr.f32.gmra.mrb[0].mxu0 %v1892
  %v1980 = vpop.f32.mrb[0].mxu0
  %v1981 = vadd.f32 0.0, %v1980
  %v1982 = vpop.f32.mrb[0].mxu0
  %1983 = vmatprep.mubr.f32.mxu0 0.0
  %1984 = vmatmul.mubr.f32.gmra.mrb[0].mxu0 %v1895
  %v1985 = vpop.f32.mrb[0].mxu0
  %v1986 = vadd.f32 0.0, %v1985
  %v1987 = vpop.f32.mrb[0].mxu0
  %1988 = vdwg.mxu0
  %1989 = vst.msk [vmem:[#allocation3 + $0x40] sm:$0xff] %vm412, %v1966
  %1990 = vst.msk [vmem:[#allocation3 + $0x48] sm:$0xff] %vm412, %v1971
  %1991 = vst.msk [vmem:[#allocation3 + $0x50] sm:$0xff] %vm412, %v1976
  %1992 = vst.msk [vmem:[#allocation3 + $0x58] sm:$0xff] %vm412, %v1981
  %1993 = vst.msk [vmem:[#allocation3 + $0x60] sm:$0xff] %vm412, %v1986
  %v1994 = vld [vmem:[%s966] sm:$0xff]
  %v1995 = vld [vmem:[%s966 + $0x18] sm:$0xff]
  %v1996 = vld [vmem:[%s966 + $0x30] sm:$0xff]
  %v1997 = vld [vmem:[%s966 + $0x48] sm:$0xff]
  %v1998 = vld [vmem:[%s966 + $0x60] sm:$0xff]
  %v1999 = vld [vmem:[%s6] sm:$0xff]
  %v2000 = vld [vmem:[%s6 + $0x8] sm:$0xff]
  %v2001 = vld [vmem:[%s6 + $0x10] sm:$0xff]
  %v2003 = vsel %vm412, %v1994, 0
  %v2006 = vsel %vm412, %v1995, 0
  %v2009 = vsel %vm412, %v1996, 0
  %v2012 = vsel %vm412, %v1997, 0
  %v2015 = vsel %vm412, %v1998, 0
  %2017 = vmatprep.subr.mxu0 0.0
  %2018 = vmatpush1.msra.mxu0 %v1999
  %2019 = vmatprep.subr.mxu0 0.0
  %2020 = vmatpush1.msra.mxu0 %v2000
  %2021 = vmatprep.subr.mxu0 0.0
  %2022 = vmatpush1.msra.mxu0 %v2001
  %2023 = vmatprep.subr.mxu0 0.0
  %2024 = vmatpush1.msra.mxu0 0.0
  %2025 = vmatprep.subr.mxu0 0.0
  %2026 = vmatpush1.msra.mxu0 0.0
  %2027 = vmatprep.subr.mxu0 0.0
  %2028 = vmatpush1.msra.mxu0 0.0
  %2029 = vmatprep.subr.mxu0 0.0
  %2030 = vmatpush1.msra.mxu0 0.0
  %2031 = vmatprep.subr.mxu0 0.0
  %2032 = vmatpush1.msra.mxu0 0.0
  %2033 = vmatprep.subr.mxu0 0.0
  %2034 = vmatpush1.msra.mxu0 0.0
  %2035 = vmatprep.subr.mxu0 0.0
  %2036 = vmatpush1.msra.mxu0 0.0
  %2037 = vmatprep.subr.mxu0 0.0
  %2038 = vmatpush1.msra.mxu0 0.0
  %2039 = vmatprep.subr.mxu0 0.0
  %2040 = vmatpush1.msra.mxu0 0.0
  %2041 = vmatprep.subr.mxu0 0.0
  %2042 = vmatpush1.msra.mxu0 0.0
  %2043 = vmatprep.subr.mxu0 0.0
  %2044 = vmatpush1.msra.mxu0 0.0
  %2045 = vmatprep.subr.mxu0 0.0
  %2046 = vmatpush1.msra.mxu0 0.0
  %2047 = vmatprep.subr.mxu0 0.0
  %2048 = vmatpush1.msra.mxu0 0.0
  %2049 = vmatprep.subr.mxu0 0.0
  %2050 = vmatpush1.msra.mxu0 0.0
  %2051 = vmatprep.subr.mxu0 0.0
  %2052 = vmatpush1.msra.mxu0 0.0
  %2053 = vmatprep.subr.mxu0 0.0
  %2054 = vmatpush1.msra.mxu0 0.0
  %2055 = vmatprep.subr.mxu0 0.0
  %2056 = vmatpush1.msra.mxu0 0.0
  %2057 = vmatprep.subr.mxu0 0.0
  %2058 = vmatpush1.msra.mxu0 0.0
  %2059 = vmatprep.subr.mxu0 0.0
  %2060 = vmatpush1.msra.mxu0 0.0
  %2061 = vmatprep.subr.mxu0 0.0
  %2062 = vmatpush1.msra.mxu0 0.0
  %2063 = vmatprep.subr.mxu0 0.0
  %2064 = vmatpush1.msra.mxu0 0.0
  %2065 = vmatprep.subr.mxu0 0.0
  %2066 = vmatpush1.msra.mxu0 0.0
  %2067 = vmatprep.subr.mxu0 0.0
  %2068 = vmatpush1.msra.mxu0 0.0
  %2069 = vmatprep.subr.mxu0 0.0
  %2070 = vmatpush1.msra.mxu0 0.0
  %2071 = vmatprep.subr.mxu0 0.0
  %2072 = vmatpush1.msra.mxu0 0.0
  %2073 = vmatprep.subr.mxu0 0.0
  %2074 = vmatpush1.msra.mxu0 0.0
  %2075 = vmatprep.subr.mxu0 0.0
  %2076 = vmatpush1.msra.mxu0 0.0
  %2077 = vmatprep.subr.mxu0 0.0
  %2078 = vmatpush1.msra.mxu0 0.0
  %2079 = vmatprep.subr.mxu0 0.0
  %2080 = vmatpush1.msra.mxu0 0.0
  %2081 = vmatprep.mubr.f32.mxu0 0.0
  %2082 = vmatmul.mubr.f32.gmra.mrb[0].mxu0 %v2003
  %v2083 = vpop.f32.mrb[0].mxu0
  %v2084 = vadd.f32 0.0, %v2083
  %v2085 = vpop.f32.mrb[0].mxu0
  %2086 = vmatprep.mubr.f32.mxu0 0.0
  %2087 = vmatmul.mubr.f32.gmra.mrb[0].mxu0 %v2006
  %v2088 = vpop.f32.mrb[0].mxu0
  %v2089 = vadd.f32 0.0, %v2088
  %v2090 = vpop.f32.mrb[0].mxu0
  %2091 = vmatprep.mubr.f32.mxu0 0.0
  %2092 = vmatmul.mubr.f32.gmra.mrb[0].mxu0 %v2009
  %v2093 = vpop.f32.mrb[0].mxu0
  %v2094 = vadd.f32 0.0, %v2093
  %v2095 = vpop.f32.mrb[0].mxu0
  %2096 = vmatprep.mubr.f32.mxu0 0.0
  %2097 = vmatmul.mubr.f32.gmra.mrb[0].mxu0 %v2012
  %v2098 = vpop.f32.mrb[0].mxu0
  %v2099 = vadd.f32 0.0, %v2098
  %v2100 = vpop.f32.mrb[0].mxu0
  %2101 = vmatprep.mubr.f32.mxu0 0.0
  %2102 = vmatmul.mubr.f32.gmra.mrb[0].mxu0 %v2015
  %v2103 = vpop.f32.mrb[0].mxu0
  %v2104 = vadd.f32 0.0, %v2103
  %v2105 = vpop.f32.mrb[0].mxu0
  %2106 = vdwg.mxu0
  %v2107 = vadd.f32 %v1589, %v2084
  %v2108 = vadd.f32 %v1589, %v2089
  %v2109 = vadd.f32 %v1589, %v2094
  %v2110 = vadd.f32 %v1589, %v2099
  %v2111 = vadd.f32 %v1589, %v2104
  %s2112 = scalar_lea.vmem [#allocation2], 136
  %v2113 = vld [vmem:[%s2112] sm:$0xff]
  %v2114 = vld [vmem:[%s2112 + $0x18] sm:$0xff]
  %v2115 = vld [vmem:[%s2112 + $0x30] sm:$0xff]
  %v2116 = vld [vmem:[%s2112 + $0x48] sm:$0xff]
  %v2117 = vld [vmem:[%s2112 + $0x60] sm:$0xff]
  %v2118 = vld [vmem:[%s1602] sm:$0xff]
  %v2119 = vld [vmem:[%s1602 + $0x8] sm:$0xff]
  %v2120 = vld [vmem:[%s1602 + $0x10] sm:$0xff]
  %v2122 = vsel %vm412, %v2113, 0
  %v2125 = vsel %vm412, %v2114, 0
  %v2128 = vsel %vm412, %v2115, 0
  %v2131 = vsel %vm412, %v2116, 0
  %v2134 = vsel %vm412, %v2117, 0
  %2136 = vmatprep.subr.mxu0 0.0
  %2137 = vmatpush1.msra.mxu0 %v2118
  %2138 = vmatprep.subr.mxu0 0.0
  %2139 = vmatpush1.msra.mxu0 %v2119
  %2140 = vmatprep.subr.mxu0 0.0
  %2141 = vmatpush1.msra.mxu0 %v2120
  %2142 = vmatprep.subr.mxu0 0.0
  %2143 = vmatpush1.msra.mxu0 0.0
  %2144 = vmatprep.subr.mxu0 0.0
  %2145 = vmatpush1.msra.mxu0 0.0
  %2146 = vmatprep.subr.mxu0 0.0
  %2147 = vmatpush1.msra.mxu0 0.0
  %2148 = vmatprep.subr.mxu0 0.0
  %2149 = vmatpush1.msra.mxu0 0.0
  %2150 = vmatprep.subr.mxu0 0.0
  %2151 = vmatpush1.msra.mxu0 0.0
  %2152 = vmatprep.subr.mxu0 0.0
  %2153 = vmatpush1.msra.mxu0 0.0
  %2154 = vmatprep.subr.mxu0 0.0
  %2155 = vmatpush1.msra.mxu0 0.0
  %2156 = vmatprep.subr.mxu0 0.0
  %2157 = vmatpush1.msra.mxu0 0.0
  %2158 = vmatprep.subr.mxu0 0.0
  %2159 = vmatpush1.msra.mxu0 0.0
  %2160 = vmatprep.subr.mxu0 0.0
  %2161 = vmatpush1.msra.mxu0 0.0
  %2162 = vmatprep.subr.mxu0 0.0
  %2163 = vmatpush1.msra.mxu0 0.0
  %2164 = vmatprep.subr.mxu0 0.0
  %2165 = vmatpush1.msra.mxu0 0.0
  %2166 = vmatprep.subr.mxu0 0.0
  %2167 = vmatpush1.msra.mxu0 0.0
  %2168 = vmatprep.subr.mxu0 0.0
  %2169 = vmatpush1.msra.mxu0 0.0
  %2170 = vmatprep.subr.mxu0 0.0
  %2171 = vmatpush1.msra.mxu0 0.0
  %2172 = vmatprep.subr.mxu0 0.0
  %2173 = vmatpush1.msra.mxu0 0.0
  %2174 = vmatprep.subr.mxu0 0.0
  %2175 = vmatpush1.msra.mxu0 0.0
  %2176 = vmatprep.subr.mxu0 0.0
  %2177 = vmatpush1.msra.mxu0 0.0
  %2178 = vmatprep.subr.mxu0 0.0
  %2179 = vmatpush1.msra.mxu0 0.0
  %2180 = vmatprep.subr.mxu0 0.0
  %2181 = vmatpush1.msra.mxu0 0.0
  %2182 = vmatprep.subr.mxu0 0.0
  %2183 = vmatpush1.msra.mxu0 0.0
  %2184 = vmatprep.subr.mxu0 0.0
  %2185 = vmatpush1.msra.mxu0 0.0
  %2186 = vmatprep.subr.mxu0 0.0
  %2187 = vmatpush1.msra.mxu0 0.0
  %2188 = vmatprep.subr.mxu0 0.0
  %2189 = vmatpush1.msra.mxu0 0.0
  %2190 = vmatprep.subr.mxu0 0.0
  %2191 = vmatpush1.msra.mxu0 0.0
  %2192 = vmatprep.subr.mxu0 0.0
  %2193 = vmatpush1.msra.mxu0 0.0
  %2194 = vmatprep.subr.mxu0 0.0
  %2195 = vmatpush1.msra.mxu0 0.0
  %2196 = vmatprep.subr.mxu0 0.0
  %2197 = vmatpush1.msra.mxu0 0.0
  %2198 = vmatprep.subr.mxu0 0.0
  %2199 = vmatpush1.msra.mxu0 0.0
  %2200 = vmatprep.mubr.f32.mxu0 0.0
  %2201 = vmatmul.mubr.f32.gmra.mrb[0].mxu0 %v2122
  %v2202 = vpop.f32.mrb[0].mxu0
  %v2203 = vadd.f32 0.0, %v2202
  %v2204 = vpop.f32.mrb[0].mxu0
  %2205 = vmatprep.mubr.f32.mxu0 0.0
  %2206 = vmatmul.mubr.f32.gmra.mrb[0].mxu0 %v2125
  %v2207 = vpop.f32.mrb[0].mxu0
  %v2208 = vadd.f32 0.0, %v2207
  %v2209 = vpop.f32.mrb[0].mxu0
  %2210 = vmatprep.mubr.f32.mxu0 0.0
  %2211 = vmatmul.mubr.f32.gmra.mrb[0].mxu0 %v2128
  %v2212 = vpop.f32.mrb[0].mxu0
  %v2213 = vadd.f32 0.0, %v2212
  %v2214 = vpop.f32.mrb[0].mxu0
  %2215 = vmatprep.mubr.f32.mxu0 0.0
  %2216 = vmatmul.mubr.f32.gmra.mrb[0].mxu0 %v2131
  %v2217 = vpop.f32.mrb[0].mxu0
  %v2218 = vadd.f32 0.0, %v2217
  %v2219 = vpop.f32.mrb[0].mxu0
  %2220 = vmatprep.mubr.f32.mxu0 0.0
  %2221 = vmatmul.mubr.f32.gmra.mrb[0].mxu0 %v2134
  %v2222 = vpop.f32.mrb[0].mxu0
  %v2223 = vadd.f32 0.0, %v2222
  %v2224 = vpop.f32.mrb[0].mxu0
  %2225 = vdwg.mxu0
  %v2226 = vadd.f32 %v2107, %v2203
  %v2227 = vadd.f32 %v2108, %v2208
  %v2228 = vadd.f32 %v2109, %v2213
  %v2229 = vadd.f32 %v2110, %v2218
  %v2230 = vadd.f32 %v2111, %v2223
  %v2232 = vsel %vm412, %v2226, 0
  %v2235 = vsel %vm412, %v2227, 0
  %v2238 = vsel %vm412, %v2228, 0
  %v2241 = vsel %vm412, %v2229, 0
  %v2244 = vsel %vm412, %v2230, 0
  %2246 = vmatprep.subr.mxu0 0.0
  %2247 = vmatpush1.xpose.msra.mxu0 %v1732
  %2248 = vmatprep.subr.mxu0 0.0
  %2249 = vmatpush1.xpose.msra.mxu0 %v1735
  %2250 = vmatprep.subr.mxu0 0.0
  %2251 = vmatpush1.xpose.msra.mxu0 0.0
  %2252 = vmatprep.subr.mxu0 0.0
  %2253 = vmatpush1.xpose.msra.mxu0 0.0
  %2254 = vmatprep.subr.mxu0 0.0
  %2255 = vmatpush1.xpose.msra.mxu0 0.0
  %2256 = vmatprep.subr.mxu0 0.0
  %2257 = vmatpush1.xpose.msra.mxu0 0.0
  %2258 = vmatprep.subr.mxu0 0.0
  %2259 = vmatpush1.xpose.msra.mxu0 0.0
  %2260 = vmatprep.subr.mxu0 0.0
  %2261 = vmatpush1.xpose.msra.mxu0 0.0
  %2262 = vmatprep.subr.mxu0 0.0
  %2263 = vmatpush1.xpose.msra.mxu0 0.0
  %2264 = vmatprep.subr.mxu0 0.0
  %2265 = vmatpush1.xpose.msra.mxu0 0.0
  %2266 = vmatprep.subr.mxu0 0.0
  %2267 = vmatpush1.xpose.msra.mxu0 0.0
  %2268 = vmatprep.subr.mxu0 0.0
  %2269 = vmatpush1.xpose.msra.mxu0 0.0
  %2270 = vmatprep.subr.mxu0 0.0
  %2271 = vmatpush1.xpose.msra.mxu0 0.0
  %2272 = vmatprep.subr.mxu0 0.0
  %2273 = vmatpush1.xpose.msra.mxu0 0.0
  %2274 = vmatprep.subr.mxu0 0.0
  %2275 = vmatpush1.xpose.msra.mxu0 0.0
  %2276 = vmatprep.subr.mxu0 0.0
  %2277 = vmatpush1.xpose.msra.mxu0 0.0
  %2278 = vmatprep.subr.mxu0 0.0
  %2279 = vmatpush1.xpose.msra.mxu0 0.0
  %2280 = vmatprep.subr.mxu0 0.0
  %2281 = vmatpush1.xpose.msra.mxu0 0.0
  %2282 = vmatprep.subr.mxu0 0.0
  %2283 = vmatpush1.xpose.msra.mxu0 0.0
  %2284 = vmatprep.subr.mxu0 0.0
  %2285 = vmatpush1.xpose.msra.mxu0 0.0
  %2286 = vmatprep.subr.mxu0 0.0
  %2287 = vmatpush1.xpose.msra.mxu0 0.0
  %2288 = vmatprep.subr.mxu0 0.0
  %2289 = vmatpush1.xpose.msra.mxu0 0.0
  %2290 = vmatprep.subr.mxu0 0.0
  %2291 = vmatpush1.xpose.msra.mxu0 0.0
  %2292 = vmatprep.subr.mxu0 0.0
  %2293 = vmatpush1.xpose.msra.mxu0 0.0
  %2294 = vmatprep.subr.mxu0 0.0
  %2295 = vmatpush1.xpose.msra.mxu0 0.0
  %2296 = vmatprep.subr.mxu0 0.0
  %2297 = vmatpush1.xpose.msra.mxu0 0.0
  %2298 = vmatprep.subr.mxu0 0.0
  %2299 = vmatpush1.xpose.msra.mxu0 0.0
  %2300 = vmatprep.subr.mxu0 0.0
  %2301 = vmatpush1.xpose.msra.mxu0 0.0
  %2302 = vmatprep.subr.mxu0 0.0
  %2303 = vmatpush1.xpose.msra.mxu0 0.0
  %2304 = vmatprep.subr.mxu0 0.0
  %2305 = vmatpush1.xpose.msra.mxu0 0.0
  %2306 = vmatprep.subr.mxu0 0.0
  %2307 = vmatpush1.xpose.msra.mxu0 0.0
  %2308 = vmatprep.subr.mxu0 0.0
  %2309 = vmatpush1.xpose.msra.mxu0 0.0
  %2310 = vmatprep.mubr.f32.mxu0 0.0
  %2311 = vmatmul.mubr.f32.gmra.mrb[0].mxu0 %v2232
  %v2312 = vpop.f32.mrb[0].mxu0
  %v2313 = vadd.f32 0.0, %v2312
  %v2314 = vpop.f32.mrb[0].mxu0
  %2315 = vmatprep.mubr.f32.mxu0 0.0
  %2316 = vmatmul.mubr.f32.gmra.mrb[0].mxu0 %v2235
  %v2317 = vpop.f32.mrb[0].mxu0
  %v2318 = vadd.f32 0.0, %v2317
  %v2319 = vpop.f32.mrb[0].mxu0
  %2320 = vmatprep.mubr.f32.mxu0 0.0
  %2321 = vmatmul.mubr.f32.gmra.mrb[0].mxu0 %v2238
  %v2322 = vpop.f32.mrb[0].mxu0
  %v2323 = vadd.f32 0.0, %v2322
  %v2324 = vpop.f32.mrb[0].mxu0
  %2325 = vmatprep.mubr.f32.mxu0 0.0
  %2326 = vmatmul.mubr.f32.gmra.mrb[0].mxu0 %v2241
  %v2327 = vpop.f32.mrb[0].mxu0
  %v2328 = vadd.f32 0.0, %v2327
  %v2329 = vpop.f32.mrb[0].mxu0
  %2330 = vmatprep.mubr.f32.mxu0 0.0
  %2331 = vmatmul.mubr.f32.gmra.mrb[0].mxu0 %v2244
  %v2332 = vpop.f32.mrb[0].mxu0
  %v2333 = vadd.f32 0.0, %v2332
  %v2334 = vpop.f32.mrb[0].mxu0
  %2335 = vdwg.mxu0
  %v2336 = vsel %vm737, %v2313, -inf
  %2337 = vmax.xlane.f32.xlu0 %v2336
  %v2338 = vpop.xlane.xlu0 %2337
  %v2339 = vsel %vm737, %v2318, -inf
  %2340 = vmax.xlane.f32.xlu0 %v2339
  %v2341 = vpop.xlane.xlu0 %2340
  %v2342 = vsel %vm737, %v2323, -inf
  %2343 = vmax.xlane.f32.xlu0 %v2342
  %v2344 = vpop.xlane.xlu0 %2343
  %v2345 = vsel %vm737, %v2328, -inf
  %2346 = vmax.xlane.f32.xlu0 %v2345
  %v2347 = vpop.xlane.xlu0 %2346
  %v2348 = vsel %vm737, %v2333, -inf
  %2349 = vmax.xlane.f32.xlu0 %v2348
  %v2350 = vpop.xlane.xlu0 %2349
  %v2351 = vsub.f32 %v2313, %v2338
  %v2352 = vsub.f32 %v2318, %v2341
  %v2353 = vsub.f32 %v2323, %v2344
  %v2354 = vsub.f32 %v2328, %v2347
  %v2355 = vsub.f32 %v2333, %v2350
  %v2356 = vmul.f32 %v2351, 1.442695
  %v2357 = vpow.pop %v2356
  %v2358 = vmul.f32 %v2352, 1.442695
  %v2359 = vpow.pop %v2358
  %v2360 = vmul.f32 %v2353, 1.442695
  %v2361 = vpow.pop %v2360
  %v2362 = vmul.f32 %v2354, 1.442695
  %v2363 = vpow.pop %v2362
  %v2364 = vmul.f32 %v2355, 1.442695
  %v2365 = vpow.pop %v2364
  %v2366 = vsel %vm737, %v2357, 0.0
  %2367 = vadd.xlane.f32.xlu0 %v2366
  %v2368 = vpop.xlane.xlu0 %2367
  %v2369 = vsel %vm737, %v2359, 0.0
  %2370 = vadd.xlane.f32.xlu0 %v2369
  %v2371 = vpop.xlane.xlu0 %2370
  %v2372 = vsel %vm737, %v2361, 0.0
  %2373 = vadd.xlane.f32.xlu0 %v2372
  %v2374 = vpop.xlane.xlu0 %2373
  %v2375 = vsel %vm737, %v2363, 0.0
  %2376 = vadd.xlane.f32.xlu0 %v2375
  %v2377 = vpop.xlane.xlu0 %2376
  %v2378 = vsel %vm737, %v2365, 0.0
  %2379 = vadd.xlane.f32.xlu0 %v2378
  %v2380 = vpop.xlane.xlu0 %2379
  %v2381 = vrcp.pop %v2368
  %v2382 = vrcp.pop %v2371
  %v2383 = vrcp.pop %v2374
  %v2384 = vrcp.pop %v2377
  %v2385 = vrcp.pop %v2380
  %v2386 = vmul.f32 %v2357, %v2381
  %v2387 = vmul.f32 %v2359, %v2382
  %v2388 = vmul.f32 %v2361, %v2383
  %v2389 = vmul.f32 %v2363, %v2384
  %v2390 = vmul.f32 %v2365, %v2385
  %v2392 = vsel %vm737, %v2386, 0
  %v2395 = vsel %vm737, %v2387, 0
  %v2398 = vsel %vm737, %v2388, 0
  %v2401 = vsel %vm737, %v2389, 0
  %v2404 = vsel %vm737, %v2390, 0
  %2406 = vmatprep.subr.mxu0 0.0
  %2407 = vmatpush1.msra.mxu0 %v1469
  %2408 = vmatprep.subr.mxu0 0.0
  %2409 = vmatpush1.msra.mxu0 %v1897
  %2410 = vmatprep.subr.mxu0 0.0
  %2411 = vmatpush1.msra.mxu0 0.0
  %2412 = vmatprep.subr.mxu0 0.0
  %2413 = vmatpush1.msra.mxu0 0.0
  %2414 = vmatprep.subr.mxu0 0.0
  %2415 = vmatpush1.msra.mxu0 0.0
  %2416 = vmatprep.subr.mxu0 0.0
  %2417 = vmatpush1.msra.mxu0 0.0
  %2418 = vmatprep.subr.mxu0 0.0
  %2419 = vmatpush1.msra.mxu0 0.0
  %2420 = vmatprep.subr.mxu0 0.0
  %2421 = vmatpush1.msra.mxu0 0.0
  %2422 = vmatprep.subr.mxu0 0.0
  %2423 = vmatpush1.msra.mxu0 0.0
  %2424 = vmatprep.subr.mxu0 0.0
  %2425 = vmatpush1.msra.mxu0 0.0
  %2426 = vmatprep.subr.mxu0 0.0
  %2427 = vmatpush1.msra.mxu0 0.0
  %2428 = vmatprep.subr.mxu0 0.0
  %2429 = vmatpush1.msra.mxu0 0.0
  %2430 = vmatprep.subr.mxu0 0.0
  %2431 = vmatpush1.msra.mxu0 0.0
  %2432 = vmatprep.subr.mxu0 0.0
  %2433 = vmatpush1.msra.mxu0 0.0
  %2434 = vmatprep.subr.mxu0 0.0
  %2435 = vmatpush1.msra.mxu0 0.0
  %2436 = vmatprep.subr.mxu0 0.0
  %2437 = vmatpush1.msra.mxu0 0.0
  %2438 = vmatprep.subr.mxu0 0.0
  %2439 = vmatpush1.msra.mxu0 0.0
  %2440 = vmatprep.subr.mxu0 0.0
  %2441 = vmatpush1.msra.mxu0 0.0
  %2442 = vmatprep.subr.mxu0 0.0
  %2443 = vmatpush1.msra.mxu0 0.0
  %2444 = vmatprep.subr.mxu0 0.0
  %2445 = vmatpush1.msra.mxu0 0.0
  %2446 = vmatprep.subr.mxu0 0.0
  %2447 = vmatpush1.msra.mxu0 0.0
  %2448 = vmatprep.subr.mxu0 0.0
  %2449 = vmatpush1.msra.mxu0 0.0
  %2450 = vmatprep.subr.mxu0 0.0
  %2451 = vmatpush1.msra.mxu0 0.0
  %2452 = vmatprep.subr.mxu0 0.0
  %2453 = vmatpush1.msra.mxu0 0.0
  %2454 = vmatprep.subr.mxu0 0.0
  %2455 = vmatpush1.msra.mxu0 0.0
  %2456 = vmatprep.subr.mxu0 0.0
  %2457 = vmatpush1.msra.mxu0 0.0
  %2458 = vmatprep.subr.mxu0 0.0
  %2459 = vmatpush1.msra.mxu0 0.0
  %2460 = vmatprep.subr.mxu0 0.0
  %2461 = vmatpush1.msra.mxu0 0.0
  %2462 = vmatprep.subr.mxu0 0.0
  %2463 = vmatpush1.msra.mxu0 0.0
  %2464 = vmatprep.subr.mxu0 0.0
  %2465 = vmatpush1.msra.mxu0 0.0
  %2466 = vmatprep.subr.mxu0 0.0
  %2467 = vmatpush1.msra.mxu0 0.0
  %2468 = vmatprep.subr.mxu0 0.0
  %2469 = vmatpush1.msra.mxu0 0.0
  %2470 = vmatprep.mubr.f32.mxu0 0.0
  %2471 = vmatmul.mubr.f32.gmra.mrb[0].mxu0 %v2392
  %v2472 = vpop.f32.mrb[0].mxu0
  %v2473 = vadd.f32 0.0, %v2472
  %v2474 = vpop.f32.mrb[0].mxu0
  %2475 = vmatprep.mubr.f32.mxu0 0.0
  %2476 = vmatmul.mubr.f32.gmra.mrb[0].mxu0 %v2395
  %v2477 = vpop.f32.mrb[0].mxu0
  %v2478 = vadd.f32 0.0, %v2477
  %v2479 = vpop.f32.mrb[0].mxu0
  %2480 = vmatprep.mubr.f32.mxu0 0.0
  %2481 = vmatmul.mubr.f32.gmra.mrb[0].mxu0 %v2398
  %v2482 = vpop.f32.mrb[0].mxu0
  %v2483 = vadd.f32 0.0, %v2482
  %v2484 = vpop.f32.mrb[0].mxu0
  %2485 = vmatprep.mubr.f32.mxu0 0.0
  %2486 = vmatmul.mubr.f32.gmra.mrb[0].mxu0 %v2401
  %v2487 = vpop.f32.mrb[0].mxu0
  %v2488 = vadd.f32 0.0, %v2487
  %v2489 = vpop.f32.mrb[0].mxu0
  %2490 = vmatprep.mubr.f32.mxu0 0.0
  %2491 = vmatmul.mubr.f32.gmra.mrb[0].mxu0 %v2404
  %v2492 = vpop.f32.mrb[0].mxu0
  %v2493 = vadd.f32 0.0, %v2492
  %v2494 = vpop.f32.mrb[0].mxu0
  %2495 = vdwg.mxu0
  %2496 = vst.msk [vmem:[#allocation3 + $0xc8] sm:$0xff] %vm412, %v2473
  %2497 = vst.msk [vmem:[#allocation3 + $0xd0] sm:$0xff] %vm412, %v2478
  %2498 = vst.msk [vmem:[#allocation3 + $0xd8] sm:$0xff] %vm412, %v2483
  %2499 = vst.msk [vmem:[#allocation3 + $0xe0] sm:$0xff] %vm412, %v2488
  %2500 = vst.msk [vmem:[#allocation3 + $0xe8] sm:$0xff] %vm412, %v2493
  %v2501 = vld [vmem:[%s11] sm:$0xff]
  %v2502 = vld [vmem:[%s11 + $0x8] sm:$0x3]
  %v2503 = vld [vmem:[%s10] sm:$0x1]
  %v2504 = vld [vmem:[#allocation2] sm:$0xff]
  %v2505 = vld [vmem:[#allocation2 + $0x20] sm:$0xff]
  %v2506 = vld [vmem:[#allocation2 + $0x40] sm:$0xff]
  %v2507 = vld [vmem:[#allocation2 + $0x60] sm:$0xff]
  %v2508 = vld [vmem:[%s9] sm:$0xff]
  %v2509 = vld [vmem:[%s9 + $0x8] sm:$0xff]
  %v2510 = vld [vmem:[%s9 + $0x10] sm:$0xff]
  %v2512 = vsel %vm412, %v2504, 0
  %v2515 = vsel %vm412, %v2505, 0
  %v2518 = vsel %vm412, %v2506, 0
  %v2521 = vsel %vm412, %v2507, 0
  %2523 = vmatprep.subr.mxu0 0.0
  %2524 = vmatpush1.msra.mxu0 %v2508
  %2525 = vmatprep.subr.mxu0 0.0
  %2526 = vmatpush1.msra.mxu0 %v2509
  %2527 = vmatprep.subr.mxu0 0.0
  %2528 = vmatpush1.msra.mxu0 %v2510
  %2529 = vmatprep.subr.mxu0 0.0
  %2530 = vmatpush1.msra.mxu0 0.0
  %2531 = vmatprep.subr.mxu0 0.0
  %2532 = vmatpush1.msra.mxu0 0.0
  %2533 = vmatprep.subr.mxu0 0.0
  %2534 = vmatpush1.msra.mxu0 0.0
  %2535 = vmatprep.subr.mxu0 0.0
  %2536 = vmatpush1.msra.mxu0 0.0
  %2537 = vmatprep.subr.mxu0 0.0
  %2538 = vmatpush1.msra.mxu0 0.0
  %2539 = vmatprep.subr.mxu0 0.0
  %2540 = vmatpush1.msra.mxu0 0.0
  %2541 = vmatprep.subr.mxu0 0.0
  %2542 = vmatpush1.msra.mxu0 0.0
  %2543 = vmatprep.subr.mxu0 0.0
  %2544 = vmatpush1.msra.mxu0 0.0
  %2545 = vmatprep.subr.mxu0 0.0
  %2546 = vmatpush1.msra.mxu0 0.0
  %2547 = vmatprep.subr.mxu0 0.0
  %2548 = vmatpush1.msra.mxu0 0.0
  %2549 = vmatprep.subr.mxu0 0.0
  %2550 = vmatpush1.msra.mxu0 0.0
  %2551 = vmatprep.subr.mxu0 0.0
  %2552 = vmatpush1.msra.mxu0 0.0
  %2553 = vmatprep.subr.mxu0 0.0
  %2554 = vmatpush1.msra.mxu0 0.0
  %2555 = vmatprep.subr.mxu0 0.0
  %2556 = vmatpush1.msra.mxu0 0.0
  %2557 = vmatprep.subr.mxu0 0.0
  %2558 = vmatpush1.msra.mxu0 0.0
  %2559 = vmatprep.subr.mxu0 0.0
  %2560 = vmatpush1.msra.mxu0 0.0
  %2561 = vmatprep.subr.mxu0 0.0
  %2562 = vmatpush1.msra.mxu0 0.0
  %2563 = vmatprep.subr.mxu0 0.0
  %2564 = vmatpush1.msra.mxu0 0.0
  %2565 = vmatprep.subr.mxu0 0.0
  %2566 = vmatpush1.msra.mxu0 0.0
  %2567 = vmatprep.subr.mxu0 0.0
  %2568 = vmatpush1.msra.mxu0 0.0
  %2569 = vmatprep.subr.mxu0 0.0
  %2570 = vmatpush1.msra.mxu0 0.0
  %2571 = vmatprep.subr.mxu0 0.0
  %2572 = vmatpush1.msra.mxu0 0.0
  %2573 = vmatprep.subr.mxu0 0.0
  %2574 = vmatpush1.msra.mxu0 0.0
  %2575 = vmatprep.subr.mxu0 0.0
  %2576 = vmatpush1.msra.mxu0 0.0
  %2577 = vmatprep.subr.mxu0 0.0
  %2578 = vmatpush1.msra.mxu0 0.0
  %2579 = vmatprep.subr.mxu0 0.0
  %2580 = vmatpush1.msra.mxu0 0.0
  %2581 = vmatprep.subr.mxu0 0.0
  %2582 = vmatpush1.msra.mxu0 0.0
  %2583 = vmatprep.subr.mxu0 0.0
  %2584 = vmatpush1.msra.mxu0 0.0
  %2585 = vmatprep.subr.mxu0 0.0
  %2586 = vmatpush1.msra.mxu0 0.0
  %2587 = vmatprep.mubr.f32.mxu0 0.0
  %2588 = vmatmul.mubr.f32.gmra.mrb[0].mxu0 %v2512
  %v2589 = vpop.f32.mrb[0].mxu0
  %v2590 = vadd.f32 0.0, %v2589
  %v2591 = vpop.f32.mrb[0].mxu0
  %2592 = vmatprep.mubr.f32.mxu0 0.0
  %2593 = vmatmul.mubr.f32.gmra.mrb[0].mxu0 %v2515
  %v2594 = vpop.f32.mrb[0].mxu0
  %v2595 = vadd.f32 0.0, %v2594
  %v2596 = vpop.f32.mrb[0].mxu0
  %2597 = vmatprep.mubr.f32.mxu0 0.0
  %2598 = vmatmul.mubr.f32.gmra.mrb[0].mxu0 %v2518
  %v2599 = vpop.f32.mrb[0].mxu0
  %v2600 = vadd.f32 0.0, %v2599
  %v2601 = vpop.f32.mrb[0].mxu0
  %2602 = vmatprep.mubr.f32.mxu0 0.0
  %2603 = vmatmul.mubr.f32.gmra.mrb[0].mxu0 %v2521
  %v2604 = vpop.f32.mrb[0].mxu0
  %v2605 = vadd.f32 0.0, %v2604
  %v2606 = vpop.f32.mrb[0].mxu0
  %2607 = vdwg.mxu0
  %v2609 = vlaneseq
  %v2610 = vshrl.u32 %v2609, 7
  %v2611 = vsub.s32 0, %v2610
  %v2612 = vrot.slane %v2503, %v2611
  %v2614 = vadd.f32 %v2612, %v2590
  %v2615 = vadd.f32 %v2612, %v2595
  %v2616 = vadd.f32 %v2612, %v2600
  %v2617 = vadd.f32 %v2612, %v2605
  %v2618 = vld [vmem:[%s1596] sm:$0xff]
  %v2619 = vld [vmem:[%s1596 + $0x20] sm:$0xff]
  %v2620 = vld [vmem:[%s1596 + $0x40] sm:$0xff]
  %v2621 = vld [vmem:[%s1596 + $0x60] sm:$0xff]
  %s2622 = scalar_lea.vmem %s9, 24
  %v2623 = vld [vmem:[%s2622] sm:$0xff]
  %v2624 = vld [vmem:[%s2622 + $0x8] sm:$0xff]
  %v2625 = vld [vmem:[%s2622 + $0x10] sm:$0xff]
  %v2627 = vsel %vm412, %v2618, 0
  %v2630 = vsel %vm412, %v2619, 0
  %v2633 = vsel %vm412, %v2620, 0
  %v2636 = vsel %vm412, %v2621, 0
  %2638 = vmatprep.subr.mxu0 0.0
  %2639 = vmatpush1.msra.mxu0 %v2623
  %2640 = vmatprep.subr.mxu0 0.0
  %2641 = vmatpush1.msra.mxu0 %v2624
  %2642 = vmatprep.subr.mxu0 0.0
  %2643 = vmatpush1.msra.mxu0 %v2625
  %2644 = vmatprep.subr.mxu0 0.0
  %2645 = vmatpush1.msra.mxu0 0.0
  %2646 = vmatprep.subr.mxu0 0.0
  %2647 = vmatpush1.msra.mxu0 0.0
  %2648 = vmatprep.subr.mxu0 0.0
  %2649 = vmatpush1.msra.mxu0 0.0
  %2650 = vmatprep.subr.mxu0 0.0
  %2651 = vmatpush1.msra.mxu0 0.0
  %2652 = vmatprep.subr.mxu0 0.0
  %2653 = vmatpush1.msra.mxu0 0.0
  %2654 = vmatprep.subr.mxu0 0.0
  %2655 = vmatpush1.msra.mxu0 0.0
  %2656 = vmatprep.subr.mxu0 0.0
  %2657 = vmatpush1.msra.mxu0 0.0
  %2658 = vmatprep.subr.mxu0 0.0
  %2659 = vmatpush1.msra.mxu0 0.0
  %2660 = vmatprep.subr.mxu0 0.0
  %2661 = vmatpush1.msra.mxu0 0.0
  %2662 = vmatprep.subr.mxu0 0.0
  %2663 = vmatpush1.msra.mxu0 0.0
  %2664 = vmatprep.subr.mxu0 0.0
  %2665 = vmatpush1.msra.mxu0 0.0
  %2666 = vmatprep.subr.mxu0 0.0
  %2667 = vmatpush1.msra.mxu0 0.0
  %2668 = vmatprep.subr.mxu0 0.0
  %2669 = vmatpush1.msra.mxu0 0.0
  %2670 = vmatprep.subr.mxu0 0.0
  %2671 = vmatpush1.msra.mxu0 0.0
  %2672 = vmatprep.subr.mxu0 0.0
  %2673 = vmatpush1.msra.mxu0 0.0
  %2674 = vmatprep.subr.mxu0 0.0
  %2675 = vmatpush1.msra.mxu0 0.0
  %2676 = vmatprep.subr.mxu0 0.0
  %2677 = vmatpush1.msra.mxu0 0.0
  %2678 = vmatprep.subr.mxu0 0.0
  %2679 = vmatpush1.msra.mxu0 0.0
  %2680 = vmatprep.subr.mxu0 0.0
  %2681 = vmatpush1.msra.mxu0 0.0
  %2682 = vmatprep.subr.mxu0 0.0
  %2683 = vmatpush1.msra.mxu0 0.0
  %2684 = vmatprep.subr.mxu0 0.0
  %2685 = vmatpush1.msra.mxu0 0.0
  %2686 = vmatprep.subr.mxu0 0.0
  %2687 = vmatpush1.msra.mxu0 0.0
  %2688 = vmatprep.subr.mxu0 0.0
  %2689 = vmatpush1.msra.mxu0 0.0
  %2690 = vmatprep.subr.mxu0 0.0
  %2691 = vmatpush1.msra.mxu0 0.0
  %2692 = vmatprep.subr.mxu0 0.0
  %2693 = vmatpush1.msra.mxu0 0.0
  %2694 = vmatprep.subr.mxu0 0.0
  %2695 = vmatpush1.msra.mxu0 0.0
  %2696 = vmatprep.subr.mxu0 0.0
  %2697 = vmatpush1.msra.mxu0 0.0
  %2698 = vmatprep.subr.mxu0 0.0
  %2699 = vmatpush1.msra.mxu0 0.0
  %2700 = vmatprep.subr.mxu0 0.0
  %2701 = vmatpush1.msra.mxu0 0.0
  %2702 = vmatprep.mubr.f32.mxu0 0.0
  %2703 = vmatmul.mubr.f32.gmra.mrb[0].mxu0 %v2627
  %v2704 = vpop.f32.mrb[0].mxu0
  %v2705 = vadd.f32 0.0, %v2704
  %v2706 = vpop.f32.mrb[0].mxu0
  %2707 = vmatprep.mubr.f32.mxu0 0.0
  %2708 = vmatmul.mubr.f32.gmra.mrb[0].mxu0 %v2630
  %v2709 = vpop.f32.mrb[0].mxu0
  %v2710 = vadd.f32 0.0, %v2709
  %v2711 = vpop.f32.mrb[0].mxu0
  %2712 = vmatprep.mubr.f32.mxu0 0.0
  %2713 = vmatmul.mubr.f32.gmra.mrb[0].mxu0 %v2633
  %v2714 = vpop.f32.mrb[0].mxu0
  %v2715 = vadd.f32 0.0, %v2714
  %v2716 = vpop.f32.mrb[0].mxu0
  %2717 = vmatprep.mubr.f32.mxu0 0.0
  %2718 = vmatmul.mubr.f32.gmra.mrb[0].mxu0 %v2636
  %v2719 = vpop.f32.mrb[0].mxu0
  %v2720 = vadd.f32 0.0, %v2719
  %v2721 = vpop.f32.mrb[0].mxu0
  %2722 = vdwg.mxu0
  %v2723 = vadd.f32 %v2614, %v2705
  %v2724 = vadd.f32 %v2615, %v2710
  %v2725 = vadd.f32 %v2616, %v2715
  %v2726 = vadd.f32 %v2617, %v2720
  %s2727 = scalar_lea.vmem [#allocation2], 16
  %v2728 = vld [vmem:[%s2727] sm:$0xff]
  %v2729 = vld [vmem:[%s2727 + $0x20] sm:$0xff]
  %v2730 = vld [vmem:[%s2727 + $0x40] sm:$0xff]
  %v2731 = vld [vmem:[%s2727 + $0x60] sm:$0xff]
  %s2732 = scalar_lea.vmem %s9, 48
  %v2733 = vld [vmem:[%s2732] sm:$0xff]
  %v2734 = vld [vmem:[%s2732 + $0x8] sm:$0xff]
  %v2735 = vld [vmem:[%s2732 + $0x10] sm:$0xff]
  %v2737 = vsel %vm412, %v2728, 0
  %v2740 = vsel %vm412, %v2729, 0
  %v2743 = vsel %vm412, %v2730, 0
  %v2746 = vsel %vm412, %v2731, 0
  %2748 = vmatprep.subr.mxu0 0.0
  %2749 = vmatpush1.msra.mxu0 %v2733
  %2750 = vmatprep.subr.mxu0 0.0
  %2751 = vmatpush1.msra.mxu0 %v2734
  %2752 = vmatprep.subr.mxu0 0.0
  %2753 = vmatpush1.msra.mxu0 %v2735
  %2754 = vmatprep.subr.mxu0 0.0
  %2755 = vmatpush1.msra.mxu0 0.0
  %2756 = vmatprep.subr.mxu0 0.0
  %2757 = vmatpush1.msra.mxu0 0.0
  %2758 = vmatprep.subr.mxu0 0.0
  %2759 = vmatpush1.msra.mxu0 0.0
  %2760 = vmatprep.subr.mxu0 0.0
  %2761 = vmatpush1.msra.mxu0 0.0
  %2762 = vmatprep.subr.mxu0 0.0
  %2763 = vmatpush1.msra.mxu0 0.0
  %2764 = vmatprep.subr.mxu0 0.0
  %2765 = vmatpush1.msra.mxu0 0.0
  %2766 = vmatprep.subr.mxu0 0.0
  %2767 = vmatpush1.msra.mxu0 0.0
  %2768 = vmatprep.subr.mxu0 0.0
  %2769 = vmatpush1.msra.mxu0 0.0
  %2770 = vmatprep.subr.mxu0 0.0
  %2771 = vmatpush1.msra.mxu0 0.0
  %2772 = vmatprep.subr.mxu0 0.0
  %2773 = vmatpush1.msra.mxu0 0.0
  %2774 = vmatprep.subr.mxu0 0.0
  %2775 = vmatpush1.msra.mxu0 0.0
  %2776 = vmatprep.subr.mxu0 0.0
  %2777 = vmatpush1.msra.mxu0 0.0
  %2778 = vmatprep.subr.mxu0 0.0
  %2779 = vmatpush1.msra.mxu0 0.0
  %2780 = vmatprep.subr.mxu0 0.0
  %2781 = vmatpush1.msra.mxu0 0.0
  %2782 = vmatprep.subr.mxu0 0.0
  %2783 = vmatpush1.msra.mxu0 0.0
  %2784 = vmatprep.subr.mxu0 0.0
  %2785 = vmatpush1.msra.mxu0 0.0
  %2786 = vmatprep.subr.mxu0 0.0
  %2787 = vmatpush1.msra.mxu0 0.0
  %2788 = vmatprep.subr.mxu0 0.0
  %2789 = vmatpush1.msra.mxu0 0.0
  %2790 = vmatprep.subr.mxu0 0.0
  %2791 = vmatpush1.msra.mxu0 0.0
  %2792 = vmatprep.subr.mxu0 0.0
  %2793 = vmatpush1.msra.mxu0 0.0
  %2794 = vmatprep.subr.mxu0 0.0
  %2795 = vmatpush1.msra.mxu0 0.0
  %2796 = vmatprep.subr.mxu0 0.0
  %2797 = vmatpush1.msra.mxu0 0.0
  %2798 = vmatprep.subr.mxu0 0.0
  %2799 = vmatpush1.msra.mxu0 0.0
  %2800 = vmatprep.subr.mxu0 0.0
  %2801 = vmatpush1.msra.mxu0 0.0
  %2802 = vmatprep.subr.mxu0 0.0
  %2803 = vmatpush1.msra.mxu0 0.0
  %2804 = vmatprep.subr.mxu0 0.0
  %2805 = vmatpush1.msra.mxu0 0.0
  %2806 = vmatprep.subr.mxu0 0.0
  %2807 = vmatpush1.msra.mxu0 0.0
  %2808 = vmatprep.subr.mxu0 0.0
  %2809 = vmatpush1.msra.mxu0 0.0
  %2810 = vmatprep.subr.mxu0 0.0
  %2811 = vmatpush1.msra.mxu0 0.0
  %2812 = vmatprep.mubr.f32.mxu0 0.0
  %2813 = vmatmul.mubr.f32.gmra.mrb[0].mxu0 %v2737
  %v2814 = vpop.f32.mrb[0].mxu0
  %v2815 = vadd.f32 0.0, %v2814
  %v2816 = vpop.f32.mrb[0].mxu0
  %2817 = vmatprep.mubr.f32.mxu0 0.0
  %2818 = vmatmul.mubr.f32.gmra.mrb[0].mxu0 %v2740
  %v2819 = vpop.f32.mrb[0].mxu0
  %v2820 = vadd.f32 0.0, %v2819
  %v2821 = vpop.f32.mrb[0].mxu0
  %2822 = vmatprep.mubr.f32.mxu0 0.0
  %2823 = vmatmul.mubr.f32.gmra.mrb[0].mxu0 %v2743
  %v2824 = vpop.f32.mrb[0].mxu0
  %v2825 = vadd.f32 0.0, %v2824
  %v2826 = vpop.f32.mrb[0].mxu0
  %2827 = vmatprep.mubr.f32.mxu0 0.0
  %2828 = vmatmul.mubr.f32.gmra.mrb[0].mxu0 %v2746
  %v2829 = vpop.f32.mrb[0].mxu0
  %v2830 = vadd.f32 0.0, %v2829
  %v2831 = vpop.f32.mrb[0].mxu0
  %2832 = vdwg.mxu0
  %v2833 = vadd.f32 %v2723, %v2815
  %v2834 = vadd.f32 %v2724, %v2820
  %v2835 = vadd.f32 %v2725, %v2825
  %v2836 = vadd.f32 %v2726, %v2830
  %v2838 = vsel %vm412, %v2833, 0
  %v2841 = vsel %vm412, %v2834, 0
  %v2844 = vsel %vm412, %v2835, 0
  %v2847 = vsel %vm412, %v2836, 0
  %v2850 = vsel %vm412, %v2501, 0
  %v2853 = vsel %vm412, %v2502, 0
  %2855 = vmatprep.subr.mxu0 0.0
  %2856 = vmatpush1.xpose.msra.mxu0 %v2850
  %2857 = vmatprep.subr.mxu0 0.0
  %2858 = vmatpush1.xpose.msra.mxu0 %v2853
  %2859 = vmatprep.subr.mxu0 0.0
  %2860 = vmatpush1.xpose.msra.mxu0 0.0
  %2861 = vmatprep.subr.mxu0 0.0
  %2862 = vmatpush1.xpose.msra.mxu0 0.0
  %2863 = vmatprep.subr.mxu0 0.0
  %2864 = vmatpush1.xpose.msra.mxu0 0.0
  %2865 = vmatprep.subr.mxu0 0.0
  %2866 = vmatpush1.xpose.msra.mxu0 0.0
  %2867 = vmatprep.subr.mxu0 0.0
  %2868 = vmatpush1.xpose.msra.mxu0 0.0
  %2869 = vmatprep.subr.mxu0 0.0
  %2870 = vmatpush1.xpose.msra.mxu0 0.0
  %2871 = vmatprep.subr.mxu0 0.0
  %2872 = vmatpush1.xpose.msra.mxu0 0.0
  %2873 = vmatprep.subr.mxu0 0.0
  %2874 = vmatpush1.xpose.msra.mxu0 0.0
  %2875 = vmatprep.subr.mxu0 0.0
  %2876 = vmatpush1.xpose.msra.mxu0 0.0
  %2877 = vmatprep.subr.mxu0 0.0
  %2878 = vmatpush1.xpose.msra.mxu0 0.0
  %2879 = vmatprep.subr.mxu0 0.0
  %2880 = vmatpush1.xpose.msra.mxu0 0.0
  %2881 = vmatprep.subr.mxu0 0.0
  %2882 = vmatpush1.xpose.msra.mxu0 0.0
  %2883 = vmatprep.subr.mxu0 0.0
  %2884 = vmatpush1.xpose.msra.mxu0 0.0
  %2885 = vmatprep.subr.mxu0 0.0
  %2886 = vmatpush1.xpose.msra.mxu0 0.0
  %2887 = vmatprep.subr.mxu0 0.0
  %2888 = vmatpush1.xpose.msra.mxu0 0.0
  %2889 = vmatprep.subr.mxu0 0.0
  %2890 = vmatpush1.xpose.msra.mxu0 0.0
  %2891 = vmatprep.subr.mxu0 0.0
  %2892 = vmatpush1.xpose.msra.mxu0 0.0
  %2893 = vmatprep.subr.mxu0 0.0
  %2894 = vmatpush1.xpose.msra.mxu0 0.0
  %2895 = vmatprep.subr.mxu0 0.0
  %2896 = vmatpush1.xpose.msra.mxu0 0.0
  %2897 = vmatprep.subr.mxu0 0.0
  %2898 = vmatpush1.xpose.msra.mxu0 0.0
  %2899 = vmatprep.subr.mxu0 0.0
  %2900 = vmatpush1.xpose.msra.mxu0 0.0
  %2901 = vmatprep.subr.mxu0 0.0
  %2902 = vmatpush1.xpose.msra.mxu0 0.0
  %2903 = vmatprep.subr.mxu0 0.0
  %2904 = vmatpush1.xpose.msra.mxu0 0.0
  %2905 = vmatprep.subr.mxu0 0.0
  %2906 = vmatpush1.xpose.msra.mxu0 0.0
  %2907 = vmatprep.subr.mxu0 0.0
  %2908 = vmatpush1.xpose.msra.mxu0 0.0
  %2909 = vmatprep.subr.mxu0 0.0
  %2910 = vmatpush1.xpose.msra.mxu0 0.0
  %2911 = vmatprep.subr.mxu0 0.0
  %2912 = vmatpush1.xpose.msra.mxu0 0.0
  %2913 = vmatprep.subr.mxu0 0.0
  %2914 = vmatpush1.xpose.msra.mxu0 0.0
  %2915 = vmatprep.subr.mxu0 0.0
  %2916 = vmatpush1.xpose.msra.mxu0 0.0
  %2917 = vmatprep.subr.mxu0 0.0
  %2918 = vmatpush1.xpose.msra.mxu0 0.0
  %2919 = vmatprep.mubr.f32.mxu0 0.0
  %2920 = vmatmul.mubr.f32.gmra.mrb[0].mxu0 %v2838
  %v2921 = vpop.f32.mrb[0].mxu0
  %v2922 = vadd.f32 0.0, %v2921
  %v2923 = vpop.f32.mrb[0].mxu0
  %2924 = vmatprep.mubr.f32.mxu0 0.0
  %2925 = vmatmul.mubr.f32.gmra.mrb[0].mxu0 %v2841
  %v2926 = vpop.f32.mrb[0].mxu0
  %v2927 = vadd.f32 0.0, %v2926
  %v2928 = vpop.f32.mrb[0].mxu0
  %2929 = vmatprep.mubr.f32.mxu0 0.0
  %2930 = vmatmul.mubr.f32.gmra.mrb[0].mxu0 %v2844
  %v2931 = vpop.f32.mrb[0].mxu0
  %v2932 = vadd.f32 0.0, %v2931
  %v2933 = vpop.f32.mrb[0].mxu0
  %2934 = vmatprep.mubr.f32.mxu0 0.0
  %2935 = vmatmul.mubr.f32.gmra.mrb[0].mxu0 %v2847
  %v2936 = vpop.f32.mrb[0].mxu0
  %v2937 = vadd.f32 0.0, %v2936
  %v2938 = vpop.f32.mrb[0].mxu0
  %2939 = vdwg.mxu0
  %v2940 = vsel %vm737, %v2922, -inf
  %2941 = vmax.xlane.f32.xlu0 %v2940
  %v2942 = vpop.xlane.xlu0 %2941
  %v2943 = vsel %vm737, %v2927, -inf
  %2944 = vmax.xlane.f32.xlu0 %v2943
  %v2945 = vpop.xlane.xlu0 %2944
  %v2946 = vsel %vm737, %v2932, -inf
  %2947 = vmax.xlane.f32.xlu0 %v2946
  %v2948 = vpop.xlane.xlu0 %2947
  %v2949 = vsel %vm737, %v2937, -inf
  %2950 = vmax.xlane.f32.xlu0 %v2949
  %v2951 = vpop.xlane.xlu0 %2950
  %v2952 = vsub.f32 %v2922, %v2942
  %v2953 = vsub.f32 %v2927, %v2945
  %v2954 = vsub.f32 %v2932, %v2948
  %v2955 = vsub.f32 %v2937, %v2951
  %v2956 = vmul.f32 %v2952, 1.442695
  %v2957 = vpow.pop %v2956
  %v2958 = vmul.f32 %v2953, 1.442695
  %v2959 = vpow.pop %v2958
  %v2960 = vmul.f32 %v2954, 1.442695
  %v2961 = vpow.pop %v2960
  %v2962 = vmul.f32 %v2955, 1.442695
  %v2963 = vpow.pop %v2962
  %v2964 = vsel %vm737, %v2957, 0.0
  %2965 = vadd.xlane.f32.xlu0 %v2964
  %v2966 = vpop.xlane.xlu0 %2965
  %v2967 = vsel %vm737, %v2959, 0.0
  %2968 = vadd.xlane.f32.xlu0 %v2967
  %v2969 = vpop.xlane.xlu0 %2968
  %v2970 = vsel %vm737, %v2961, 0.0
  %2971 = vadd.xlane.f32.xlu0 %v2970
  %v2972 = vpop.xlane.xlu0 %2971
  %v2973 = vsel %vm737, %v2963, 0.0
  %2974 = vadd.xlane.f32.xlu0 %v2973
  %v2975 = vpop.xlane.xlu0 %2974
  %v2976 = vrcp.pop %v2966
  %v2977 = vrcp.pop %v2969
  %v2978 = vrcp.pop %v2972
  %v2979 = vrcp.pop %v2975
  %v2980 = vmul.f32 %v2957, %v2976
  %v2981 = vmul.f32 %v2959, %v2977
  %v2982 = vmul.f32 %v2961, %v2978
  %v2983 = vmul.f32 %v2963, %v2979
  %v2985 = vsel %vm737, %v2980, 0
  %v2988 = vsel %vm737, %v2981, 0
  %v2991 = vsel %vm737, %v2982, 0
  %v2994 = vsel %vm737, %v2983, 0
  %v2996 = vsel %vm850, %v2502, 0
  %2998 = vmatprep.subr.mxu0 0.0
  %2999 = vmatpush1.msra.mxu0 %v2501
  %3000 = vmatprep.subr.mxu0 0.0
  %3001 = vmatpush1.msra.mxu0 %v2996
  %3002 = vmatprep.subr.mxu0 0.0
  %3003 = vmatpush1.msra.mxu0 0.0
  %3004 = vmatprep.subr.mxu0 0.0
  %3005 = vmatpush1.msra.mxu0 0.0
  %3006 = vmatprep.subr.mxu0 0.0
  %3007 = vmatpush1.msra.mxu0 0.0
  %3008 = vmatprep.subr.mxu0 0.0
  %3009 = vmatpush1.msra.mxu0 0.0
  %3010 = vmatprep.subr.mxu0 0.0
  %3011 = vmatpush1.msra.mxu0 0.0
  %3012 = vmatprep.subr.mxu0 0.0
  %3013 = vmatpush1.msra.mxu0 0.0
  %3014 = vmatprep.subr.mxu0 0.0
  %3015 = vmatpush1.msra.mxu0 0.0
  %3016 = vmatprep.subr.mxu0 0.0
  %3017 = vmatpush1.msra.mxu0 0.0
  %3018 = vmatprep.subr.mxu0 0.0
  %3019 = vmatpush1.msra.mxu0 0.0
  %3020 = vmatprep.subr.mxu0 0.0
  %3021 = vmatpush1.msra.mxu0 0.0
  %3022 = vmatprep.subr.mxu0 0.0
  %3023 = vmatpush1.msra.mxu0 0.0
  %3024 = vmatprep.subr.mxu0 0.0
  %3025 = vmatpush1.msra.mxu0 0.0
  %3026 = vmatprep.subr.mxu0 0.0
  %3027 = vmatpush1.msra.mxu0 0.0
  %3028 = vmatprep.subr.mxu0 0.0
  %3029 = vmatpush1.msra.mxu0 0.0
  %3030 = vmatprep.subr.mxu0 0.0
  %3031 = vmatpush1.msra.mxu0 0.0
  %3032 = vmatprep.subr.mxu0 0.0
  %3033 = vmatpush1.msra.mxu0 0.0
  %3034 = vmatprep.subr.mxu0 0.0
  %3035 = vmatpush1.msra.mxu0 0.0
  %3036 = vmatprep.subr.mxu0 0.0
  %3037 = vmatpush1.msra.mxu0 0.0
  %3038 = vmatprep.subr.mxu0 0.0
  %3039 = vmatpush1.msra.mxu0 0.0
  %3040 = vmatprep.subr.mxu0 0.0
  %3041 = vmatpush1.msra.mxu0 0.0
  %3042 = vmatprep.subr.mxu0 0.0
  %3043 = vmatpush1.msra.mxu0 0.0
  %3044 = vmatprep.subr.mxu0 0.0
  %3045 = vmatpush1.msra.mxu0 0.0
  %3046 = vmatprep.subr.mxu0 0.0
  %3047 = vmatpush1.msra.mxu0 0.0
  %3048 = vmatprep.subr.mxu0 0.0
  %3049 = vmatpush1.msra.mxu0 0.0
  %3050 = vmatprep.subr.mxu0 0.0
  %3051 = vmatpush1.msra.mxu0 0.0
  %3052 = vmatprep.subr.mxu0 0.0
  %3053 = vmatpush1.msra.mxu0 0.0
  %3054 = vmatprep.subr.mxu0 0.0
  %3055 = vmatpush1.msra.mxu0 0.0
  %3056 = vmatprep.subr.mxu0 0.0
  %3057 = vmatpush1.msra.mxu0 0.0
  %3058 = vmatprep.subr.mxu0 0.0
  %3059 = vmatpush1.msra.mxu0 0.0
  %3060 = vmatprep.subr.mxu0 0.0
  %3061 = vmatpush1.msra.mxu0 0.0
  %3062 = vmatprep.mubr.f32.mxu0 0.0
  %3063 = vmatmul.mubr.f32.gmra.mrb[0].mxu0 %v2985
  %v3064 = vpop.f32.mrb[0].mxu0
  %v3065 = vadd.f32 0.0, %v3064
  %v3066 = vpop.f32.mrb[0].mxu0
  %3067 = vmatprep.mubr.f32.mxu0 0.0
  %3068 = vmatmul.mubr.f32.gmra.mrb[0].mxu0 %v2988
  %v3069 = vpop.f32.mrb[0].mxu0
  %v3070 = vadd.f32 0.0, %v3069
  %v3071 = vpop.f32.mrb[0].mxu0
  %3072 = vmatprep.mubr.f32.mxu0 0.0
  %3073 = vmatmul.mubr.f32.gmra.mrb[0].mxu0 %v2991
  %v3074 = vpop.f32.mrb[0].mxu0
  %v3075 = vadd.f32 0.0, %v3074
  %v3076 = vpop.f32.mrb[0].mxu0
  %3077 = vmatprep.mubr.f32.mxu0 0.0
  %3078 = vmatmul.mubr.f32.gmra.mrb[0].mxu0 %v2994
  %v3079 = vpop.f32.mrb[0].mxu0
  %v3080 = vadd.f32 0.0, %v3079
  %v3081 = vpop.f32.mrb[0].mxu0
  %3082 = vdwg.mxu0
  %3083 = vst.msk [vmem:[#allocation3 + $0x68] sm:$0xff] %vm412, %v3065
  %3084 = vst.msk [vmem:[#allocation3 + $0x70] sm:$0xff] %vm412, %v3070
  %3085 = vst.msk [vmem:[#allocation3 + $0x78] sm:$0xff] %vm412, %v3075
  %3086 = vst.msk [vmem:[#allocation3 + $0x80] sm:$0xff] %vm412, %v3080
  %v3087 = vld [vmem:[%s966] sm:$0xff]
  %v3088 = vld [vmem:[%s966 + $0x20] sm:$0xff]
  %v3089 = vld [vmem:[%s966 + $0x40] sm:$0xff]
  %v3090 = vld [vmem:[%s966 + $0x60] sm:$0xff]
  %v3091 = vld [vmem:[%s9] sm:$0xff]
  %v3092 = vld [vmem:[%s9 + $0x8] sm:$0xff]
  %v3093 = vld [vmem:[%s9 + $0x10] sm:$0xff]
  %v3095 = vsel %vm412, %v3087, 0
  %v3098 = vsel %vm412, %v3088, 0
  %v3101 = vsel %vm412, %v3089, 0
  %v3104 = vsel %vm412, %v3090, 0
  %3106 = vmatprep.subr.mxu0 0.0
  %3107 = vmatpush1.msra.mxu0 %v3091
  %3108 = vmatprep.subr.mxu0 0.0
  %3109 = vmatpush1.msra.mxu0 %v3092
  %3110 = vmatprep.subr.mxu0 0.0
  %3111 = vmatpush1.msra.mxu0 %v3093
  %3112 = vmatprep.subr.mxu0 0.0
  %3113 = vmatpush1.msra.mxu0 0.0
  %3114 = vmatprep.subr.mxu0 0.0
  %3115 = vmatpush1.msra.mxu0 0.0
  %3116 = vmatprep.subr.mxu0 0.0
  %3117 = vmatpush1.msra.mxu0 0.0
  %3118 = vmatprep.subr.mxu0 0.0
  %3119 = vmatpush1.msra.mxu0 0.0
  %3120 = vmatprep.subr.mxu0 0.0
  %3121 = vmatpush1.msra.mxu0 0.0
  %3122 = vmatprep.subr.mxu0 0.0
  %3123 = vmatpush1.msra.mxu0 0.0
  %3124 = vmatprep.subr.mxu0 0.0
  %3125 = vmatpush1.msra.mxu0 0.0
  %3126 = vmatprep.subr.mxu0 0.0
  %3127 = vmatpush1.msra.mxu0 0.0
  %3128 = vmatprep.subr.mxu0 0.0
  %3129 = vmatpush1.msra.mxu0 0.0
  %3130 = vmatprep.subr.mxu0 0.0
  %3131 = vmatpush1.msra.mxu0 0.0
  %3132 = vmatprep.subr.mxu0 0.0
  %3133 = vmatpush1.msra.mxu0 0.0
  %3134 = vmatprep.subr.mxu0 0.0
  %3135 = vmatpush1.msra.mxu0 0.0
  %3136 = vmatprep.subr.mxu0 0.0
  %3137 = vmatpush1.msra.mxu0 0.0
  %3138 = vmatprep.subr.mxu0 0.0
  %3139 = vmatpush1.msra.mxu0 0.0
  %3140 = vmatprep.subr.mxu0 0.0
  %3141 = vmatpush1.msra.mxu0 0.0
  %3142 = vmatprep.subr.mxu0 0.0
  %3143 = vmatpush1.msra.mxu0 0.0
  %3144 = vmatprep.subr.mxu0 0.0
  %3145 = vmatpush1.msra.mxu0 0.0
  %3146 = vmatprep.subr.mxu0 0.0
  %3147 = vmatpush1.msra.mxu0 0.0
  %3148 = vmatprep.subr.mxu0 0.0
  %3149 = vmatpush1.msra.mxu0 0.0
  %3150 = vmatprep.subr.mxu0 0.0
  %3151 = vmatpush1.msra.mxu0 0.0
  %3152 = vmatprep.subr.mxu0 0.0
  %3153 = vmatpush1.msra.mxu0 0.0
  %3154 = vmatprep.subr.mxu0 0.0
  %3155 = vmatpush1.msra.mxu0 0.0
  %3156 = vmatprep.subr.mxu0 0.0
  %3157 = vmatpush1.msra.mxu0 0.0
  %3158 = vmatprep.subr.mxu0 0.0
  %3159 = vmatpush1.msra.mxu0 0.0
  %3160 = vmatprep.subr.mxu0 0.0
  %3161 = vmatpush1.msra.mxu0 0.0
  %3162 = vmatprep.subr.mxu0 0.0
  %3163 = vmatpush1.msra.mxu0 0.0
  %3164 = vmatprep.subr.mxu0 0.0
  %3165 = vmatpush1.msra.mxu0 0.0
  %3166 = vmatprep.subr.mxu0 0.0
  %3167 = vmatpush1.msra.mxu0 0.0
  %3168 = vmatprep.subr.mxu0 0.0
  %3169 = vmatpush1.msra.mxu0 0.0
  %3170 = vmatprep.mubr.f32.mxu0 0.0
  %3171 = vmatmul.mubr.f32.gmra.mrb[0].mxu0 %v3095
  %v3172 = vpop.f32.mrb[0].mxu0
  %v3173 = vadd.f32 0.0, %v3172
  %v3174 = vpop.f32.mrb[0].mxu0
  %3175 = vmatprep.mubr.f32.mxu0 0.0
  %3176 = vmatmul.mubr.f32.gmra.mrb[0].mxu0 %v3098
  %v3177 = vpop.f32.mrb[0].mxu0
  %v3178 = vadd.f32 0.0, %v3177
  %v3179 = vpop.f32.mrb[0].mxu0
  %3180 = vmatprep.mubr.f32.mxu0 0.0
  %3181 = vmatmul.mubr.f32.gmra.mrb[0].mxu0 %v3101
  %v3182 = vpop.f32.mrb[0].mxu0
  %v3183 = vadd.f32 0.0, %v3182
  %v3184 = vpop.f32.mrb[0].mxu0
  %3185 = vmatprep.mubr.f32.mxu0 0.0
  %3186 = vmatmul.mubr.f32.gmra.mrb[0].mxu0 %v3104
  %v3187 = vpop.f32.mrb[0].mxu0
  %v3188 = vadd.f32 0.0, %v3187
  %v3189 = vpop.f32.mrb[0].mxu0
  %3190 = vdwg.mxu0
  %v3191 = vadd.f32 %v2612, %v3173
  %v3192 = vadd.f32 %v2612, %v3178
  %v3193 = vadd.f32 %v2612, %v3183
  %v3194 = vadd.f32 %v2612, %v3188
  %v3195 = vld [vmem:[%s2112] sm:$0xff]
  %v3196 = vld [vmem:[%s2112 + $0x20] sm:$0xff]
  %v3197 = vld [vmem:[%s2112 + $0x40] sm:$0xff]
  %v3198 = vld [vmem:[%s2112 + $0x60] sm:$0xff]
  %v3199 = vld [vmem:[%s2622] sm:$0xff]
  %v3200 = vld [vmem:[%s2622 + $0x8] sm:$0xff]
  %v3201 = vld [vmem:[%s2622 + $0x10] sm:$0xff]
  %v3203 = vsel %vm412, %v3195, 0
  %v3206 = vsel %vm412, %v3196, 0
  %v3209 = vsel %vm412, %v3197, 0
  %v3212 = vsel %vm412, %v3198, 0
  %3214 = vmatprep.subr.mxu0 0.0
  %3215 = vmatpush1.msra.mxu0 %v3199
  %3216 = vmatprep.subr.mxu0 0.0
  %3217 = vmatpush1.msra.mxu0 %v3200
  %3218 = vmatprep.subr.mxu0 0.0
  %3219 = vmatpush1.msra.mxu0 %v3201
  %3220 = vmatprep.subr.mxu0 0.0
  %3221 = vmatpush1.msra.mxu0 0.0
  %3222 = vmatprep.subr.mxu0 0.0
  %3223 = vmatpush1.msra.mxu0 0.0
  %3224 = vmatprep.subr.mxu0 0.0
  %3225 = vmatpush1.msra.mxu0 0.0
  %3226 = vmatprep.subr.mxu0 0.0
  %3227 = vmatpush1.msra.mxu0 0.0
  %3228 = vmatprep.subr.mxu0 0.0
  %3229 = vmatpush1.msra.mxu0 0.0
  %3230 = vmatprep.subr.mxu0 0.0
  %3231 = vmatpush1.msra.mxu0 0.0
  %3232 = vmatprep.subr.mxu0 0.0
  %3233 = vmatpush1.msra.mxu0 0.0
  %3234 = vmatprep.subr.mxu0 0.0
  %3235 = vmatpush1.msra.mxu0 0.0
  %3236 = vmatprep.subr.mxu0 0.0
  %3237 = vmatpush1.msra.mxu0 0.0
  %3238 = vmatprep.subr.mxu0 0.0
  %3239 = vmatpush1.msra.mxu0 0.0
  %3240 = vmatprep.subr.mxu0 0.0
  %3241 = vmatpush1.msra.mxu0 0.0
  %3242 = vmatprep.subr.mxu0 0.0
  %3243 = vmatpush1.msra.mxu0 0.0
  %3244 = vmatprep.subr.mxu0 0.0
  %3245 = vmatpush1.msra.mxu0 0.0
  %3246 = vmatprep.subr.mxu0 0.0
  %3247 = vmatpush1.msra.mxu0 0.0
  %3248 = vmatprep.subr.mxu0 0.0
  %3249 = vmatpush1.msra.mxu0 0.0
  %3250 = vmatprep.subr.mxu0 0.0
  %3251 = vmatpush1.msra.mxu0 0.0
  %3252 = vmatprep.subr.mxu0 0.0
  %3253 = vmatpush1.msra.mxu0 0.0
  %3254 = vmatprep.subr.mxu0 0.0
  %3255 = vmatpush1.msra.mxu0 0.0
  %3256 = vmatprep.subr.mxu0 0.0
  %3257 = vmatpush1.msra.mxu0 0.0
  %3258 = vmatprep.subr.mxu0 0.0
  %3259 = vmatpush1.msra.mxu0 0.0
  %3260 = vmatprep.subr.mxu0 0.0
  %3261 = vmatpush1.msra.mxu0 0.0
  %3262 = vmatprep.subr.mxu0 0.0
  %3263 = vmatpush1.msra.mxu0 0.0
  %3264 = vmatprep.subr.mxu0 0.0
  %3265 = vmatpush1.msra.mxu0 0.0
  %3266 = vmatprep.subr.mxu0 0.0
  %3267 = vmatpush1.msra.mxu0 0.0
  %3268 = vmatprep.subr.mxu0 0.0
  %3269 = vmatpush1.msra.mxu0 0.0
  %3270 = vmatprep.subr.mxu0 0.0
  %3271 = vmatpush1.msra.mxu0 0.0
  %3272 = vmatprep.subr.mxu0 0.0
  %3273 = vmatpush1.msra.mxu0 0.0
  %3274 = vmatprep.subr.mxu0 0.0
  %3275 = vmatpush1.msra.mxu0 0.0
  %3276 = vmatprep.subr.mxu0 0.0
  %3277 = vmatpush1.msra.mxu0 0.0
  %3278 = vmatprep.mubr.f32.mxu0 0.0
  %3279 = vmatmul.mubr.f32.gmra.mrb[0].mxu0 %v3203
  %v3280 = vpop.f32.mrb[0].mxu0
  %v3281 = vadd.f32 0.0, %v3280
  %v3282 = vpop.f32.mrb[0].mxu0
  %3283 = vmatprep.mubr.f32.mxu0 0.0
  %3284 = vmatmul.mubr.f32.gmra.mrb[0].mxu0 %v3206
  %v3285 = vpop.f32.mrb[0].mxu0
  %v3286 = vadd.f32 0.0, %v3285
  %v3287 = vpop.f32.mrb[0].mxu0
  %3288 = vmatprep.mubr.f32.mxu0 0.0
  %3289 = vmatmul.mubr.f32.gmra.mrb[0].mxu0 %v3209
  %v3290 = vpop.f32.mrb[0].mxu0
  %v3291 = vadd.f32 0.0, %v3290
  %v3292 = vpop.f32.mrb[0].mxu0
  %3293 = vmatprep.mubr.f32.mxu0 0.0
  %3294 = vmatmul.mubr.f32.gmra.mrb[0].mxu0 %v3212
  %v3295 = vpop.f32.mrb[0].mxu0
  %v3296 = vadd.f32 0.0, %v3295
  %v3297 = vpop.f32.mrb[0].mxu0
  %3298 = vdwg.mxu0
  %v3299 = vadd.f32 %v3191, %v3281
  %v3300 = vadd.f32 %v3192, %v3286
  %v3301 = vadd.f32 %v3193, %v3291
  %v3302 = vadd.f32 %v3194, %v3296
  %s3303 = scalar_lea.vmem [#allocation2], 144
  %v3304 = vld [vmem:[%s3303] sm:$0xff]
  %v3305 = vld [vmem:[%s3303 + $0x20] sm:$0xff]
  %v3306 = vld [vmem:[%s3303 + $0x40] sm:$0xff]
  %v3307 = vld [vmem:[%s3303 + $0x60] sm:$0xff]
  %v3308 = vld [vmem:[%s2732] sm:$0xff]
  %v3309 = vld [vmem:[%s2732 + $0x8] sm:$0xff]
  %v3310 = vld [vmem:[%s2732 + $0x10] sm:$0xff]
  %v3312 = vsel %vm412, %v3304, 0
  %v3315 = vsel %vm412, %v3305, 0
  %v3318 = vsel %vm412, %v3306, 0
  %v3321 = vsel %vm412, %v3307, 0
  %3323 = vmatprep.subr.mxu0 0.0
  %3324 = vmatpush1.msra.mxu0 %v3308
  %3325 = vmatprep.subr.mxu0 0.0
  %3326 = vmatpush1.msra.mxu0 %v3309
  %3327 = vmatprep.subr.mxu0 0.0
  %3328 = vmatpush1.msra.mxu0 %v3310
  %3329 = vmatprep.subr.mxu0 0.0
  %3330 = vmatpush1.msra.mxu0 0.0
  %3331 = vmatprep.subr.mxu0 0.0
  %3332 = vmatpush1.msra.mxu0 0.0
  %3333 = vmatprep.subr.mxu0 0.0
  %3334 = vmatpush1.msra.mxu0 0.0
  %3335 = vmatprep.subr.mxu0 0.0
  %3336 = vmatpush1.msra.mxu0 0.0
  %3337 = vmatprep.subr.mxu0 0.0
  %3338 = vmatpush1.msra.mxu0 0.0
  %3339 = vmatprep.subr.mxu0 0.0
  %3340 = vmatpush1.msra.mxu0 0.0
  %3341 = vmatprep.subr.mxu0 0.0
  %3342 = vmatpush1.msra.mxu0 0.0
  %3343 = vmatprep.subr.mxu0 0.0
  %3344 = vmatpush1.msra.mxu0 0.0
  %3345 = vmatprep.subr.mxu0 0.0
  %3346 = vmatpush1.msra.mxu0 0.0
  %3347 = vmatprep.subr.mxu0 0.0
  %3348 = vmatpush1.msra.mxu0 0.0
  %3349 = vmatprep.subr.mxu0 0.0
  %3350 = vmatpush1.msra.mxu0 0.0
  %3351 = vmatprep.subr.mxu0 0.0
  %3352 = vmatpush1.msra.mxu0 0.0
  %3353 = vmatprep.subr.mxu0 0.0
  %3354 = vmatpush1.msra.mxu0 0.0
  %3355 = vmatprep.subr.mxu0 0.0
  %3356 = vmatpush1.msra.mxu0 0.0
  %3357 = vmatprep.subr.mxu0 0.0
  %3358 = vmatpush1.msra.mxu0 0.0
  %3359 = vmatprep.subr.mxu0 0.0
  %3360 = vmatpush1.msra.mxu0 0.0
  %3361 = vmatprep.subr.mxu0 0.0
  %3362 = vmatpush1.msra.mxu0 0.0
  %3363 = vmatprep.subr.mxu0 0.0
  %3364 = vmatpush1.msra.mxu0 0.0
  %3365 = vmatprep.subr.mxu0 0.0
  %3366 = vmatpush1.msra.mxu0 0.0
  %3367 = vmatprep.subr.mxu0 0.0
  %3368 = vmatpush1.msra.mxu0 0.0
  %3369 = vmatprep.subr.mxu0 0.0
  %3370 = vmatpush1.msra.mxu0 0.0
  %3371 = vmatprep.subr.mxu0 0.0
  %3372 = vmatpush1.msra.mxu0 0.0
  %3373 = vmatprep.subr.mxu0 0.0
  %3374 = vmatpush1.msra.mxu0 0.0
  %3375 = vmatprep.subr.mxu0 0.0
  %3376 = vmatpush1.msra.mxu0 0.0
  %3377 = vmatprep.subr.mxu0 0.0
  %3378 = vmatpush1.msra.mxu0 0.0
  %3379 = vmatprep.subr.mxu0 0.0
  %3380 = vmatpush1.msra.mxu0 0.0
  %3381 = vmatprep.subr.mxu0 0.0
  %3382 = vmatpush1.msra.mxu0 0.0
  %3383 = vmatprep.subr.mxu0 0.0
  %3384 = vmatpush1.msra.mxu0 0.0
  %3385 = vmatprep.subr.mxu0 0.0
  %3386 = vmatpush1.msra.mxu0 0.0
  %3387 = vmatprep.mubr.f32.mxu0 0.0
  %3388 = vmatmul.mubr.f32.gmra.mrb[0].mxu0 %v3312
  %v3389 = vpop.f32.mrb[0].mxu0
  %v3390 = vadd.f32 0.0, %v3389
  %v3391 = vpop.f32.mrb[0].mxu0
  %3392 = vmatprep.mubr.f32.mxu0 0.0
  %3393 = vmatmul.mubr.f32.gmra.mrb[0].mxu0 %v3315
  %v3394 = vpop.f32.mrb[0].mxu0
  %v3395 = vadd.f32 0.0, %v3394
  %v3396 = vpop.f32.mrb[0].mxu0
  %3397 = vmatprep.mubr.f32.mxu0 0.0
  %3398 = vmatmul.mubr.f32.gmra.mrb[0].mxu0 %v3318
  %v3399 = vpop.f32.mrb[0].mxu0
  %v3400 = vadd.f32 0.0, %v3399
  %v3401 = vpop.f32.mrb[0].mxu0
  %3402 = vmatprep.mubr.f32.mxu0 0.0
  %3403 = vmatmul.mubr.f32.gmra.mrb[0].mxu0 %v3321
  %v3404 = vpop.f32.mrb[0].mxu0
  %v3405 = vadd.f32 0.0, %v3404
  %v3406 = vpop.f32.mrb[0].mxu0
  %3407 = vdwg.mxu0
  %v3408 = vadd.f32 %v3299, %v3390
  %v3409 = vadd.f32 %v3300, %v3395
  %v3410 = vadd.f32 %v3301, %v3400
  %v3411 = vadd.f32 %v3302, %v3405
  %v3413 = vsel %vm412, %v3408, 0
  %v3416 = vsel %vm412, %v3409, 0
  %v3419 = vsel %vm412, %v3410, 0
  %v3422 = vsel %vm412, %v3411, 0
  %3424 = vmatprep.subr.mxu0 0.0
  %3425 = vmatpush1.xpose.msra.mxu0 %v2850
  %3426 = vmatprep.subr.mxu0 0.0
  %3427 = vmatpush1.xpose.msra.mxu0 %v2853
  %3428 = vmatprep.subr.mxu0 0.0
  %3429 = vmatpush1.xpose.msra.mxu0 0.0
  %3430 = vmatprep.subr.mxu0 0.0
  %3431 = vmatpush1.xpose.msra.mxu0 0.0
  %3432 = vmatprep.subr.mxu0 0.0
  %3433 = vmatpush1.xpose.msra.mxu0 0.0
  %3434 = vmatprep.subr.mxu0 0.0
  %3435 = vmatpush1.xpose.msra.mxu0 0.0
  %3436 = vmatprep.subr.mxu0 0.0
  %3437 = vmatpush1.xpose.msra.mxu0 0.0
  %3438 = vmatprep.subr.mxu0 0.0
  %3439 = vmatpush1.xpose.msra.mxu0 0.0
  %3440 = vmatprep.subr.mxu0 0.0
  %3441 = vmatpush1.xpose.msra.mxu0 0.0
  %3442 = vmatprep.subr.mxu0 0.0
  %3443 = vmatpush1.xpose.msra.mxu0 0.0
  %3444 = vmatprep.subr.mxu0 0.0
  %3445 = vmatpush1.xpose.msra.mxu0 0.0
  %3446 = vmatprep.subr.mxu0 0.0
  %3447 = vmatpush1.xpose.msra.mxu0 0.0
  %3448 = vmatprep.subr.mxu0 0.0
  %3449 = vmatpush1.xpose.msra.mxu0 0.0
  %3450 = vmatprep.subr.mxu0 0.0
  %3451 = vmatpush1.xpose.msra.mxu0 0.0
  %3452 = vmatprep.subr.mxu0 0.0
  %3453 = vmatpush1.xpose.msra.mxu0 0.0
  %3454 = vmatprep.subr.mxu0 0.0
  %3455 = vmatpush1.xpose.msra.mxu0 0.0
  %3456 = vmatprep.subr.mxu0 0.0
  %3457 = vmatpush1.xpose.msra.mxu0 0.0
  %3458 = vmatprep.subr.mxu0 0.0
  %3459 = vmatpush1.xpose.msra.mxu0 0.0
  %3460 = vmatprep.subr.mxu0 0.0
  %3461 = vmatpush1.xpose.msra.mxu0 0.0
  %3462 = vmatprep.subr.mxu0 0.0
  %3463 = vmatpush1.xpose.msra.mxu0 0.0
  %3464 = vmatprep.subr.mxu0 0.0
  %3465 = vmatpush1.xpose.msra.mxu0 0.0
  %3466 = vmatprep.subr.mxu0 0.0
  %3467 = vmatpush1.xpose.msra.mxu0 0.0
  %3468 = vmatprep.subr.mxu0 0.0
  %3469 = vmatpush1.xpose.msra.mxu0 0.0
  %3470 = vmatprep.subr.mxu0 0.0
  %3471 = vmatpush1.xpose.msra.mxu0 0.0
  %3472 = vmatprep.subr.mxu0 0.0
  %3473 = vmatpush1.xpose.msra.mxu0 0.0
  %3474 = vmatprep.subr.mxu0 0.0
  %3475 = vmatpush1.xpose.msra.mxu0 0.0
  %3476 = vmatprep.subr.mxu0 0.0
  %3477 = vmatpush1.xpose.msra.mxu0 0.0
  %3478 = vmatprep.subr.mxu0 0.0
  %3479 = vmatpush1.xpose.msra.mxu0 0.0
  %3480 = vmatprep.subr.mxu0 0.0
  %3481 = vmatpush1.xpose.msra.mxu0 0.0
  %3482 = vmatprep.subr.mxu0 0.0
  %3483 = vmatpush1.xpose.msra.mxu0 0.0
  %3484 = vmatprep.subr.mxu0 0.0
  %3485 = vmatpush1.xpose.msra.mxu0 0.0
  %3486 = vmatprep.subr.mxu0 0.0
  %3487 = vmatpush1.xpose.msra.mxu0 0.0
  %3488 = vmatprep.mubr.f32.mxu0 0.0
  %3489 = vmatmul.mubr.f32.gmra.mrb[0].mxu0 %v3413
  %v3490 = vpop.f32.mrb[0].mxu0
  %v3491 = vadd.f32 0.0, %v3490
  %v3492 = vpop.f32.mrb[0].mxu0
  %3493 = vmatprep.mubr.f32.mxu0 0.0
  %3494 = vmatmul.mubr.f32.gmra.mrb[0].mxu0 %v3416
  %v3495 = vpop.f32.mrb[0].mxu0
  %v3496 = vadd.f32 0.0, %v3495
  %v3497 = vpop.f32.mrb[0].mxu0
  %3498 = vmatprep.mubr.f32.mxu0 0.0
  %3499 = vmatmul.mubr.f32.gmra.mrb[0].mxu0 %v3419
  %v3500 = vpop.f32.mrb[0].mxu0
  %v3501 = vadd.f32 0.0, %v3500
  %v3502 = vpop.f32.mrb[0].mxu0
  %3503 = vmatprep.mubr.f32.mxu0 0.0
  %3504 = vmatmul.mubr.f32.gmra.mrb[0].mxu0 %v3422
  %v3505 = vpop.f32.mrb[0].mxu0
  %v3506 = vadd.f32 0.0, %v3505
  %v3507 = vpop.f32.mrb[0].mxu0
  %3508 = vdwg.mxu0
  %v3509 = vsel %vm737, %v3491, -inf
  %3510 = vmax.xlane.f32.xlu0 %v3509
  %v3511 = vpop.xlane.xlu0 %3510
  %v3512 = vsel %vm737, %v3496, -inf
  %3513 = vmax.xlane.f32.xlu0 %v3512
  %v3514 = vpop.xlane.xlu0 %3513
  %v3515 = vsel %vm737, %v3501, -inf
  %3516 = vmax.xlane.f32.xlu0 %v3515
  %v3517 = vpop.xlane.xlu0 %3516
  %v3518 = vsel %vm737, %v3506, -inf
  %3519 = vmax.xlane.f32.xlu0 %v3518
  %v3520 = vpop.xlane.xlu0 %3519
  %v3521 = vsub.f32 %v3491, %v3511
  %v3522 = vsub.f32 %v3496, %v3514
  %v3523 = vsub.f32 %v3501, %v3517
  %v3524 = vsub.f32 %v3506, %v3520
  %v3525 = vmul.f32 %v3521, 1.442695
  %v3526 = vpow.pop %v3525
  %v3527 = vmul.f32 %v3522, 1.442695
  %v3528 = vpow.pop %v3527
  %v3529 = vmul.f32 %v3523, 1.442695
  %v3530 = vpow.pop %v3529
  %v3531 = vmul.f32 %v3524, 1.442695
  %v3532 = vpow.pop %v3531
  %v3533 = vsel %vm737, %v3526, 0.0
  %3534 = vadd.xlane.f32.xlu0 %v3533
  %v3535 = vpop.xlane.xlu0 %3534
  %v3536 = vsel %vm737, %v3528, 0.0
  %3537 = vadd.xlane.f32.xlu0 %v3536
  %v3538 = vpop.xlane.xlu0 %3537
  %v3539 = vsel %vm737, %v3530, 0.0
  %3540 = vadd.xlane.f32.xlu0 %v3539
  %v3541 = vpop.xlane.xlu0 %3540
  %v3542 = vsel %vm737, %v3532, 0.0
  %3543 = vadd.xlane.f32.xlu0 %v3542
  %v3544 = vpop.xlane.xlu0 %3543
  %v3545 = vrcp.pop %v3535
  %v3546 = vrcp.pop %v3538
  %v3547 = vrcp.pop %v3541
  %v3548 = vrcp.pop %v3544
  %v3549 = vmul.f32 %v3526, %v3545
  %v3550 = vmul.f32 %v3528, %v3546
  %v3551 = vmul.f32 %v3530, %v3547
  %v3552 = vmul.f32 %v3532, %v3548
  %v3554 = vsel %vm737, %v3549, 0
  %v3557 = vsel %vm737, %v3550, 0
  %v3560 = vsel %vm737, %v3551, 0
  %v3563 = vsel %vm737, %v3552, 0
  %3565 = vmatprep.subr.mxu0 0.0
  %3566 = vmatpush1.msra.mxu0 %v2501
  %3567 = vmatprep.subr.mxu0 0.0
  %3568 = vmatpush1.msra.mxu0 %v2996
  %3569 = vmatprep.subr.mxu0 0.0
  %3570 = vmatpush1.msra.mxu0 0.0
  %3571 = vmatprep.subr.mxu0 0.0
  %3572 = vmatpush1.msra.mxu0 0.0
  %3573 = vmatprep.subr.mxu0 0.0
  %3574 = vmatpush1.msra.mxu0 0.0
  %3575 = vmatprep.subr.mxu0 0.0
  %3576 = vmatpush1.msra.mxu0 0.0
  %3577 = vmatprep.subr.mxu0 0.0
  %3578 = vmatpush1.msra.mxu0 0.0
  %3579 = vmatprep.subr.mxu0 0.0
  %3580 = vmatpush1.msra.mxu0 0.0
  %3581 = vmatprep.subr.mxu0 0.0
  %3582 = vmatpush1.msra.mxu0 0.0
  %3583 = vmatprep.subr.mxu0 0.0
  %3584 = vmatpush1.msra.mxu0 0.0
  %3585 = vmatprep.subr.mxu0 0.0
  %3586 = vmatpush1.msra.mxu0 0.0
  %3587 = vmatprep.subr.mxu0 0.0
  %3588 = vmatpush1.msra.mxu0 0.0
  %3589 = vmatprep.subr.mxu0 0.0
  %3590 = vmatpush1.msra.mxu0 0.0
  %3591 = vmatprep.subr.mxu0 0.0
  %3592 = vmatpush1.msra.mxu0 0.0
  %3593 = vmatprep.subr.mxu0 0.0
  %3594 = vmatpush1.msra.mxu0 0.0
  %3595 = vmatprep.subr.mxu0 0.0
  %3596 = vmatpush1.msra.mxu0 0.0
  %3597 = vmatprep.subr.mxu0 0.0
  %3598 = vmatpush1.msra.mxu0 0.0
  %3599 = vmatprep.subr.mxu0 0.0
  %3600 = vmatpush1.msra.mxu0 0.0
  %3601 = vmatprep.subr.mxu0 0.0
  %3602 = vmatpush1.msra.mxu0 0.0
  %3603 = vmatprep.subr.mxu0 0.0
  %3604 = vmatpush1.msra.mxu0 0.0
  %3605 = vmatprep.subr.mxu0 0.0
  %3606 = vmatpush1.msra.mxu0 0.0
  %3607 = vmatprep.subr.mxu0 0.0
  %3608 = vmatpush1.msra.mxu0 0.0
  %3609 = vmatprep.subr.mxu0 0.0
  %3610 = vmatpush1.msra.mxu0 0.0
  %3611 = vmatprep.subr.mxu0 0.0
  %3612 = vmatpush1.msra.mxu0 0.0
  %3613 = vmatprep.subr.mxu0 0.0
  %3614 = vmatpush1.msra.mxu0 0.0
  %3615 = vmatprep.subr.mxu0 0.0
  %3616 = vmatpush1.msra.mxu0 0.0
  %3617 = vmatprep.subr.mxu0 0.0
  %3618 = vmatpush1.msra.mxu0 0.0
  %3619 = vmatprep.subr.mxu0 0.0
  %3620 = vmatpush1.msra.mxu0 0.0
  %3621 = vmatprep.subr.mxu0 0.0
  %3622 = vmatpush1.msra.mxu0 0.0
  %3623 = vmatprep.subr.mxu0 0.0
  %3624 = vmatpush1.msra.mxu0 0.0
  %3625 = vmatprep.subr.mxu0 0.0
  %3626 = vmatpush1.msra.mxu0 0.0
  %3627 = vmatprep.subr.mxu0 0.0
  %3628 = vmatpush1.msra.mxu0 0.0
  %3629 = vmatprep.mubr.f32.mxu0 0.0
  %3630 = vmatmul.mubr.f32.gmra.mrb[0].mxu0 %v3554
  %v3631 = vpop.f32.mrb[0].mxu0
  %v3632 = vadd.f32 0.0, %v3631
  %v3633 = vpop.f32.mrb[0].mxu0
  %3634 = vmatprep.mubr.f32.mxu0 0.0
  %3635 = vmatmul.mubr.f32.gmra.mrb[0].mxu0 %v3557
  %v3636 = vpop.f32.mrb[0].mxu0
  %v3637 = vadd.f32 0.0, %v3636
  %v3638 = vpop.f32.mrb[0].mxu0
  %3639 = vmatprep.mubr.f32.mxu0 0.0
  %3640 = vmatmul.mubr.f32.gmra.mrb[0].mxu0 %v3560
  %v3641 = vpop.f32.mrb[0].mxu0
  %v3642 = vadd.f32 0.0, %v3641
  %v3643 = vpop.f32.mrb[0].mxu0
  %3644 = vmatprep.mubr.f32.mxu0 0.0
  %3645 = vmatmul.mubr.f32.gmra.mrb[0].mxu0 %v3563
  %v3646 = vpop.f32.mrb[0].mxu0
  %v3647 = vadd.f32 0.0, %v3646
  %v3648 = vpop.f32.mrb[0].mxu0
  %3649 = vdwg.mxu0
  %3650 = vst.msk [vmem:[#allocation3 + $0xf0] sm:$0xff] %vm412, %v3632
  %3651 = vst.msk [vmem:[#allocation3 + $0xf8] sm:$0xff] %vm412, %v3637
  %3652 = vst.msk [vmem:[#allocation3 + $0x100] sm:$0xff] %vm412, %v3642
  %3653 = vst.msk [vmem:[#allocation3 + $0x108] sm:$0xff] %vm412, %v3647
  %v3654 = vld [vmem:[#allocation3] sm:$0xff]
  %v3655 = vld [vmem:[#allocation3 + $0x8] sm:$0xff]
  %v3656 = vld [vmem:[#allocation3 + $0x10] sm:$0xff]
  %v3657 = vld [vmem:[#allocation3 + $0x18] sm:$0xff]
  %v3658 = vld [vmem:[#allocation3 + $0x20] sm:$0xff]
  %v3659 = vld [vmem:[#allocation3 + $0x28] sm:$0xff]
  %v3660 = vld [vmem:[#allocation3 + $0x30] sm:$0xff]
  %v3661 = vld [vmem:[#allocation3 + $0x38] sm:$0xff]
  %v3662 = vld [vmem:[#allocation3 + $0x40] sm:$0xff]
  %v3663 = vld [vmem:[#allocation3 + $0x48] sm:$0xff]
  %v3664 = vld [vmem:[#allocation3 + $0x50] sm:$0xff]
  %v3665 = vld [vmem:[#allocation3 + $0x58] sm:$0xff]
  %v3666 = vld [vmem:[#allocation3 + $0x60] sm:$0xff]
  %v3667 = vld [vmem:[#allocation3 + $0x68] sm:$0xff]
  %v3668 = vld [vmem:[#allocation3 + $0x70] sm:$0xff]
  %v3669 = vld [vmem:[#allocation3 + $0x78] sm:$0xff]
  %v3670 = vld [vmem:[#allocation3 + $0x80] sm:$0xff]
  %v3671 = vld [vmem:[#allocation3 + $0x88] sm:$0xff]
  %v3672 = vld [vmem:[#allocation3 + $0x90] sm:$0xff]
  %v3673 = vld [vmem:[#allocation3 + $0x98] sm:$0xff]
  %v3674 = vld [vmem:[#allocation3 + $0xa0] sm:$0xff]
  %v3675 = vld [vmem:[#allocation3 + $0xa8] sm:$0xff]
  %v3676 = vld [vmem:[#allocation3 + $0xb0] sm:$0xff]
  %v3677 = vld [vmem:[#allocation3 + $0xb8] sm:$0xff]
  %v3678 = vld [vmem:[#allocation3 + $0xc0] sm:$0xff]
  %v3679 = vld [vmem:[#allocation3 + $0xc8] sm:$0xff]
  %v3680 = vld [vmem:[#allocation3 + $0xd0] sm:$0xff]
  %v3681 = vld [vmem:[#allocation3 + $0xd8] sm:$0xff]
  %v3682 = vld [vmem:[#allocation3 + $0xe0] sm:$0xff]
  %v3683 = vld [vmem:[#allocation3 + $0xe8] sm:$0xff]
  %v3684 = vld [vmem:[#allocation3 + $0xf0] sm:$0xff]
  %v3685 = vld [vmem:[#allocation3 + $0xf8] sm:$0xff]
  %v3686 = vld [vmem:[#allocation3 + $0x100] sm:$0xff]
  %v3687 = vld [vmem:[#allocation3 + $0x108] sm:$0xff]
  %v3688 = vld [vmem:[%s12] sm:$0xff]
  %v3689 = vld [vmem:[%s12 + $0x8] sm:$0xff]
  %v3690 = vld [vmem:[%s12 + $0x10] sm:$0xff]
  %v3691 = vld [vmem:[%s13] sm:$0x1]
  %v3693 = vlaneseq
  %v3694 = vshrl.u32 %v3693, 7
  %v3695 = vsub.s32 0, %v3694
  %v3696 = vrot.slane %v3691, %v3695
  %v3699 = vsel %vm412, %v3654, 0
  %v3702 = vsel %vm412, %v3655, 0
  %v3705 = vsel %vm412, %v3656, 0
  %v3708 = vsel %vm412, %v3657, 0
  %v3711 = vsel %vm412, %v3658, 0
  %v3714 = vsel %vm412, %v3659, 0
  %v3717 = vsel %vm412, %v3660, 0
  %v3720 = vsel %vm412, %v3661, 0
  %v3723 = vsel %vm412, %v3662, 0
  %v3726 = vsel %vm412, %v3663, 0
  %v3729 = vsel %vm412, %v3664, 0
  %v3732 = vsel %vm412, %v3665, 0
  %v3735 = vsel %vm412, %v3666, 0
  %v3738 = vsel %vm412, %v3667, 0
  %v3741 = vsel %vm412, %v3668, 0
  %v3744 = vsel %vm412, %v3669, 0
  %v3747 = vsel %vm412, %v3670, 0
  %v3750 = vsel %vm412, %v3671, 0
  %v3753 = vsel %vm412, %v3672, 0
  %v3756 = vsel %vm412, %v3673, 0
  %v3759 = vsel %vm412, %v3674, 0
  %v3762 = vsel %vm412, %v3675, 0
  %v3765 = vsel %vm412, %v3676, 0
  %v3768 = vsel %vm412, %v3677, 0
  %v3771 = vsel %vm412, %v3678, 0
  %v3774 = vsel %vm412, %v3679, 0
  %v3777 = vsel %vm412, %v3680, 0
  %v3780 = vsel %vm412, %v3681, 0
  %v3783 = vsel %vm412, %v3682, 0
  %v3786 = vsel %vm412, %v3683, 0
  %v3789 = vsel %vm412, %v3684, 0
  %v3792 = vsel %vm412, %v3685, 0
  %v3795 = vsel %vm412, %v3686, 0
  %v3798 = vsel %vm412, %v3687, 0
  %3800 = vmatprep.subr.mxu0 0.0
  %3801 = vmatpush1.msra.mxu0 %v3688
  %3802 = vmatprep.subr.mxu0 0.0
  %3803 = vmatpush1.msra.mxu0 %v3689
  %3804 = vmatprep.subr.mxu0 0.0
  %3805 = vmatpush1.msra.mxu0 %v3690
  %3806 = vmatprep.subr.mxu0 0.0
  %3807 = vmatpush1.msra.mxu0 0.0
  %3808 = vmatprep.subr.mxu0 0.0
  %3809 = vmatpush1.msra.mxu0 0.0
  %3810 = vmatprep.subr.mxu0 0.0
  %3811 = vmatpush1.msra.mxu0 0.0
  %3812 = vmatprep.subr.mxu0 0.0
  %3813 = vmatpush1.msra.mxu0 0.0
  %3814 = vmatprep.subr.mxu0 0.0
  %3815 = vmatpush1.msra.mxu0 0.0
  %3816 = vmatprep.subr.mxu0 0.0
  %3817 = vmatpush1.msra.mxu0 0.0
  %3818 = vmatprep.subr.mxu0 0.0
  %3819 = vmatpush1.msra.mxu0 0.0
  %3820 = vmatprep.subr.mxu0 0.0
  %3821 = vmatpush1.msra.mxu0 0.0
  %3822 = vmatprep.subr.mxu0 0.0
  %3823 = vmatpush1.msra.mxu0 0.0
  %3824 = vmatprep.subr.mxu0 0.0
  %3825 = vmatpush1.msra.mxu0 0.0
  %3826 = vmatprep.subr.mxu0 0.0
  %3827 = vmatpush1.msra.mxu0 0.0
  %3828 = vmatprep.subr.mxu0 0.0
  %3829 = vmatpush1.msra.mxu0 0.0
  %3830 = vmatprep.subr.mxu0 0.0
  %3831 = vmatpush1.msra.mxu0 0.0
  %3832 = vmatprep.subr.mxu0 0.0
  %3833 = vmatpush1.msra.mxu0 0.0
  %3834 = vmatprep.subr.mxu0 0.0
  %3835 = vmatpush1.msra.mxu0 0.0
  %3836 = vmatprep.subr.mxu0 0.0
  %3837 = vmatpush1.msra.mxu0 0.0
  %3838 = vmatprep.subr.mxu0 0.0
  %3839 = vmatpush1.msra.mxu0 0.0
  %3840 = vmatprep.subr.mxu0 0.0
  %3841 = vmatpush1.msra.mxu0 0.0
  %3842 = vmatprep.subr.mxu0 0.0
  %3843 = vmatpush1.msra.mxu0 0.0
  %3844 = vmatprep.subr.mxu0 0.0
  %3845 = vmatpush1.msra.mxu0 0.0
  %3846 = vmatprep.subr.mxu0 0.0
  %3847 = vmatpush1.msra.mxu0 0.0
  %3848 = vmatprep.subr.mxu0 0.0
  %3849 = vmatpush1.msra.mxu0 0.0
  %3850 = vmatprep.subr.mxu0 0.0
  %3851 = vmatpush1.msra.mxu0 0.0
  %3852 = vmatprep.subr.mxu0 0.0
  %3853 = vmatpush1.msra.mxu0 0.0
  %3854 = vmatprep.subr.mxu0 0.0
  %3855 = vmatpush1.msra.mxu0 0.0
  %3856 = vmatprep.subr.mxu0 0.0
  %3857 = vmatpush1.msra.mxu0 0.0
  %3858 = vmatprep.subr.mxu0 0.0
  %3859 = vmatpush1.msra.mxu0 0.0
  %3860 = vmatprep.subr.mxu0 0.0
  %3861 = vmatpush1.msra.mxu0 0.0
  %3862 = vmatprep.subr.mxu0 0.0
  %3863 = vmatpush1.msra.mxu0 0.0
  %3864 = vmatprep.mubr.f32.mxu0 0.0
  %3865 = vmatmul.mubr.f32.gmra.mrb[0].mxu0 %v3699
  %v3866 = vpop.f32.mrb[0].mxu0
  %v3867 = vadd.f32 %v3696, %v3866
  %v3868 = vpop.f32.mrb[0].mxu0
  %3869 = vmatprep.mubr.f32.mxu0 0.0
  %3870 = vmatmul.mubr.f32.gmra.mrb[0].mxu0 %v3702
  %v3871 = vpop.f32.mrb[0].mxu0
  %v3872 = vadd.f32 %v3696, %v3871
  %v3873 = vpop.f32.mrb[0].mxu0
  %3874 = vmatprep.mubr.f32.mxu0 0.0
  %3875 = vmatmul.mubr.f32.gmra.mrb[0].mxu0 %v3705
  %v3876 = vpop.f32.mrb[0].mxu0
  %v3877 = vadd.f32 %v3696, %v3876
  %v3878 = vpop.f32.mrb[0].mxu0
  %3879 = vmatprep.mubr.f32.mxu0 0.0
  %3880 = vmatmul.mubr.f32.gmra.mrb[0].mxu0 %v3708
  %v3881 = vpop.f32.mrb[0].mxu0
  %v3882 = vadd.f32 %v3696, %v3881
  %v3883 = vpop.f32.mrb[0].mxu0
  %3884 = vmatprep.mubr.f32.mxu0 0.0
  %3885 = vmatmul.mubr.f32.gmra.mrb[0].mxu0 %v3711
  %v3886 = vpop.f32.mrb[0].mxu0
  %v3887 = vadd.f32 %v3696, %v3886
  %v3888 = vpop.f32.mrb[0].mxu0
  %3889 = vmatprep.mubr.f32.mxu0 0.0
  %3890 = vmatmul.mubr.f32.gmra.mrb[0].mxu0 %v3714
  %v3891 = vpop.f32.mrb[0].mxu0
  %v3892 = vadd.f32 %v3696, %v3891
  %v3893 = vpop.f32.mrb[0].mxu0
  %3894 = vmatprep.mubr.f32.mxu0 0.0
  %3895 = vmatmul.mubr.f32.gmra.mrb[0].mxu0 %v3717
  %v3896 = vpop.f32.mrb[0].mxu0
  %v3897 = vadd.f32 %v3696, %v3896
  %v3898 = vpop.f32.mrb[0].mxu0
  %3899 = vmatprep.mubr.f32.mxu0 0.0
  %3900 = vmatmul.mubr.f32.gmra.mrb[0].mxu0 %v3720
  %v3901 = vpop.f32.mrb[0].mxu0
  %v3902 = vadd.f32 %v3696, %v3901
  %v3903 = vpop.f32.mrb[0].mxu0
  %3904 = vmatprep.mubr.f32.mxu0 0.0
  %3905 = vmatmul.mubr.f32.gmra.mrb[0].mxu0 %v3723
  %v3906 = vpop.f32.mrb[0].mxu0
  %v3907 = vadd.f32 %v3696, %v3906
  %v3908 = vpop.f32.mrb[0].mxu0
  %3909 = vmatprep.mubr.f32.mxu0 0.0
  %3910 = vmatmul.mubr.f32.gmra.mrb[0].mxu0 %v3726
  %v3911 = vpop.f32.mrb[0].mxu0
  %v3912 = vadd.f32 %v3696, %v3911
  %v3913 = vpop.f32.mrb[0].mxu0
  %3914 = vmatprep.mubr.f32.mxu0 0.0
  %3915 = vmatmul.mubr.f32.gmra.mrb[0].mxu0 %v3729
  %v3916 = vpop.f32.mrb[0].mxu0
  %v3917 = vadd.f32 %v3696, %v3916
  %v3918 = vpop.f32.mrb[0].mxu0
  %3919 = vmatprep.mubr.f32.mxu0 0.0
  %3920 = vmatmul.mubr.f32.gmra.mrb[0].mxu0 %v3732
  %v3921 = vpop.f32.mrb[0].mxu0
  %v3922 = vadd.f32 %v3696, %v3921
  %v3923 = vpop.f32.mrb[0].mxu0
  %3924 = vmatprep.mubr.f32.mxu0 0.0
  %3925 = vmatmul.mubr.f32.gmra.mrb[0].mxu0 %v3735
  %v3926 = vpop.f32.mrb[0].mxu0
  %v3927 = vadd.f32 %v3696, %v3926
  %v3928 = vpop.f32.mrb[0].mxu0
  %3929 = vmatprep.mubr.f32.mxu0 0.0
  %3930 = vmatmul.mubr.f32.gmra.mrb[0].mxu0 %v3738
  %v3931 = vpop.f32.mrb[0].mxu0
  %v3932 = vadd.f32 %v3696, %v3931
  %v3933 = vpop.f32.mrb[0].mxu0
  %3934 = vmatprep.mubr.f32.mxu0 0.0
  %3935 = vmatmul.mubr.f32.gmra.mrb[0].mxu0 %v3741
  %v3936 = vpop.f32.mrb[0].mxu0
  %v3937 = vadd.f32 %v3696, %v3936
  %v3938 = vpop.f32.mrb[0].mxu0
  %3939 = vmatprep.mubr.f32.mxu0 0.0
  %3940 = vmatmul.mubr.f32.gmra.mrb[0].mxu0 %v3744
  %v3941 = vpop.f32.mrb[0].mxu0
  %v3942 = vadd.f32 %v3696, %v3941
  %v3943 = vpop.f32.mrb[0].mxu0
  %3944 = vmatprep.mubr.f32.mxu0 0.0
  %3945 = vmatmul.mubr.f32.gmra.mrb[0].mxu0 %v3747
  %v3946 = vpop.f32.mrb[0].mxu0
  %v3947 = vadd.f32 %v3696, %v3946
  %v3948 = vpop.f32.mrb[0].mxu0
  %3949 = vmatprep.mubr.f32.mxu0 0.0
  %3950 = vmatmul.mubr.f32.gmra.mrb[0].mxu0 %v3750
  %v3951 = vpop.f32.mrb[0].mxu0
  %v3952 = vadd.f32 %v3696, %v3951
  %v3953 = vpop.f32.mrb[0].mxu0
  %3954 = vmatprep.mubr.f32.mxu0 0.0
  %3955 = vmatmul.mubr.f32.gmra.mrb[0].mxu0 %v3753
  %v3956 = vpop.f32.mrb[0].mxu0
  %v3957 = vadd.f32 %v3696, %v3956
  %v3958 = vpop.f32.mrb[0].mxu0
  %3959 = vmatprep.mubr.f32.mxu0 0.0
  %3960 = vmatmul.mubr.f32.gmra.mrb[0].mxu0 %v3756
  %v3961 = vpop.f32.mrb[0].mxu0
  %v3962 = vadd.f32 %v3696, %v3961
  %v3963 = vpop.f32.mrb[0].mxu0
  %3964 = vmatprep.mubr.f32.mxu0 0.0
  %3965 = vmatmul.mubr.f32.gmra.mrb[0].mxu0 %v3759
  %v3966 = vpop.f32.mrb[0].mxu0
  %v3967 = vadd.f32 %v3696, %v3966
  %v3968 = vpop.f32.mrb[0].mxu0
  %3969 = vmatprep.mubr.f32.mxu0 0.0
  %3970 = vmatmul.mubr.f32.gmra.mrb[0].mxu0 %v3762
  %v3971 = vpop.f32.mrb[0].mxu0
  %v3972 = vadd.f32 %v3696, %v3971
  %v3973 = vpop.f32.mrb[0].mxu0
  %3974 = vmatprep.mubr.f32.mxu0 0.0
  %3975 = vmatmul.mubr.f32.gmra.mrb[0].mxu0 %v3765
  %v3976 = vpop.f32.mrb[0].mxu0
  %v3977 = vadd.f32 %v3696, %v3976
  %v3978 = vpop.f32.mrb[0].mxu0
  %3979 = vmatprep.mubr.f32.mxu0 0.0
  %3980 = vmatmul.mubr.f32.gmra.mrb[0].mxu0 %v3768
  %v3981 = vpop.f32.mrb[0].mxu0
  %v3982 = vadd.f32 %v3696, %v3981
  %v3983 = vpop.f32.mrb[0].mxu0
  %3984 = vmatprep.mubr.f32.mxu0 0.0
  %3985 = vmatmul.mubr.f32.gmra.mrb[0].mxu0 %v3771
  %v3986 = vpop.f32.mrb[0].mxu0
  %v3987 = vadd.f32 %v3696, %v3986
  %v3988 = vpop.f32.mrb[0].mxu0
  %3989 = vmatprep.mubr.f32.mxu0 0.0
  %3990 = vmatmul.mubr.f32.gmra.mrb[0].mxu0 %v3774
  %v3991 = vpop.f32.mrb[0].mxu0
  %v3992 = vadd.f32 %v3696, %v3991
  %v3993 = vpop.f32.mrb[0].mxu0
  %3994 = vmatprep.mubr.f32.mxu0 0.0
  %3995 = vmatmul.mubr.f32.gmra.mrb[0].mxu0 %v3777
  %v3996 = vpop.f32.mrb[0].mxu0
  %v3997 = vadd.f32 %v3696, %v3996
  %v3998 = vpop.f32.mrb[0].mxu0
  %3999 = vmatprep.mubr.f32.mxu0 0.0
  %4000 = vmatmul.mubr.f32.gmra.mrb[0].mxu0 %v3780
  %v4001 = vpop.f32.mrb[0].mxu0
  %v4002 = vadd.f32 %v3696, %v4001
  %v4003 = vpop.f32.mrb[0].mxu0
  %4004 = vmatprep.mubr.f32.mxu0 0.0
  %4005 = vmatmul.mubr.f32.gmra.mrb[0].mxu0 %v3783
  %v4006 = vpop.f32.mrb[0].mxu0
  %v4007 = vadd.f32 %v3696, %v4006
  %v4008 = vpop.f32.mrb[0].mxu0
  %4009 = vmatprep.mubr.f32.mxu0 0.0
  %4010 = vmatmul.mubr.f32.gmra.mrb[0].mxu0 %v3786
  %v4011 = vpop.f32.mrb[0].mxu0
  %v4012 = vadd.f32 %v3696, %v4011
  %v4013 = vpop.f32.mrb[0].mxu0
  %4014 = vmatprep.mubr.f32.mxu0 0.0
  %4015 = vmatmul.mubr.f32.gmra.mrb[0].mxu0 %v3789
  %v4016 = vpop.f32.mrb[0].mxu0
  %v4017 = vadd.f32 %v3696, %v4016
  %v4018 = vpop.f32.mrb[0].mxu0
  %4019 = vmatprep.mubr.f32.mxu0 0.0
  %4020 = vmatmul.mubr.f32.gmra.mrb[0].mxu0 %v3792
  %v4021 = vpop.f32.mrb[0].mxu0
  %v4022 = vadd.f32 %v3696, %v4021
  %v4023 = vpop.f32.mrb[0].mxu0
  %4024 = vmatprep.mubr.f32.mxu0 0.0
  %4025 = vmatmul.mubr.f32.gmra.mrb[0].mxu0 %v3795
  %v4026 = vpop.f32.mrb[0].mxu0
  %v4027 = vadd.f32 %v3696, %v4026
  %v4028 = vpop.f32.mrb[0].mxu0
  %4029 = vmatprep.mubr.f32.mxu0 0.0
  %4030 = vmatmul.mubr.f32.gmra.mrb[0].mxu0 %v3798
  %v4031 = vpop.f32.mrb[0].mxu0
  %v4032 = vadd.f32 %v3696, %v4031
  %v4033 = vpop.f32.mrb[0].mxu0
  %4034 = vdwg.mxu0
  %4035 = vst.msk [vmem:[%s14] sm:$0xff] %vm90, %v3867
  %4036 = vst.msk [vmem:[%s14 + $0x8] sm:$0xff] %vm90, %v3872
  %4037 = vst.msk [vmem:[%s14 + $0x10] sm:$0xff] %vm90, %v3877
  %4038 = vst.msk [vmem:[%s14 + $0x18] sm:$0xff] %vm90, %v3882
  %4039 = vst.msk [vmem:[%s14 + $0x20] sm:$0xff] %vm90, %v3887
  %4040 = vst.msk [vmem:[%s14 + $0x28] sm:$0xff] %vm90, %v3892
  %4041 = vst.msk [vmem:[%s14 + $0x30] sm:$0xff] %vm90, %v3897
  %4042 = vst.msk [vmem:[%s14 + $0x38] sm:$0xff] %vm90, %v3902
  %4043 = vst.msk [vmem:[%s14 + $0x40] sm:$0xff] %vm90, %v3907
  %4044 = vst.msk [vmem:[%s14 + $0x48] sm:$0xff] %vm90, %v3912
  %4045 = vst.msk [vmem:[%s14 + $0x50] sm:$0xff] %vm90, %v3917
  %4046 = vst.msk [vmem:[%s14 + $0x58] sm:$0xff] %vm90, %v3922
  %4047 = vst.msk [vmem:[%s14 + $0x60] sm:$0xff] %vm90, %v3927
  %4048 = vst.msk [vmem:[%s14 + $0x68] sm:$0xff] %vm90, %v3932
  %4049 = vst.msk [vmem:[%s14 + $0x70] sm:$0xff] %vm90, %v3937
  %4050 = vst.msk [vmem:[%s14 + $0x78] sm:$0xff] %vm90, %v3942
  %4051 = vst.msk [vmem:[%s14 + $0x80] sm:$0xff] %vm90, %v3947
  %4052 = vst.msk [vmem:[%s14 + $0x88] sm:$0xff] %vm90, %v3952
  %4053 = vst.msk [vmem:[%s14 + $0x90] sm:$0xff] %vm90, %v3957
  %4054 = vst.msk [vmem:[%s14 + $0x98] sm:$0xff] %vm90, %v3962
  %4055 = vst.msk [vmem:[%s14 + $0xa0] sm:$0xff] %vm90, %v3967
  %4056 = vst.msk [vmem:[%s14 + $0xa8] sm:$0xff] %vm90, %v3972
  %4057 = vst.msk [vmem:[%s14 + $0xb0] sm:$0xff] %vm90, %v3977
  %4058 = vst.msk [vmem:[%s14 + $0xb8] sm:$0xff] %vm90, %v3982
  %4059 = vst.msk [vmem:[%s14 + $0xc0] sm:$0xff] %vm90, %v3987
  %4060 = vst.msk [vmem:[%s14 + $0xc8] sm:$0xff] %vm90, %v3992
  %4061 = vst.msk [vmem:[%s14 + $0xd0] sm:$0xff] %vm90, %v3997
  %4062 = vst.msk [vmem:[%s14 + $0xd8] sm:$0xff] %vm90, %v4002
  %4063 = vst.msk [vmem:[%s14 + $0xe0] sm:$0xff] %vm90, %v4007
  %4064 = vst.msk [vmem:[%s14 + $0xe8] sm:$0xff] %vm90, %v4012
  %4065 = vst.msk [vmem:[%s14 + $0xf0] sm:$0xff] %vm90, %v4017
  %4066 = vst.msk [vmem:[%s14 + $0xf8] sm:$0xff] %vm90, %v4022
  %4067 = vst.msk [vmem:[%s14 + $0x100] sm:$0xff] %vm90, %v4027
  %4068 = vst.msk [vmem:[%s14 + $0x108] sm:$0xff] %vm90, %v4032
  // Predicated region
  $region58: #{tpu_custom_call.1} parent=0 // pred_check
    _
  $region59: #{tpu_custom_call.1} parent=0 // pred_check_branch
    %4070 = sbr.rel (0) target = $region61
  $region60: #{tpu_custom_call.1} parent=0 // pred_region
    _
  $region61: #{tpu_custom_call.1} parent=0 // pred_fallthru
    _
  // Predicated region
  $region62: #{tpu_custom_call.1} parent=0 // pred_check
    _
  $region63: #{tpu_custom_call.1} parent=0 // pred_check_branch
    %4072 = sbr.rel (0) target = $region65
  $region64: #{tpu_custom_call.1} parent=0 // pred_region
    _
  $region65: #{tpu_custom_call.1} parent=0 // pred_fallthru
    _

</llo_original>
